<compile_context>
chip_gen: v7x
topology: tpu7x:2x2x1
jax: 0.10.0
libtpu: 0.0.40
codegen_flags: <defaults>
</compile_context>

<pallas_src>
import jax
import jax.numpy as jnp
from jax import lax
from jax.experimental import pallas as pl
from jax.experimental.pallas import tpu as pltpu

_LANE = 128
_SUB = 8


def _round_up(x, m):
    return (x + m - 1) // m * m


def _cdiv(a, b):
    return -(-a // b)


# ----------------------------------------------------------------------------
# Pallas kernel: one (TH, W2, TC2) output tile per grid step.
# ----------------------------------------------------------------------------
def _repconv_kernel(xb_ref, xh_ref, w_ref, b_ref, o_ref):
    # xb_ref: (1, TH, W2, C1p)  padded-image rows [h*TH, h*TH+TH)
    # xh_ref: (1, 2,  W2, C1p)  padded-image rows [h*TH+TH, h*TH+TH+2)  (halo)
    # w_ref : (3, 3*C1p, TC2)   folded 3x3 weights, [kh, kw*C1p + cin, cout]
    # b_ref : (1, TC2)          folded bias (f32)
    # o_ref : (1, TH, W2, TC2)
    TH = xb_ref.shape[1]
    W2 = xb_ref.shape[2]
    C1 = xb_ref.shape[3]
    C2 = o_ref.shape[3]
    M = TH * W2               # output rows of this tile (incl. cropped columns)
    L = M + 2 * W2            # slab rows needed to cover the 3 kh shifts

    # Flatten the halo'd window row-major over (H, W2).  W2 % 8 == 0, so the
    # reshapes are layout-preserving and every concat piece is sublane aligned.
    xbf = xb_ref[0].reshape(M, C1)
    xhf = xh_ref[0].reshape(2 * W2, C1)
    tail = jnp.zeros((_SUB, C1), xbf.dtype)      # lets kw-shifted views read past the window
    xf = jnp.concatenate([xbf, xhf, tail], axis=0)            # (M + 2*W2 + 8, C1)

    # im2col along kw only, built ONCE per step: lane-concat of the 3 kw-shifted
    # views.  The 3 kh taps are then 3 sublane-ALIGNED (offsets kh*W2) slices of
    # the same slab -> 3 accumulating K = 3*C1p matmuls on the MXU.
    slab = jnp.concatenate([xf[kw:kw + L, :] for kw in range(3)], axis=-1)  # (L, 3*C1)

    acc = jnp.dot(slab[0:M, :], w_ref[0],
                  preferred_element_type=jnp.float32) + b_ref[...]
    acc = acc + jnp.dot(slab[W2:W2 + M, :], w_ref[1],
                        preferred_element_type=jnp.float32)
    acc = acc + jnp.dot(slab[2 * W2:2 * W2 + M, :], w_ref[2],
                        preferred_element_type=jnp.float32)

    # SiLU with a tanh-based exact sigmoid: runs on the EUP, no exp overflow and
    # no approximate-reciprocal error.
    y = acc * (0.5 * jnp.tanh(0.5 * acc) + 0.5)
    o_ref[...] = y.reshape(1, TH, W2, C2).astype(o_ref.dtype)


# ----------------------------------------------------------------------------
# Parameter construction / exact RepVGG re-parameterization (plain-JAX glue)
# ----------------------------------------------------------------------------
def init_repconv_params(key, c1, c2, eps=1e-5):
    ks = jax.random.split(key, 5)
    w3 = 0.1 * jax.random.normal(ks[0], (c2, c1, 3, 3), jnp.float32)   # OIHW
    w1 = 0.1 * jax.random.normal(ks[1], (c2, c1, 1, 1), jnp.float32)   # OIHW

    def make_bn(k, c):
        k1, k2, k3, k4 = jax.random.split(k, 4)
        gamma = 1.0 + 0.1 * jax.random.normal(k1, (c,), jnp.float32)
        beta = 0.1 * jax.random.normal(k2, (c,), jnp.float32)
        mean = 0.1 * jax.random.normal(k3, (c,), jnp.float32)
        var = 0.5 + jnp.abs(jax.random.normal(k4, (c,), jnp.float32))
        return gamma, beta, mean, var

    return {
        "w3": w3, "w1": w1,
        "bn3": make_bn(ks[2], c2),
        "bn1": make_bn(ks[3], c2),
        "bnid": make_bn(ks[4], c1) if c1 == c2 else None,   # rbr_identity (c1==c2, s==1)
        "eps": eps,
    }


def _bn_affine(bn, eps):
    gamma, beta, mean, var = bn
    scale = gamma / jnp.sqrt(var + eps)
    shift = beta - mean * scale
    return scale, shift


def fold_params(p, c1p, c2p, compute_dtype):
    """Exact fold of the branches into one 3x3 conv (== get_equivalent_kernel_bias)."""
    eps = p["eps"]
    c2, c1 = p["w3"].shape[0], p["w3"].shape[1]
    s3, b3 = _bn_affine(p["bn3"], eps)
    s1, b1 = _bn_affine(p["bn1"], eps)

    w3 = p["w3"] * s3[:, None, None, None]                    # (C2, C1, 3, 3)
    w1 = (p["w1"] * s1[:, None, None, None])[:, :, 0, 0]      # (C2, C1)
    w_eq = w3.at[:, :, 1, 1].add(w1)                          # fold 1x1 into center
    b_eq = b3 + b1
    if p["bnid"] is not None:                                 # identity branch
        sid, bid = _bn_affine(p["bnid"], eps)
        wid = jnp.eye(c2, c1, dtype=jnp.float32) * sid[:, None]
        w_eq = w_eq.at[:, :, 1, 1].add(wid)
        b_eq = b_eq + bid

    # OIHW -> (kh, kw, cin, cout), zero-pad channels to lane multiples, then
    # stack kw along the contraction axis: (3, 3*C1p, C2p).
    w_k = jnp.transpose(w_eq, (2, 3, 1, 0))
    w_k = jnp.pad(w_k, ((0, 0), (0, 0), (0, c1p - c1), (0, c2p - c2)))
    w_k = w_k.reshape(3, 3 * c1p, c2p).astype(compute_dtype)

    b_k = jnp.pad(b_eq, (0, c2p - c2)).reshape(1, c2p).astype(jnp.float32)
    return w_k, b_k


# ----------------------------------------------------------------------------
# Tiling heuristics
# ----------------------------------------------------------------------------
def _vmem_budget_bytes():
    try:
        cap = int(pltpu.get_tpu_info().vmem_capacity_bytes)
    except Exception:
        cap = 64 * 1024 * 1024          # conservative (v7x-sized) fallback
    return (cap * 3) // 4               # ~96 MiB on v5e/v6e, ~48 MiB on v7x


def _pick_tc2(c2p, c1p, itm, budget):
    """Largest C2 tile (multiple of 128, divides c2p) with a small resident weight block."""
    wbudget = min(8 * 1024 * 1024, budget // 4)
    tc2 = _LANE
    for k in range(1, c2p // _LANE + 1):
        cand = _LANE * k
        if c2p % cand == 0 and 2 * 9 * c1p * cand * itm <= wbudget:
            tc2 = cand
    return tc2


def _vmem_need_bytes(th, w2, c1p, tc2, itm, out_itm):
    m = th * w2
    l = m + 2 * w2 + _SUB
    need = 0
    need += 2 * m * c1p * itm                         # body block (double buffered)
    need += 2 * 2 * w2 * c1p * itm                    # halo block
    need += 2 * (9 * c1p * tc2 * itm + tc2 * 4)       # weights + bias
    need += 2 * m * tc2 * out_itm                     # output block
    need += l * c1p * itm                             # flattened window
    need += l * 3 * c1p * itm                         # im2col slab
    need += m * tc2 * 4                               # f32 accumulator
    return need


# ----------------------------------------------------------------------------
# Wrapper around pallas_call
# ----------------------------------------------------------------------------
def repconv_forward(x_nchw, params, *, compute_dtype=jnp.bfloat16):
    N, C1, H, W = x_nchw.shape
    C2 = params["w3"].shape[0]
    assert params["w3"].shape[1] == C1, "groups != 1 not supported"  # TODO(synk): grouped conv

    c1p = _round_up(C1, _LANE)
    c2p = _round_up(C2, _LANE)
    W2 = _round_up(W + 2, _SUB)       # padded width (halo cols + sublane alignment)

    itm = jnp.dtype(compute_dtype).itemsize
    out_dtype = x_nchw.dtype
    out_itm = jnp.dtype(out_dtype).itemsize

    budget = _vmem_budget_bytes()
    tc2 = _pick_tc2(c2p, c1p, itm, budget)
    n_c2 = c2p // tc2

    # H tile: ~1024 output rows (and >= 16 rows) per step, capped by the image
    # height and shrunk (in steps of 8) until the footprint fits the VMEM budget.
    TH = max(16, _round_up(_cdiv(1024, W2), _SUB))
    TH = min(TH, _round_up(H, _SUB))
    TH = max(TH, _SUB)
    while TH > _SUB and _vmem_need_bytes(TH, W2, c1p, tc2, itm, out_itm) > (budget * 9) // 10:
        TH -= _SUB

    n_ht = _cdiv(H, TH)
    # Megacore (v7x): keep at least 2 parallel grid steps when the shape allows.
    if N * n_ht * n_c2 < 2 and H > _SUB:
        TH = max(_SUB, _round_up(_cdiv(H, 2), _SUB))
        n_ht = _cdiv(H, TH)
    Hp = n_ht * TH
    th_half = TH // 2                  # TH is a multiple of 8 -> exact

    w_k, b_k = fold_params(params, c1p, c2p, compute_dtype)

    # NCHW -> NHWC, cast to the MXU dtype, add halo rows/cols + lane padding in
    # one fused pad.  x: (N, Hp+2, W2, C1p).
    x = jnp.transpose(x_nchw, (0, 2, 3, 1)).astype(compute_dtype)
    x = jnp.pad(x, ((0, 0), (1, Hp - H + 1), (1, W2 - W - 1), (0, c1p - C1)))

    cost = pl.CostEstimate(
        flops=2 * N * Hp * W2 * (9 * c1p) * c2p,
        transcendentals=N * Hp * W2 * c2p,
        bytes_accessed=(x.size * itm + w_k.size * itm + b_k.size * 4
                        + N * Hp * W2 * c2p * out_itm),
    )

    out = pl.pallas_call(
        _repconv_kernel,
        out_shape=jax.ShapeDtypeStruct((N, Hp, W2, c2p), out_dtype),
        grid_spec=pltpu.PrefetchScalarGridSpec(
            num_scalar_prefetch=0,
            grid=(N, n_ht, n_c2),
            in_specs=[
                # TH "body" rows of the padded image for this tile.
                pl.BlockSpec((1, TH, W2, c1p), lambda n, h, c: (n, h, 0, 0)),
                # Single 2-row halo block directly below the body rows.
                pl.BlockSpec((1, 2, W2, c1p),
                             lambda n, h, c: (n, (h + 1) * th_half, 0, 0)),
                # Folded weights / bias: constant over (n, h), revisited per C2 tile
                # (only re-DMA'd when the block index changes).
                pl.BlockSpec((3, 3 * c1p, tc2), lambda n, h, c: (0, 0, c)),
                pl.BlockSpec((1, tc2), lambda n, h, c: (0, c)),
            ],
            out_specs=pl.BlockSpec((1, TH, W2, tc2),
                                   lambda n, h, c: (n, h, 0, c)),
        ),
        compiler_params=pltpu.CompilerParams(
            dimension_semantics=("parallel", "parallel", "parallel"),
            vmem_limit_bytes=int(budget)),
        cost_estimate=cost,
    )(x, x, w_k, b_k)

    out = out[:, :H, :W, :C2]
    return jnp.transpose(out, (0, 3, 1, 2))                  # back to NCHW


# ----------------------------------------------------------------------------
# Pure-JAX reference (eval-mode BN, branch-separate), for a correctness check.
# ----------------------------------------------------------------------------
def repconv_reference(x, p):
    eps = p["eps"]

    def bn_apply(y, bn):
        scale, shift = _bn_affine(bn, eps)
        return y * scale.reshape(1, -1, 1, 1) + shift.reshape(1, -1, 1, 1)

    y3 = lax.conv_general_dilated(
        x, p["w3"], (1, 1), ((1, 1), (1, 1)),
        dimension_numbers=("NCHW", "OIHW", "NCHW"),
        precision=lax.Precision.HIGHEST)
    y3 = bn_apply(y3, p["bn3"])

    y1 = lax.conv_general_dilated(
        x, p["w1"], (1, 1), ((0, 0), (0, 0)),
        dimension_numbers=("NCHW", "OIHW", "NCHW"),
        precision=lax.Precision.HIGHEST)
    y1 = bn_apply(y1, p["bn1"])

    yid = bn_apply(x, p["bnid"]) if p["bnid"] is not None else 0.0

    s = y3 + y1 + yid
    return s * jax.nn.sigmoid(s)


if __name__ == "__main__":
    key = jax.random.PRNGKey(0)
    kx, kp = jax.random.split(key)

    N, C1, C2, H, W = 2, 4, 4, 16, 16          # c1 == c2, s == 1 -> identity branch
    x = jax.random.normal(kx, (N, C1, H, W), jnp.float32)
    # Keep inputs bf16-representable so the check isolates kernel error (bf16 MXU
    # operands / folded-weight rounding) from input quantization.
    x = x.astype(jnp.bfloat16).astype(jnp.float32)
    params = init_repconv_params(kp, C1, C2)

    out = jax.block_until_ready(repconv_forward(x, params))
    ref = repconv_reference(x, params)

    assert out.shape == ref.shape == (N, C2, H, W)
    assert not bool(jnp.any(jnp.isnan(out)))
    # bf16 MXU operands + bf16 folded weights with f32 accumulation.
    assert jnp.allclose(out, ref, atol=2e-2, rtol=2e-2), (
        float(jnp.max(jnp.abs(out - ref))))

    print("KERNEL_OK")
</pallas_src>

<mosaic_0001>
module attributes {stable_mosaic.version = 11 : i64} {
  func.func @_repconv_kernel(%arg0: i32, %arg1: i32, %arg2: i32, %arg3: memref<1x16x24x128xbf16, #tpu.memory_space<vmem>>, %arg4: memref<1x2x24x128xbf16, #tpu.memory_space<vmem>>, %arg5: memref<3x384x128xbf16, #tpu.memory_space<vmem>>, %arg6: memref<1x128xf32, #tpu.memory_space<vmem>>, %arg7: memref<1x16x24x128xf32, #tpu.memory_space<vmem>>) attributes {dimension_semantics = [#tpu.dimension_semantics<parallel>, #tpu.dimension_semantics<parallel>, #tpu.dimension_semantics<parallel>], iteration_bounds = array<i64: 2, 1, 1>, scalar_prefetch = 0 : i64, scratch_operands = 0 : i64, tpu.core_type = #tpu.core_type<tc>, window_params = [{transform_indices = @transform_0, window_bounds = array<i64: 1, 16, 24, 128>}, {transform_indices = @transform_1, window_bounds = array<i64: 1, 2, 24, 128>}, {transform_indices = @transform_2, window_bounds = array<i64: 3, 384, 128>}, {transform_indices = @transform_3, window_bounds = array<i64: 1, 128>}, {transform_indices = @transform_4, window_bounds = array<i64: 1, 16, 24, 128>}]} {
    %c0 = arith.constant 0 : index
    %c0_0 = arith.constant 0 : index
    %c0_1 = arith.constant 0 : index
    %c0_2 = arith.constant 0 : index
    %0 = vector.load %arg3[%c0, %c0_0, %c0_1, %c0_2] : memref<1x16x24x128xbf16, #tpu.memory_space<vmem>>, vector<1x16x24x128xbf16>
    %1 = vector.shape_cast %0 : vector<1x16x24x128xbf16> to vector<16x24x128xbf16>
    %2 = vector.shape_cast %1 : vector<16x24x128xbf16> to vector<384x128xbf16>
    %c0_3 = arith.constant 0 : index
    %c0_4 = arith.constant 0 : index
    %c0_5 = arith.constant 0 : index
    %c0_6 = arith.constant 0 : index
    %3 = vector.load %arg4[%c0_3, %c0_4, %c0_5, %c0_6] : memref<1x2x24x128xbf16, #tpu.memory_space<vmem>>, vector<1x2x24x128xbf16>
    %4 = vector.shape_cast %3 : vector<1x2x24x128xbf16> to vector<2x24x128xbf16>
    %5 = vector.shape_cast %4 : vector<2x24x128xbf16> to vector<48x128xbf16>
    %cst = arith.constant 0.000000e+00 : bf16
    %6 = vector.broadcast %cst : bf16 to vector<8x128xbf16>
    %7 = tpu.concatenate %2, %5, %6 in 0 : vector<384x128xbf16>, vector<48x128xbf16>, vector<8x128xbf16> -> vector<440x128xbf16>
    %8 = vector.extract_strided_slice %7 {offsets = [0, 0], sizes = [432, 128], strides = [1, 1]} : vector<440x128xbf16> to vector<432x128xbf16>
    %9 = vector.extract_strided_slice %7 {offsets = [1, 0], sizes = [432, 128], strides = [1, 1]} : vector<440x128xbf16> to vector<432x128xbf16>
    %10 = vector.extract_strided_slice %7 {offsets = [2, 0], sizes = [432, 128], strides = [1, 1]} : vector<440x128xbf16> to vector<432x128xbf16>
    %11 = tpu.concatenate %8, %9, %10 in 1 : vector<432x128xbf16>, vector<432x128xbf16>, vector<432x128xbf16> -> vector<432x384xbf16>
    %12 = vector.extract_strided_slice %11 {offsets = [0, 0], sizes = [384, 384], strides = [1, 1]} : vector<432x384xbf16> to vector<384x384xbf16>
    %c0_7 = arith.constant 0 : index
    %c0_8 = arith.constant 0 : index
    %c0_9 = arith.constant 0 : index
    %13 = vector.load %arg5[%c0_7, %c0_8, %c0_9] : memref<3x384x128xbf16, #tpu.memory_space<vmem>>, vector<1x384x128xbf16>
    %14 = vector.shape_cast %13 : vector<1x384x128xbf16> to vector<384x128xbf16>
    %cst_10 = arith.constant dense<0.000000e+00> : vector<384x128xf32>
    %15 = tpu.matmul %12, %14, %cst_10 {dimension_numbers = #tpu.dot_dimension_numbers<[1], [0], [0], [1], [0, 0, 1, 1], [], []>} : vector<384x384xbf16>, vector<384x128xbf16>, vector<384x128xf32> -> vector<384x128xf32>
    %c0_11 = arith.constant 0 : index
    %c0_12 = arith.constant 0 : index
    %16 = vector.load %arg6[%c0_11, %c0_12] : memref<1x128xf32, #tpu.memory_space<vmem>>, vector<1x128xf32>
    %17 = vector.broadcast %16 : vector<1x128xf32> to vector<384x128xf32>
    %18 = arith.addf %15, %17 : vector<384x128xf32>
    %19 = vector.extract_strided_slice %11 {offsets = [24, 0], sizes = [384, 384], strides = [1, 1]} : vector<432x384xbf16> to vector<384x384xbf16>
    %c1 = arith.constant 1 : index
    %c0_13 = arith.constant 0 : index
    %c0_14 = arith.constant 0 : index
    %20 = vector.load %arg5[%c1, %c0_13, %c0_14] : memref<3x384x128xbf16, #tpu.memory_space<vmem>>, vector<1x384x128xbf16>
    %21 = vector.shape_cast %20 : vector<1x384x128xbf16> to vector<384x128xbf16>
    %cst_15 = arith.constant dense<0.000000e+00> : vector<384x128xf32>
    %22 = tpu.matmul %19, %21, %cst_15 {dimension_numbers = #tpu.dot_dimension_numbers<[1], [0], [0], [1], [0, 0, 1, 1], [], []>} : vector<384x384xbf16>, vector<384x128xbf16>, vector<384x128xf32> -> vector<384x128xf32>
    %23 = arith.addf %18, %22 : vector<384x128xf32>
    %24 = vector.extract_strided_slice %11 {offsets = [48, 0], sizes = [384, 384], strides = [1, 1]} : vector<432x384xbf16> to vector<384x384xbf16>
    %c2 = arith.constant 2 : index
    %c0_16 = arith.constant 0 : index
    %c0_17 = arith.constant 0 : index
    %25 = vector.load %arg5[%c2, %c0_16, %c0_17] : memref<3x384x128xbf16, #tpu.memory_space<vmem>>, vector<1x384x128xbf16>
    %26 = vector.shape_cast %25 : vector<1x384x128xbf16> to vector<384x128xbf16>
    %cst_18 = arith.constant dense<0.000000e+00> : vector<384x128xf32>
    %27 = tpu.matmul %24, %26, %cst_18 {dimension_numbers = #tpu.dot_dimension_numbers<[1], [0], [0], [1], [0, 0, 1, 1], [], []>} : vector<384x384xbf16>, vector<384x128xbf16>, vector<384x128xf32> -> vector<384x128xf32>
    %28 = arith.addf %23, %27 : vector<384x128xf32>
    %cst_19 = arith.constant 5.000000e-01 : f32
    %29 = vector.broadcast %cst_19 : f32 to vector<384x128xf32>
    %30 = arith.mulf %29, %28 : vector<384x128xf32>
    %31 = math.tanh %30 : vector<384x128xf32>
    %cst_20 = arith.constant 5.000000e-01 : f32
    %32 = vector.broadcast %cst_20 : f32 to vector<384x128xf32>
    %33 = arith.mulf %32, %31 : vector<384x128xf32>
    %cst_21 = arith.constant 5.000000e-01 : f32
    %34 = vector.broadcast %cst_21 : f32 to vector<384x128xf32>
    %35 = arith.addf %33, %34 : vector<384x128xf32>
    %36 = arith.mulf %28, %35 : vector<384x128xf32>
    %37 = vector.shape_cast %36 : vector<384x128xf32> to vector<1x16x24x128xf32>
    %c0_22 = arith.constant 0 : index
    %c0_23 = arith.constant 0 : index
    %c0_24 = arith.constant 0 : index
    %c0_25 = arith.constant 0 : index
    %38 = vector.load %arg7[%c0_22, %c0_23, %c0_24, %c0_25] : memref<1x16x24x128xf32, #tpu.memory_space<vmem>>, vector<1x16x24x128xf32>
    tpu.vector_store %arg7[%c0_22, %c0_23, %c0_24, %c0_25], %37 {strides = array<i32>} : memref<1x16x24x128xf32, #tpu.memory_space<vmem>>, vector<1x16x24x128xf32>,
    return
  }
  func.func @transform_0(%arg0: i32, %arg1: i32, %arg2: i32) -> (i32, i32, i32, i32) {
    %c0_i32 = arith.constant 0 : i32
    %c0_i32_0 = arith.constant 0 : i32
    %c0_i32_1 = arith.constant 0 : i32
    return %arg0, %arg1, %c0_i32, %c0_i32_0 : i32, i32, i32, i32
  }
  func.func @transform_1(%arg0: i32, %arg1: i32, %arg2: i32) -> (i32, i32, i32, i32) {
    %c1_i32 = arith.constant 1 : i32
    %0 = arith.addi %arg1, %c1_i32 : i32
    %c8_i32 = arith.constant 8 : i32
    %1 = arith.muli %0, %c8_i32 : i32
    %c0_i32 = arith.constant 0 : i32
    %c0_i32_0 = arith.constant 0 : i32
    %c0_i32_1 = arith.constant 0 : i32
    return %arg0, %1, %c0_i32, %c0_i32_0 : i32, i32, i32, i32
  }
  func.func @transform_2(%arg0: i32, %arg1: i32, %arg2: i32) -> (i32, i32, i32) {
    %c0_i32 = arith.constant 0 : i32
    %c0_i32_0 = arith.constant 0 : i32
    %c0_i32_1 = arith.constant 0 : i32
    return %c0_i32, %c0_i32_0, %arg2 : i32, i32, i32
  }
  func.func @transform_3(%arg0: i32, %arg1: i32, %arg2: i32) -> (i32, i32) {
    %c0_i32 = arith.constant 0 : i32
    %c0_i32_0 = arith.constant 0 : i32
    return %c0_i32, %arg2 : i32, i32
  }
  func.func @transform_4(%arg0: i32, %arg1: i32, %arg2: i32) -> (i32, i32, i32, i32) {
    %c0_i32 = arith.constant 0 : i32
    %c0_i32_0 = arith.constant 0 : i32
    return %arg0, %arg1, %c0_i32, %arg2 : i32, i32, i32, i32
  }
}

</mosaic_0001>

<llo_original>
// kernel: tpu_custom_call.1
$region0: #{tpu_custom_call.1}
  #allocation0 [shape = 'u32[]', space=smem, size = 0x4, offset = 0x4, fixed_abs, tag = 'smem constant byte address 0x4 - core index']
  #allocation1 [shape = 'u32[144,128]{1,0:T(1,128)}', space=vmem, size = 0x12000, scoped, tag = 'internal scratch']
  %s0 = inlined_call_operand.hbm [shape: bf16[2,18,24,128], index: 0, kind: input, shape index: {}]
  %s1 = inlined_call_operand.hbm [shape: bf16[2,18,24,128], index: 1, kind: input, shape index: {}]
  %s2 = inlined_call_operand.hbm [shape: bf16[3,384,128], index: 2, kind: input, shape index: {}]
  %s3 = inlined_call_operand.vmem [shape: f32[1,128], index: 3, kind: input, shape index: {}]
  %s4 = inlined_call_operand.hbm [shape: f32[2,16,24,128], index: 4, kind: output, shape index: {}]
  %s5 = sld [smem:[#allocation0]]
  $region61: #{tpu_custom_call.1} parent=0
    _
  %s7 = ssub.s32 1, %s5
  %s8 = scalar_select 0, %s7, %s5
  $region1: #{tpu_custom_call.1} parent=0
    #allocation2 [shape = 'u8[196608]{0}', space=vmem, size = 0x30000, scoped, tag = 'input window, operand 0']
    #allocation3 [shape = 's32[2]{0}', space=sflag, size = 0x8, scoped, tag = 'scoped memory for tpu_custom_call.1']
    #allocation4 [shape = 's32[2]{0}', space=sflag, size = 0x8, scoped, tag = 'scoped memory for tpu_custom_call.1']
    #allocation5 [shape = 'u8[24576]{0}', space=vmem, size = 0x6000, scoped, tag = 'input window, operand 1']
    #allocation6 [shape = 's32[2]{0}', space=sflag, size = 0x8, scoped, tag = 'scoped memory for tpu_custom_call.1']
    #allocation7 [shape = 'u8[294912]{0}', space=vmem, size = 0x48000, scoped, tag = 'input window, operand 2, single buffered']
    #allocation8 [shape = 'u8[393216]{0}', space=vmem, size = 0x60000, scoped, tag = 'output window, operand 0']
    %9 = vsyncpa [#allocation3], 0
    %s10 = scalar_lea.sflag [#allocation3], 1
    %11 = vsyncpa %s10, 0
    %12 = vsyncpa [#allocation6], 0
    %s13 = scalar_lea.sflag [#allocation6], 1
    %14 = vsyncpa %s13, 0
    %15 = vsyncpa [#allocation4], 0
    %s16 = scalar_lea.sflag [#allocation4], 1
    %17 = vsyncpa %s16, 0
    loop: start=0, step=1, limit=4
    $region2: #{tpu_custom_call.1} parent=1 // loop_pre_header
      _
    $region3: #{tpu_custom_call.1} parent=1 // loop_header
      %s19 = sphi 0, %s23
      %p20 = scmp.ge.s32.totalorder %s19, 4
      %s26 = sphi 0, %s45
      %s27 = sphi 0, %s41
      %s28 = sphi 0, %s37
      %s29 = sphi 0, %s26
      %s30 = sphi 0, %s27
      %s31 = sphi 0, %s28
      %s32 = sphi 0, %s29
      %s33 = sphi 0, %s30
      %s34 = sphi 0, %s31
      %s50 = sphi 0, %s52
      %s53 = sphi 0, %s50
      %s54 = sphi 0, %s53
      %s70 = sphi 0, %s54
      %s82 = sphi 0, %s84
      %s85 = sphi 0, %s82
      %s86 = sphi 0, %s85
      %s102 = sphi 0, %s86
      %s108 = sphi 0, %s110
      %s111 = sphi 0, %s108
      %s112 = sphi 0, %s111
      %s128 = sphi 0, %s112
      %s134 = sphi 0, %s136
      %s137 = sphi 0, %s134
      %s138 = sphi 0, %s137
      %s154 = sphi 0, %s138
      %s164 = sphi 0, %s166
      %s167 = sphi 0, %s164
      %s168 = sphi 0, %s167
      %s184 = sphi 0, %s168
    $region4: #{tpu_custom_call.1} parent=1 // loop_header_branch
      %22 = sbr.rel (%p20) target = $region8
    $region5: #{tpu_custom_call.1} parent=1 // loop_body
      %s24 = ssub.s32 %s19, 1
      %s25 = ssub.s32 %s19, 2
      %s35 = sadd.s32 1, %s28
      %p36 = scmp.ge.s32.totalorder %s35, 1
      %s37 = scalar_select %p36, 0, %s35
      %s38 = sadd.s32 1, %s27
      %s39 = scalar_select %p36, %s38, %s27
      %p40 = scmp.ge.s32.totalorder %s39, 1
      %s41 = scalar_select %p40, 0, %s39
      %s42 = sadd.s32 1, %s26
      %s43 = scalar_select %p40, %s42, %s26
      %p44 = scmp.ge.s32.totalorder %s43, 2
      %s45 = scalar_select %p44, 0, %s43
      %s46 = ssub.s32 %s26, %s45
      %s47 = ssub.s32 %s27, %s41
      %s48 = sor.u32 %s46, %s47
      %p49 = scmp.eq.s32.totalorder %s48, 0
      %s51 = sadd.s32 %s50, 1
      %s52 = scalar_select %p49, %s50, %s51
      %p55 = pneg %p49
      %p56 = scmp.eq.s32.totalorder %s19, 1
      %p57 = por %p55, %p56
      %p58 = scmp.ne.s32.totalorder %s50, %s53
      %p59 = scmp.eq.s32.totalorder %s19, 0
      %p60 = por %p58, %p59
      %p61 = scmp.ne.s32.totalorder %s50, %s53
      %p62 = scmp.eq.s32.totalorder %s24, 1
      %p63 = por %p61, %p62
      %p64 = scmp.ne.s32.totalorder %s53, %s54
      %p65 = scmp.eq.s32.totalorder %s24, 0
      %p66 = por %p64, %p65
      %p67 = scmp.ne.s32.totalorder %s53, %s54
      %p68 = scmp.eq.s32.totalorder %s25, 1
      %p69 = por %p67, %p68
      %p71 = scmp.ne.s32.totalorder %s54, %s70
      %p72 = scmp.eq.s32.totalorder %s25, 0
      %p73 = por %p71, %p72
      %s74 = sadd.s32 %s27, 1
      %s75 = smul.u32 %s74, 8
      %s76 = sadd.s32 %s41, 1
      %s77 = smul.u32 %s76, 8
      %s78 = ssub.s32 %s26, %s45
      %s79 = ssub.s32 %s75, %s77
      %s80 = sor.u32 %s78, %s79
      %p81 = scmp.eq.s32.totalorder %s80, 0
      %s83 = sadd.s32 %s82, 1
      %s84 = scalar_select %p81, %s82, %s83
      %p87 = pneg %p81
      %p88 = scmp.eq.s32.totalorder %s19, 1
      %p89 = por %p87, %p88
      %p90 = scmp.ne.s32.totalorder %s82, %s85
      %p91 = scmp.eq.s32.totalorder %s19, 0
      %p92 = por %p90, %p91
      %p93 = scmp.ne.s32.totalorder %s82, %s85
      %p94 = scmp.eq.s32.totalorder %s24, 1
      %p95 = por %p93, %p94
      %p96 = scmp.ne.s32.totalorder %s85, %s86
      %p97 = scmp.eq.s32.totalorder %s24, 0
      %p98 = por %p96, %p97
      %p99 = scmp.ne.s32.totalorder %s85, %s86
      %p100 = scmp.eq.s32.totalorder %s25, 1
      %p101 = por %p99, %p100
      %p103 = scmp.ne.s32.totalorder %s86, %s102
      %p104 = scmp.eq.s32.totalorder %s25, 0
      %p105 = por %p103, %p104
      %s106 = ssub.s32 %s28, %s37
      %p107 = scmp.eq.s32.totalorder %s106, 0
      %s109 = sadd.s32 %s108, 1
      %s110 = scalar_select %p107, %s108, %s109
      %p113 = pneg %p107
      %p114 = scmp.eq.s32.totalorder %s19, 1
      %p115 = por %p113, %p114
      %p116 = scmp.ne.s32.totalorder %s108, %s111
      %p117 = scmp.eq.s32.totalorder %s19, 0
      %p118 = por %p116, %p117
      %p119 = scmp.ne.s32.totalorder %s108, %s111
      %p120 = scmp.eq.s32.totalorder %s24, 1
      %p121 = por %p119, %p120
      %p122 = scmp.ne.s32.totalorder %s111, %s112
      %p123 = scmp.eq.s32.totalorder %s24, 0
      %p124 = por %p122, %p123
      %p125 = scmp.ne.s32.totalorder %s111, %s112
      %p126 = scmp.eq.s32.totalorder %s25, 1
      %p127 = por %p125, %p126
      %p129 = scmp.ne.s32.totalorder %s112, %s128
      %p130 = scmp.eq.s32.totalorder %s25, 0
      %p131 = por %p129, %p130
      %s132 = ssub.s32 %s28, %s37
      %p133 = scmp.eq.s32.totalorder %s132, 0
      %s135 = sadd.s32 %s134, 1
      %s136 = scalar_select %p133, %s134, %s135
      %p139 = pneg %p133
      %p140 = scmp.eq.s32.totalorder %s19, 1
      %p141 = por %p139, %p140
      %p142 = scmp.ne.s32.totalorder %s134, %s137
      %p143 = scmp.eq.s32.totalorder %s19, 0
      %p144 = por %p142, %p143
      %p145 = scmp.ne.s32.totalorder %s134, %s137
      %p146 = scmp.eq.s32.totalorder %s24, 1
      %p147 = por %p145, %p146
      %p148 = scmp.ne.s32.totalorder %s137, %s138
      %p149 = scmp.eq.s32.totalorder %s24, 0
      %p150 = por %p148, %p149
      %p151 = scmp.ne.s32.totalorder %s137, %s138
      %p152 = scmp.eq.s32.totalorder %s25, 1
      %p153 = por %p151, %p152
      %p155 = scmp.ne.s32.totalorder %s138, %s154
      %p156 = scmp.eq.s32.totalorder %s25, 0
      %p157 = por %p155, %p156
      %s158 = ssub.s32 %s26, %s45
      %s159 = ssub.s32 %s27, %s41
      %s160 = sor.u32 %s158, %s159
      %s161 = ssub.s32 %s28, %s37
      %s162 = sor.u32 %s160, %s161
      %p163 = scmp.eq.s32.totalorder %s162, 0
      %s165 = sadd.s32 %s164, 1
      %s166 = scalar_select %p163, %s164, %s165
      %p169 = pneg %p163
      %p170 = scmp.eq.s32.totalorder %s19, 1
      %p171 = por %p169, %p170
      %p172 = scmp.ne.s32.totalorder %s164, %s167
      %p173 = scmp.eq.s32.totalorder %s19, 0
      %p174 = por %p172, %p173
      %p175 = scmp.ne.s32.totalorder %s164, %s167
      %p176 = scmp.eq.s32.totalorder %s24, 1
      %p177 = por %p175, %p176
      %p178 = scmp.ne.s32.totalorder %s167, %s168
      %p179 = scmp.eq.s32.totalorder %s24, 0
      %p180 = por %p178, %p179
      %p181 = scmp.ne.s32.totalorder %s167, %s168
      %p182 = scmp.eq.s32.totalorder %s25, 1
      %p183 = por %p181, %p182
      %p185 = scmp.ne.s32.totalorder %s168, %s184
      %p186 = scmp.eq.s32.totalorder %s25, 0
      %p187 = por %p185, %p186
      %p188 = scmp.le.s32.totalorder 1, %s19
      %p189 = scmp.lt.s32.totalorder %s19, 3
      %p190 = pnand %p188, %p189
      %p191 = pneg %p190
      // Predicated region
      $region9: #{tpu_custom_call.1} parent=5 // pred_check
        _
      $region10: #{tpu_custom_call.1} parent=5 // pred_check_branch
        %193 = sbr.rel (%p190) target = $region12
      $region11: #{tpu_custom_call.1} parent=5 // pred_region
        %s194 = ssub.s32 %s19, 1
        // Predicated region
        $region13: #{tpu_custom_call.1} parent=11 // pred_check
          %p195 = pneg %p124
        $region14: #{tpu_custom_call.1} parent=11 // pred_check_branch
          %197 = sbr.rel (%p195) target = $region16
        $region15: #{tpu_custom_call.1} parent=11 // pred_region
          %s199 = ssub.s32 9216, 9216
          %200 = vsyncadd [#allocation6], %s199
          %s201 = smul.addr %s31, 64
          %s202 = scalar_lea.hbm %s2, %s201
          %s203 = sshll.u32 [#allocation7], 4
          %s204 = int_to_ptr.vmem [resolvable:$true] %s203
          %209 = dma.hbm_to_vmem [thread:$0]  %s202, 9216, %s204, [#allocation6], 64, 64, 4
        $region16: #{tpu_custom_call.1} parent=11 // pred_fallthru
          _
        // Predicated region
        $region17: #{tpu_custom_call.1} parent=11 // pred_check
          %p210 = pneg %p150
        $region18: #{tpu_custom_call.1} parent=11 // pred_check_branch
          %212 = sbr.rel (%p210) target = $region20
        $region19: #{tpu_custom_call.1} parent=11 // pred_region
          %p213 = scmp.lt.s32.totalorder %s31, 0
          %s214 = scalar_select %p213, %s31, 0
          %s215 = scalar_lea.vmem %s3, %s214
        $region20: #{tpu_custom_call.1} parent=11 // pred_fallthru
          _
      $region12: #{tpu_custom_call.1} parent=5 // pred_fallthru
        _
      %p216 = scmp.lt.s32.totalorder %s19, 2
      // Predicated region
      $region21: #{tpu_custom_call.1} parent=5 // pred_check
        %p217 = pneg %p216
      $region22: #{tpu_custom_call.1} parent=5 // pred_check_branch
        %219 = sbr.rel (%p217) target = $region24
      $region23: #{tpu_custom_call.1} parent=5 // pred_region
        // Predicated region
        $region25: #{tpu_custom_call.1} parent=23 // pred_check
          %p220 = pneg %p60
        $region26: #{tpu_custom_call.1} parent=23 // pred_check_branch
          %222 = sbr.rel (%p220) target = $region28
        $region27: #{tpu_custom_call.1} parent=23 // pred_region
          %s223 = sand.u32 %s50, 1
          %s224 = scalar_lea.sflag [#allocation3], %s223
          %s225 = sand.u32 %s50, 1
          %s226 = smul.addr %s225, 192
          %s227 = scalar_lea.vmem [#allocation2], %s226
          %s228 = smul.u32 16, %s27
          %s229 = ssub.s32 18, %s228
          %p230 = scmp.lt.s32.totalorder %s229, 16
          %s231 = scalar_select %p230, %s229, 16
          %s232 = smul.u32 64, %s231
          %s233 = smul.u32 %s232, 3
          %s235 = ssub.s32 3072, %s233
          %236 = vsyncadd %s224, %s235
          %p237 = scmp.ne.s32.totalorder 0, %s233
          %s238 = smul.addr %s228, 3
          %s239 = smul.addr %s26, 54
          %s240 = sadd.s32 %s238, %s239
          %s241 = smul.addr %s240, 64
          %s242 = scalar_lea.hbm %s0, %s241
          %s243 = smul.u32 %s231, 3
          %s244 = smul.u32 4, %s243
          %s245 = sshll.u32 %s227, 4
          %s246 = int_to_ptr.vmem [resolvable:$true] %s245
          %s247 = sshll.u32 %s244, 4
          %251 = dma.hbm_to_vmem [thread:$0]  (%p237), %s242, %s247, %s246, %s224, 64, 64, 4
        $region28: #{tpu_custom_call.1} parent=23 // pred_fallthru
          _
        // Predicated region
        $region29: #{tpu_custom_call.1} parent=23 // pred_check
          %p252 = pneg %p92
        $region30: #{tpu_custom_call.1} parent=23 // pred_check_branch
          %254 = sbr.rel (%p252) target = $region32
        $region31: #{tpu_custom_call.1} parent=23 // pred_region
          %s255 = sand.u32 %s19, 1
          %s256 = scalar_lea.sflag [#allocation6], %s255
          %s257 = sand.u32 %s82, 1
          %s258 = smul.addr %s257, 24
          %s259 = scalar_lea.vmem [#allocation5], %s258
          %s260 = sadd.s32 %s27, 1
          %s261 = smul.u32 %s260, 8
          %s262 = smul.u32 2, %s261
          %s264 = ssub.s32 384, 384
          %265 = vsyncadd %s256, %s264
          %s266 = smul.addr %s262, 3
          %s267 = smul.addr %s26, 54
          %s268 = sadd.s32 %s266, %s267
          %s269 = smul.addr %s268, 64
          %s270 = scalar_lea.hbm %s1, %s269
          %s271 = sshll.u32 %s259, 4
          %s272 = int_to_ptr.vmem [resolvable:$true] %s271
          %277 = dma.hbm_to_vmem [thread:$0]  %s270, 384, %s272, %s256, 64, 64, 4
        $region32: #{tpu_custom_call.1} parent=23 // pred_fallthru
          _
      $region24: #{tpu_custom_call.1} parent=5 // pred_fallthru
        _
      %p278 = scmp.le.s32.totalorder 1, %s19
      %p279 = scmp.lt.s32.totalorder %s19, 3
      %p280 = pnand %p278, %p279
      %p281 = pneg %p280
      // Predicated region
      $region33: #{tpu_custom_call.1} parent=5 // pred_check
        _
      $region34: #{tpu_custom_call.1} parent=5 // pred_check_branch
        %283 = sbr.rel (%p280) target = $region36
      $region35: #{tpu_custom_call.1} parent=5 // pred_region
        %s284 = ssub.s32 %s19, 1
        %s285 = sand.u32 %s53, 1
        %s286 = scalar_lea.sflag [#allocation3], %s285
        %s287 = sand.u32 %s53, 1
        %s288 = smul.addr %s287, 192
        %s289 = scalar_lea.vmem [#allocation2], %s288
        // Predicated region
        $region37: #{tpu_custom_call.1} parent=35 // pred_check
          %p290 = pneg %p66
        $region38: #{tpu_custom_call.1} parent=35 // pred_check_branch
          %292 = sbr.rel (%p290) target = $region40
        $region39: #{tpu_custom_call.1} parent=35 // pred_region
          %293 = dma.done %s286, 3072
        $region40: #{tpu_custom_call.1} parent=35 // pred_fallthru
          _
        %s294 = sand.u32 %s24, 1
        %s295 = scalar_lea.sflag [#allocation6], %s294
        %s296 = sand.u32 %s85, 1
        %s297 = smul.addr %s296, 24
        %s298 = scalar_lea.vmem [#allocation5], %s297
        // Predicated region
        $region41: #{tpu_custom_call.1} parent=35 // pred_check
          %p299 = pneg %p98
        $region42: #{tpu_custom_call.1} parent=35 // pred_check_branch
          %301 = sbr.rel (%p299) target = $region44
        $region43: #{tpu_custom_call.1} parent=35 // pred_region
          %302 = dma.done %s295, 384
        $region44: #{tpu_custom_call.1} parent=35 // pred_fallthru
          _
        // Predicated region
        $region45: #{tpu_custom_call.1} parent=35 // pred_check
          %p303 = pneg %p124
        $region46: #{tpu_custom_call.1} parent=35 // pred_check_branch
          %305 = sbr.rel (%p303) target = $region48
        $region47: #{tpu_custom_call.1} parent=35 // pred_region
          %306 = dma.done [#allocation6], 9216
        $region48: #{tpu_custom_call.1} parent=35 // pred_fallthru
          _
        %s307 = sand.u32 %s53, 1
        %s308 = scalar_lea.sflag [#allocation3], %s307
        %s309 = sand.u32 %s53, 1
        %s310 = smul.addr %s309, 192
        %s311 = scalar_lea.vmem [#allocation2], %s310
        %p312 = pneg %p66
        %p313 = pneg %p63
        %s314 = sand.u32 %s24, 1
        %s315 = scalar_lea.sflag [#allocation6], %s314
        %s316 = sand.u32 %s85, 1
        %s317 = smul.addr %s316, 24
        %s318 = scalar_lea.vmem [#allocation5], %s317
        %p319 = pneg %p98
        %p320 = pneg %p95
        %p321 = pneg %p124
        %p322 = pneg %p121
        %p323 = scmp.lt.s32.totalorder %s31, 0
        %s324 = scalar_select %p323, %s31, 0
        %s325 = scalar_lea.vmem %s3, %s324
        %p326 = pneg %p150
        %p327 = pneg %p147
        %p328 = pneg %p180
        %p329 = pneg %p177
        %s330 = sand.u32 %s167, 1
        %s331 = scalar_lea.sflag [#allocation4], %s330
        %s332 = sand.u32 %s167, 1
        %s333 = smul.addr %s332, 384
        %s334 = scalar_lea.vmem [#allocation8], %s333
        %s335 = smul.u32 16, %s30
        %s336 = ssub.s32 18, %s335
        %p337 = scmp.lt.s32.totalorder %s336, 16
        %s338 = scalar_select %p337, %s336, 16
        %s339 = smul.u32 64, %s338
        %s340 = smul.u32 %s339, 3
        %s341 = sadd.s32 %s30, 1
        %s342 = smul.u32 %s341, 8
        %s343 = smul.u32 2, %s342
        %p344 = scmp.lt.s32.totalorder %s31, 0
        %s345 = scalar_select %p344, %s31, 0
        %s346 = scalar_lea.vmem %s3, %s345
        %s347 = smul.u32 16, %s30
        %v349 = vld [vmem:[%s289] sm:$0xf]
        %v350 = vld [vmem:[%s289 + $0x4] sm:$0xf]
        %v351 = vld [vmem:[%s289 + $0x8] sm:$0xf]
        %v352 = vld [vmem:[%s289 + $0xc] sm:$0xf]
        %v353 = vld [vmem:[%s289 + $0x10] sm:$0xf]
        %v354 = vld [vmem:[%s289 + $0x14] sm:$0xf]
        %v355 = vld [vmem:[%s289 + $0x18] sm:$0xf]
        %v356 = vld [vmem:[%s289 + $0x1c] sm:$0xf]
        %v357 = vld [vmem:[%s289 + $0x20] sm:$0xf]
        %v358 = vld [vmem:[%s289 + $0x24] sm:$0xf]
        %v359 = vld [vmem:[%s289 + $0x28] sm:$0xf]
        %v360 = vld [vmem:[%s289 + $0x2c] sm:$0xf]
        %v361 = vld [vmem:[%s289 + $0x30] sm:$0xf]
        %v362 = vld [vmem:[%s289 + $0x34] sm:$0xf]
        %v363 = vld [vmem:[%s289 + $0x38] sm:$0xf]
        %v364 = vld [vmem:[%s289 + $0x3c] sm:$0xf]
        %v365 = vld [vmem:[%s289 + $0x40] sm:$0xf]
        %v366 = vld [vmem:[%s289 + $0x44] sm:$0xf]
        %v367 = vld [vmem:[%s289 + $0x48] sm:$0xf]
        %v368 = vld [vmem:[%s289 + $0x4c] sm:$0xf]
        %v369 = vld [vmem:[%s289 + $0x50] sm:$0xf]
        %v370 = vld [vmem:[%s289 + $0x54] sm:$0xf]
        %v371 = vld [vmem:[%s289 + $0x58] sm:$0xf]
        %v372 = vld [vmem:[%s289 + $0x5c] sm:$0xf]
        %v373 = vld [vmem:[%s289 + $0x60] sm:$0xf]
        %v374 = vld [vmem:[%s289 + $0x64] sm:$0xf]
        %v375 = vld [vmem:[%s289 + $0x68] sm:$0xf]
        %v376 = vld [vmem:[%s289 + $0x6c] sm:$0xf]
        %v377 = vld [vmem:[%s289 + $0x70] sm:$0xf]
        %v378 = vld [vmem:[%s289 + $0x74] sm:$0xf]
        %v379 = vld [vmem:[%s289 + $0x78] sm:$0xf]
        %v380 = vld [vmem:[%s289 + $0x7c] sm:$0xf]
        %v381 = vld [vmem:[%s289 + $0x80] sm:$0xf]
        %v382 = vld [vmem:[%s289 + $0x84] sm:$0xf]
        %v383 = vld [vmem:[%s289 + $0x88] sm:$0xf]
        %v384 = vld [vmem:[%s289 + $0x8c] sm:$0xf]
        %v385 = vld [vmem:[%s289 + $0x90] sm:$0xf]
        %v386 = vld [vmem:[%s289 + $0x94] sm:$0xf]
        %v387 = vld [vmem:[%s289 + $0x98] sm:$0xf]
        %v388 = vld [vmem:[%s289 + $0x9c] sm:$0xf]
        %v389 = vld [vmem:[%s289 + $0xa0] sm:$0xf]
        %v390 = vld [vmem:[%s289 + $0xa4] sm:$0xf]
        %v391 = vld [vmem:[%s289 + $0xa8] sm:$0xf]
        %v392 = vld [vmem:[%s289 + $0xac] sm:$0xf]
        %v393 = vld [vmem:[%s289 + $0xb0] sm:$0xf]
        %v394 = vld [vmem:[%s289 + $0xb4] sm:$0xf]
        %v395 = vld [vmem:[%s289 + $0xb8] sm:$0xf]
        %v396 = vld [vmem:[%s289 + $0xbc] sm:$0xf]
        %v397 = vld [vmem:[%s298] sm:$0xf]
        %v398 = vld [vmem:[%s298 + $0x4] sm:$0xf]
        %v399 = vld [vmem:[%s298 + $0x8] sm:$0xf]
        %v400 = vld [vmem:[%s298 + $0xc] sm:$0xf]
        %v401 = vld [vmem:[%s298 + $0x10] sm:$0xf]
        %v402 = vld [vmem:[%s298 + $0x14] sm:$0xf]
        %v451 = vunpack.c.l.b16 %v349
        %v452 = vunpack.c.l.b16 %v350
        %v453 = vunpack.c.l.b16 %v351
        %v454 = vunpack.c.l.b16 %v352
        %v455 = vunpack.c.l.b16 %v353
        %v456 = vunpack.c.l.b16 %v354
        %v457 = vunpack.c.l.b16 %v355
        %v458 = vunpack.c.l.b16 %v356
        %v459 = vunpack.c.l.b16 %v357
        %v460 = vunpack.c.l.b16 %v358
        %v461 = vunpack.c.l.b16 %v359
        %v462 = vunpack.c.l.b16 %v360
        %v463 = vunpack.c.l.b16 %v361
        %v464 = vunpack.c.l.b16 %v362
        %v465 = vunpack.c.l.b16 %v363
        %v466 = vunpack.c.l.b16 %v364
        %v467 = vunpack.c.l.b16 %v365
        %v468 = vunpack.c.l.b16 %v366
        %v469 = vunpack.c.l.b16 %v367
        %v470 = vunpack.c.l.b16 %v368
        %v471 = vunpack.c.l.b16 %v369
        %v472 = vunpack.c.l.b16 %v370
        %v473 = vunpack.c.l.b16 %v371
        %v474 = vunpack.c.l.b16 %v372
        %v475 = vunpack.c.l.b16 %v373
        %v476 = vunpack.c.l.b16 %v374
        %v477 = vunpack.c.l.b16 %v375
        %v478 = vunpack.c.l.b16 %v376
        %v479 = vunpack.c.l.b16 %v377
        %v480 = vunpack.c.l.b16 %v378
        %v481 = vunpack.c.l.b16 %v379
        %v482 = vunpack.c.l.b16 %v380
        %v483 = vunpack.c.l.b16 %v381
        %v484 = vunpack.c.l.b16 %v382
        %v485 = vunpack.c.l.b16 %v383
        %v486 = vunpack.c.l.b16 %v384
        %v487 = vunpack.c.l.b16 %v385
        %v488 = vunpack.c.l.b16 %v386
        %v489 = vunpack.c.l.b16 %v387
        %v490 = vunpack.c.l.b16 %v388
        %v491 = vunpack.c.l.b16 %v389
        %v492 = vunpack.c.l.b16 %v390
        %v493 = vunpack.c.l.b16 %v391
        %v494 = vunpack.c.l.b16 %v392
        %v495 = vunpack.c.l.b16 %v393
        %v496 = vunpack.c.l.b16 %v394
        %v497 = vunpack.c.l.b16 %v395
        %v498 = vunpack.c.l.b16 %v396
        %v499 = vpack.c.b16 %v452, %v451
        %v500 = vpack.c.b16 %v454, %v453
        %v501 = vpack.c.b16 %v456, %v455
        %v502 = vpack.c.b16 %v458, %v457
        %v503 = vpack.c.b16 %v460, %v459
        %v504 = vpack.c.b16 %v462, %v461
        %v505 = vpack.c.b16 %v464, %v463
        %v506 = vpack.c.b16 %v466, %v465
        %v507 = vpack.c.b16 %v468, %v467
        %v508 = vpack.c.b16 %v470, %v469
        %v509 = vpack.c.b16 %v472, %v471
        %v510 = vpack.c.b16 %v474, %v473
        %v511 = vpack.c.b16 %v476, %v475
        %v512 = vpack.c.b16 %v478, %v477
        %v513 = vpack.c.b16 %v480, %v479
        %v514 = vpack.c.b16 %v482, %v481
        %v515 = vpack.c.b16 %v484, %v483
        %v516 = vpack.c.b16 %v486, %v485
        %v517 = vpack.c.b16 %v488, %v487
        %v518 = vpack.c.b16 %v490, %v489
        %v519 = vpack.c.b16 %v492, %v491
        %v520 = vpack.c.b16 %v494, %v493
        %v521 = vpack.c.b16 %v496, %v495
        %v522 = vpack.c.b16 %v498, %v497
        %v553 = vunpack.c.l.b16 %v397
        %v554 = vunpack.c.l.b16 %v398
        %v555 = vunpack.c.l.b16 %v399
        %v556 = vunpack.c.l.b16 %v400
        %v557 = vunpack.c.l.b16 %v401
        %v558 = vunpack.c.l.b16 %v402
        %v559 = vpack.c.b16 %v554, %v553
        %v560 = vpack.c.b16 %v556, %v555
        %v561 = vpack.c.b16 %v558, %v557
        %vm565 = vsmask.f32 7424
        %v567 = vshrl.u32 %v499, 16
        %v569 = vshll.u32 %v499, 16
        %v571 = vrot.slane %v569, 1
        %v572 = vor.u32 %v567, %v571
        %v574 = vshll.u32 %v500, 16
        %v576 = vrot.slane %v574, 1
        %v577 = vsel %vm565, %v572, %v576
        %v578 = vshrl.u32 %v500, 16
        %v580 = vor.u32 %v578, %v576
        %v582 = vshll.u32 %v501, 16
        %v584 = vrot.slane %v582, 1
        %v585 = vsel %vm565, %v580, %v584
        %v586 = vshrl.u32 %v501, 16
        %v588 = vor.u32 %v586, %v584
        %v590 = vshll.u32 %v502, 16
        %v592 = vrot.slane %v590, 1
        %v593 = vsel %vm565, %v588, %v592
        %v594 = vshrl.u32 %v502, 16
        %v596 = vor.u32 %v594, %v592
        %v598 = vshll.u32 %v503, 16
        %v600 = vrot.slane %v598, 1
        %v601 = vsel %vm565, %v596, %v600
        %v602 = vshrl.u32 %v503, 16
        %v604 = vor.u32 %v602, %v600
        %v606 = vshll.u32 %v504, 16
        %v608 = vrot.slane %v606, 1
        %v609 = vsel %vm565, %v604, %v608
        %v610 = vshrl.u32 %v504, 16
        %v612 = vor.u32 %v610, %v608
        %v614 = vshll.u32 %v505, 16
        %v616 = vrot.slane %v614, 1
        %v617 = vsel %vm565, %v612, %v616
        %v618 = vshrl.u32 %v505, 16
        %v620 = vor.u32 %v618, %v616
        %v622 = vshll.u32 %v506, 16
        %v624 = vrot.slane %v622, 1
        %v625 = vsel %vm565, %v620, %v624
        %v626 = vshrl.u32 %v506, 16
        %v628 = vor.u32 %v626, %v624
        %v630 = vshll.u32 %v507, 16
        %v632 = vrot.slane %v630, 1
        %v633 = vsel %vm565, %v628, %v632
        %v634 = vshrl.u32 %v507, 16
        %v636 = vor.u32 %v634, %v632
        %v638 = vshll.u32 %v508, 16
        %v640 = vrot.slane %v638, 1
        %v641 = vsel %vm565, %v636, %v640
        %v642 = vshrl.u32 %v508, 16
        %v644 = vor.u32 %v642, %v640
        %v646 = vshll.u32 %v509, 16
        %v648 = vrot.slane %v646, 1
        %v649 = vsel %vm565, %v644, %v648
        %v650 = vshrl.u32 %v509, 16
        %v652 = vor.u32 %v650, %v648
        %v654 = vshll.u32 %v510, 16
        %v656 = vrot.slane %v654, 1
        %v657 = vsel %vm565, %v652, %v656
        %v658 = vshrl.u32 %v510, 16
        %v660 = vor.u32 %v658, %v656
        %v662 = vshll.u32 %v511, 16
        %v664 = vrot.slane %v662, 1
        %v665 = vsel %vm565, %v660, %v664
        %v666 = vshrl.u32 %v511, 16
        %v668 = vor.u32 %v666, %v664
        %v670 = vshll.u32 %v512, 16
        %v672 = vrot.slane %v670, 1
        %v673 = vsel %vm565, %v668, %v672
        %v674 = vshrl.u32 %v512, 16
        %v676 = vor.u32 %v674, %v672
        %v678 = vshll.u32 %v513, 16
        %v680 = vrot.slane %v678, 1
        %v681 = vsel %vm565, %v676, %v680
        %v682 = vshrl.u32 %v513, 16
        %v684 = vor.u32 %v682, %v680
        %v686 = vshll.u32 %v514, 16
        %v688 = vrot.slane %v686, 1
        %v689 = vsel %vm565, %v684, %v688
        %v690 = vshrl.u32 %v514, 16
        %v692 = vor.u32 %v690, %v688
        %v694 = vshll.u32 %v515, 16
        %v696 = vrot.slane %v694, 1
        %v697 = vsel %vm565, %v692, %v696
        %v698 = vshrl.u32 %v515, 16
        %v700 = vor.u32 %v698, %v696
        %v702 = vshll.u32 %v516, 16
        %v704 = vrot.slane %v702, 1
        %v705 = vsel %vm565, %v700, %v704
        %v706 = vshrl.u32 %v516, 16
        %v708 = vor.u32 %v706, %v704
        %v710 = vshll.u32 %v517, 16
        %v712 = vrot.slane %v710, 1
        %v713 = vsel %vm565, %v708, %v712
        %v714 = vshrl.u32 %v517, 16
        %v716 = vor.u32 %v714, %v712
        %v718 = vshll.u32 %v518, 16
        %v720 = vrot.slane %v718, 1
        %v721 = vsel %vm565, %v716, %v720
        %v722 = vshrl.u32 %v518, 16
        %v724 = vor.u32 %v722, %v720
        %v726 = vshll.u32 %v519, 16
        %v728 = vrot.slane %v726, 1
        %v729 = vsel %vm565, %v724, %v728
        %v730 = vshrl.u32 %v519, 16
        %v732 = vor.u32 %v730, %v728
        %v734 = vshll.u32 %v520, 16
        %v736 = vrot.slane %v734, 1
        %v737 = vsel %vm565, %v732, %v736
        %v738 = vshrl.u32 %v520, 16
        %v740 = vor.u32 %v738, %v736
        %v742 = vshll.u32 %v521, 16
        %v744 = vrot.slane %v742, 1
        %v745 = vsel %vm565, %v740, %v744
        %v746 = vshrl.u32 %v521, 16
        %v748 = vor.u32 %v746, %v744
        %v750 = vshll.u32 %v522, 16
        %v752 = vrot.slane %v750, 1
        %v753 = vsel %vm565, %v748, %v752
        %v754 = vshrl.u32 %v522, 16
        %v756 = vor.u32 %v754, %v752
        %v758 = vshll.u32 %v559, 16
        %v760 = vrot.slane %v758, 1
        %v761 = vsel %vm565, %v756, %v760
        %v762 = vshrl.u32 %v559, 16
        %v764 = vor.u32 %v762, %v760
        %v766 = vshll.u32 %v560, 16
        %v768 = vrot.slane %v766, 1
        %v769 = vsel %vm565, %v764, %v768
        %v770 = vshrl.u32 %v560, 16
        %v772 = vor.u32 %v770, %v768
        %v774 = vshll.u32 %v561, 16
        %v776 = vrot.slane %v774, 1
        %v777 = vsel %vm565, %v772, %v776
        %v778 = vshrl.u32 %v561, 16
        %v780 = vor.u32 %v778, %v776
        %v782 = vshll.u32 0, 16
        %v784 = vrot.slane %v782, 1
        %v785 = vsel %vm565, %v780, %v784
        %vm814 = vcmask 1046528
        %v815 = vrot.slane %v499, 1
        %v816 = vrot.slane %v500, 1
        %v817 = vsel %vm814, %v815, %v816
        %v818 = vrot.slane %v501, 1
        %v819 = vsel %vm814, %v816, %v818
        %v820 = vrot.slane %v502, 1
        %v821 = vsel %vm814, %v818, %v820
        %v822 = vrot.slane %v503, 1
        %v823 = vsel %vm814, %v820, %v822
        %v824 = vrot.slane %v504, 1
        %v825 = vsel %vm814, %v822, %v824
        %v826 = vrot.slane %v505, 1
        %v827 = vsel %vm814, %v824, %v826
        %v828 = vrot.slane %v506, 1
        %v829 = vsel %vm814, %v826, %v828
        %v830 = vrot.slane %v507, 1
        %v831 = vsel %vm814, %v828, %v830
        %v832 = vrot.slane %v508, 1
        %v833 = vsel %vm814, %v830, %v832
        %v834 = vrot.slane %v509, 1
        %v835 = vsel %vm814, %v832, %v834
        %v836 = vrot.slane %v510, 1
        %v837 = vsel %vm814, %v834, %v836
        %v838 = vrot.slane %v511, 1
        %v839 = vsel %vm814, %v836, %v838
        %v840 = vrot.slane %v512, 1
        %v841 = vsel %vm814, %v838, %v840
        %v842 = vrot.slane %v513, 1
        %v843 = vsel %vm814, %v840, %v842
        %v844 = vrot.slane %v514, 1
        %v845 = vsel %vm814, %v842, %v844
        %v846 = vrot.slane %v515, 1
        %v847 = vsel %vm814, %v844, %v846
        %v848 = vrot.slane %v516, 1
        %v849 = vsel %vm814, %v846, %v848
        %v850 = vrot.slane %v517, 1
        %v851 = vsel %vm814, %v848, %v850
        %v852 = vrot.slane %v518, 1
        %v853 = vsel %vm814, %v850, %v852
        %v854 = vrot.slane %v519, 1
        %v855 = vsel %vm814, %v852, %v854
        %v856 = vrot.slane %v520, 1
        %v857 = vsel %vm814, %v854, %v856
        %v858 = vrot.slane %v521, 1
        %v859 = vsel %vm814, %v856, %v858
        %v860 = vrot.slane %v522, 1
        %v861 = vsel %vm814, %v858, %v860
        %v862 = vrot.slane %v559, 1
        %v863 = vsel %vm814, %v860, %v862
        %v864 = vrot.slane %v560, 1
        %v865 = vsel %vm814, %v862, %v864
        %v866 = vrot.slane %v561, 1
        %v867 = vsel %vm814, %v864, %v866
        %v868 = vrot.slane 0, 1
        %v869 = vsel %vm814, %v866, %v868
        %v897 = vld [vmem:[#allocation7] sm:$0xf]
        %v898 = vld [vmem:[#allocation7 + $0x4] sm:$0xf]
        %v899 = vld [vmem:[#allocation7 + $0x8] sm:$0xf]
        %v900 = vld [vmem:[#allocation7 + $0xc] sm:$0xf]
        %v901 = vld [vmem:[#allocation7 + $0x10] sm:$0xf]
        %v902 = vld [vmem:[#allocation7 + $0x14] sm:$0xf]
        %v903 = vld [vmem:[#allocation7 + $0x18] sm:$0xf]
        %v904 = vld [vmem:[#allocation7 + $0x1c] sm:$0xf]
        %v905 = vld [vmem:[#allocation7 + $0x20] sm:$0xf]
        %v906 = vld [vmem:[#allocation7 + $0x24] sm:$0xf]
        %v907 = vld [vmem:[#allocation7 + $0x28] sm:$0xf]
        %v908 = vld [vmem:[#allocation7 + $0x2c] sm:$0xf]
        %v909 = vld [vmem:[#allocation7 + $0x30] sm:$0xf]
        %v910 = vld [vmem:[#allocation7 + $0x34] sm:$0xf]
        %v911 = vld [vmem:[#allocation7 + $0x38] sm:$0xf]
        %v912 = vld [vmem:[#allocation7 + $0x3c] sm:$0xf]
        %v913 = vld [vmem:[#allocation7 + $0x40] sm:$0xf]
        %v914 = vld [vmem:[#allocation7 + $0x44] sm:$0xf]
        %v915 = vld [vmem:[#allocation7 + $0x48] sm:$0xf]
        %v916 = vld [vmem:[#allocation7 + $0x4c] sm:$0xf]
        %v917 = vld [vmem:[#allocation7 + $0x50] sm:$0xf]
        %v918 = vld [vmem:[#allocation7 + $0x54] sm:$0xf]
        %v919 = vld [vmem:[#allocation7 + $0x58] sm:$0xf]
        %v920 = vld [vmem:[#allocation7 + $0x5c] sm:$0xf]
        %v921 = vld [vmem:[#allocation7 + $0x60] sm:$0xf]
        %v922 = vld [vmem:[#allocation7 + $0x64] sm:$0xf]
        %v923 = vld [vmem:[#allocation7 + $0x68] sm:$0xf]
        %v924 = vld [vmem:[#allocation7 + $0x6c] sm:$0xf]
        %v925 = vld [vmem:[#allocation7 + $0x70] sm:$0xf]
        %v926 = vld [vmem:[#allocation7 + $0x74] sm:$0xf]
        %v927 = vld [vmem:[#allocation7 + $0x78] sm:$0xf]
        %v928 = vld [vmem:[#allocation7 + $0x7c] sm:$0xf]
        %v929 = vld [vmem:[#allocation7 + $0x80] sm:$0xf]
        %v930 = vld [vmem:[#allocation7 + $0x84] sm:$0xf]
        %v931 = vld [vmem:[#allocation7 + $0x88] sm:$0xf]
        %v932 = vld [vmem:[#allocation7 + $0x8c] sm:$0xf]
        %v933 = vld [vmem:[#allocation7 + $0x90] sm:$0xf]
        %v934 = vld [vmem:[#allocation7 + $0x94] sm:$0xf]
        %v935 = vld [vmem:[#allocation7 + $0x98] sm:$0xf]
        %v936 = vld [vmem:[#allocation7 + $0x9c] sm:$0xf]
        %v937 = vld [vmem:[#allocation7 + $0xa0] sm:$0xf]
        %v938 = vld [vmem:[#allocation7 + $0xa4] sm:$0xf]
        %v939 = vld [vmem:[#allocation7 + $0xa8] sm:$0xf]
        %v940 = vld [vmem:[#allocation7 + $0xac] sm:$0xf]
        %v941 = vld [vmem:[#allocation7 + $0xb0] sm:$0xf]
        %v942 = vld [vmem:[#allocation7 + $0xb4] sm:$0xf]
        %v943 = vld [vmem:[#allocation7 + $0xb8] sm:$0xf]
        %v944 = vld [vmem:[#allocation7 + $0xbc] sm:$0xf]
        %v945 = vld [vmem:[%s346] sm:$0x1]
        %v947 = vlaneseq
        %v948 = vshrl.u32 %v947, 7
        %v949 = vsub.s32 0, %v948
        %v950 = vrot.slane %v945, %v949
        %v1000 = vunpack.c.l.b16 %v897
        %v1001 = vunpack.c.l.b16 %v898
        %v1002 = vunpack.c.l.b16 %v899
        %v1003 = vunpack.c.l.b16 %v900
        %v1004 = vunpack.c.l.b16 %v901
        %v1005 = vunpack.c.l.b16 %v902
        %v1006 = vunpack.c.l.b16 %v903
        %v1007 = vunpack.c.l.b16 %v904
        %v1008 = vunpack.c.l.b16 %v905
        %v1009 = vunpack.c.l.b16 %v906
        %v1010 = vunpack.c.l.b16 %v907
        %v1011 = vunpack.c.l.b16 %v908
        %v1012 = vunpack.c.l.b16 %v909
        %v1013 = vunpack.c.l.b16 %v910
        %v1014 = vunpack.c.l.b16 %v911
        %v1015 = vunpack.c.l.b16 %v912
        %v1016 = vunpack.c.l.b16 %v913
        %v1017 = vunpack.c.l.b16 %v914
        %v1018 = vunpack.c.l.b16 %v915
        %v1019 = vunpack.c.l.b16 %v916
        %v1020 = vunpack.c.l.b16 %v917
        %v1021 = vunpack.c.l.b16 %v918
        %v1022 = vunpack.c.l.b16 %v919
        %v1023 = vunpack.c.l.b16 %v920
        %v1024 = vunpack.c.l.b16 %v921
        %v1025 = vunpack.c.l.b16 %v922
        %v1026 = vunpack.c.l.b16 %v923
        %v1027 = vunpack.c.l.b16 %v924
        %v1028 = vunpack.c.l.b16 %v925
        %v1029 = vunpack.c.l.b16 %v926
        %v1030 = vunpack.c.l.b16 %v927
        %v1031 = vunpack.c.l.b16 %v928
        %v1032 = vunpack.c.l.b16 %v929
        %v1033 = vunpack.c.l.b16 %v930
        %v1034 = vunpack.c.l.b16 %v931
        %v1035 = vunpack.c.l.b16 %v932
        %v1036 = vunpack.c.l.b16 %v933
        %v1037 = vunpack.c.l.b16 %v934
        %v1038 = vunpack.c.l.b16 %v935
        %v1039 = vunpack.c.l.b16 %v936
        %v1040 = vunpack.c.l.b16 %v937
        %v1041 = vunpack.c.l.b16 %v938
        %v1042 = vunpack.c.l.b16 %v939
        %v1043 = vunpack.c.l.b16 %v940
        %v1044 = vunpack.c.l.b16 %v941
        %v1045 = vunpack.c.l.b16 %v942
        %v1046 = vunpack.c.l.b16 %v943
        %v1047 = vunpack.c.l.b16 %v944
        %v1048 = vpack.c.b16 %v1001, %v1000
        %v1049 = vpack.c.b16 %v1003, %v1002
        %v1050 = vpack.c.b16 %v1005, %v1004
        %v1051 = vpack.c.b16 %v1007, %v1006
        %v1052 = vpack.c.b16 %v1009, %v1008
        %v1053 = vpack.c.b16 %v1011, %v1010
        %v1054 = vpack.c.b16 %v1013, %v1012
        %v1055 = vpack.c.b16 %v1015, %v1014
        %v1056 = vpack.c.b16 %v1017, %v1016
        %v1057 = vpack.c.b16 %v1019, %v1018
        %v1058 = vpack.c.b16 %v1021, %v1020
        %v1059 = vpack.c.b16 %v1023, %v1022
        %v1060 = vpack.c.b16 %v1025, %v1024
        %v1061 = vpack.c.b16 %v1027, %v1026
        %v1062 = vpack.c.b16 %v1029, %v1028
        %v1063 = vpack.c.b16 %v1031, %v1030
        %v1064 = vpack.c.b16 %v1033, %v1032
        %v1065 = vpack.c.b16 %v1035, %v1034
        %v1066 = vpack.c.b16 %v1037, %v1036
        %v1067 = vpack.c.b16 %v1039, %v1038
        %v1068 = vpack.c.b16 %v1041, %v1040
        %v1069 = vpack.c.b16 %v1043, %v1042
        %v1070 = vpack.c.b16 %v1045, %v1044
        %v1071 = vpack.c.b16 %v1047, %v1046
        %1096 = vmatprep.subr.bf16.mxu0 0
        %1097 = vmatpush1.bf16.msra.mxu0 %v1048
        %1098 = vmatprep.subr.bf16.mxu0 0
        %1099 = vmatpush1.bf16.msra.mxu0 %v1049
        %1100 = vmatprep.subr.bf16.mxu0 0
        %1101 = vmatpush1.bf16.msra.mxu0 %v1050
        %1102 = vmatprep.subr.bf16.mxu0 0
        %1103 = vmatpush1.bf16.msra.mxu0 %v1051
        %1104 = vmatprep.subr.bf16.mxu0 0
        %1105 = vmatpush1.bf16.msra.mxu0 %v1052
        %1106 = vmatprep.subr.bf16.mxu0 0
        %1107 = vmatpush1.bf16.msra.mxu0 %v1053
        %1108 = vmatprep.subr.bf16.mxu0 0
        %1109 = vmatpush1.bf16.msra.mxu0 %v1054
        %1110 = vmatprep.subr.bf16.mxu0 0
        %1111 = vmatpush1.bf16.msra.mxu0 %v1055
        %1112 = vmatprep.subr.bf16.mxu0 0
        %1113 = vmatpush1.bf16.msra.mxu0 %v1056
        %1114 = vmatprep.subr.bf16.mxu0 0
        %1115 = vmatpush1.bf16.msra.mxu0 %v1057
        %1116 = vmatprep.subr.bf16.mxu0 0
        %1117 = vmatpush1.bf16.msra.mxu0 %v1058
        %1118 = vmatprep.subr.bf16.mxu0 0
        %1119 = vmatpush1.bf16.msra.mxu0 %v1059
        %1120 = vmatprep.subr.bf16.mxu0 0
        %1121 = vmatpush1.bf16.msra.mxu0 %v1060
        %1122 = vmatprep.subr.bf16.mxu0 0
        %1123 = vmatpush1.bf16.msra.mxu0 %v1061
        %1124 = vmatprep.subr.bf16.mxu0 0
        %1125 = vmatpush1.bf16.msra.mxu0 %v1062
        %1126 = vmatprep.subr.bf16.mxu0 0
        %1127 = vmatpush1.bf16.msra.mxu0 %v1063
        %1128 = vmatprep.mubr.bf16.mxu0 %v577
        %1129 = vmatmul.mubr.bf16.gmra.mrb[0].mxu0 %v499
        %v1130 = vpop.f32.mrb[0].mxu0
        %v1131 = vadd.f32 %v950, %v1130
        %v1132 = vpop.f32.mrb[0].mxu0
        %v1133 = vpop.f32.mrb[0].mxu0
        %v1134 = vadd.f32 %v950, %v1133
        %v1135 = vpop.f32.mrb[0].mxu0
        %1136 = vmatprep.mubr.bf16.mxu0 %v585
        %1137 = vmatmul.mubr.bf16.gmra.mrb[0].mxu0 %v500
        %v1138 = vpop.f32.mrb[0].mxu0
        %v1139 = vadd.f32 %v950, %v1138
        %v1140 = vpop.f32.mrb[0].mxu0
        %v1141 = vpop.f32.mrb[0].mxu0
        %v1142 = vadd.f32 %v950, %v1141
        %v1143 = vpop.f32.mrb[0].mxu0
        %1144 = vmatprep.mubr.bf16.mxu0 %v593
        %1145 = vmatmul.mubr.bf16.gmra.mrb[0].mxu0 %v501
        %v1146 = vpop.f32.mrb[0].mxu0
        %v1147 = vadd.f32 %v950, %v1146
        %v1148 = vpop.f32.mrb[0].mxu0
        %v1149 = vpop.f32.mrb[0].mxu0
        %v1150 = vadd.f32 %v950, %v1149
        %v1151 = vpop.f32.mrb[0].mxu0
        %1152 = vmatprep.mubr.bf16.mxu0 %v601
        %1153 = vmatmul.mubr.bf16.gmra.mrb[0].mxu0 %v502
        %v1154 = vpop.f32.mrb[0].mxu0
        %v1155 = vadd.f32 %v950, %v1154
        %v1156 = vpop.f32.mrb[0].mxu0
        %v1157 = vpop.f32.mrb[0].mxu0
        %v1158 = vadd.f32 %v950, %v1157
        %v1159 = vpop.f32.mrb[0].mxu0
        %1160 = vmatprep.mubr.bf16.mxu0 %v609
        %1161 = vmatmul.mubr.bf16.gmra.mrb[0].mxu0 %v503
        %v1162 = vpop.f32.mrb[0].mxu0
        %v1163 = vadd.f32 %v950, %v1162
        %v1164 = vpop.f32.mrb[0].mxu0
        %v1165 = vpop.f32.mrb[0].mxu0
        %v1166 = vadd.f32 %v950, %v1165
        %v1167 = vpop.f32.mrb[0].mxu0
        %1168 = vmatprep.mubr.bf16.mxu0 %v617
        %1169 = vmatmul.mubr.bf16.gmra.mrb[0].mxu0 %v504
        %v1170 = vpop.f32.mrb[0].mxu0
        %v1171 = vadd.f32 %v950, %v1170
        %v1172 = vpop.f32.mrb[0].mxu0
        %v1173 = vpop.f32.mrb[0].mxu0
        %v1174 = vadd.f32 %v950, %v1173
        %v1175 = vpop.f32.mrb[0].mxu0
        %1176 = vmatprep.mubr.bf16.mxu0 %v625
        %1177 = vmatmul.mubr.bf16.gmra.mrb[0].mxu0 %v505
        %v1178 = vpop.f32.mrb[0].mxu0
        %v1179 = vadd.f32 %v950, %v1178
        %v1180 = vpop.f32.mrb[0].mxu0
        %v1181 = vpop.f32.mrb[0].mxu0
        %v1182 = vadd.f32 %v950, %v1181
        %v1183 = vpop.f32.mrb[0].mxu0
        %1184 = vmatprep.mubr.bf16.mxu0 %v633
        %1185 = vmatmul.mubr.bf16.gmra.mrb[0].mxu0 %v506
        %v1186 = vpop.f32.mrb[0].mxu0
        %v1187 = vadd.f32 %v950, %v1186
        %v1188 = vpop.f32.mrb[0].mxu0
        %v1189 = vpop.f32.mrb[0].mxu0
        %v1190 = vadd.f32 %v950, %v1189
        %v1191 = vpop.f32.mrb[0].mxu0
        %1192 = vmatprep.mubr.bf16.mxu0 %v641
        %1193 = vmatmul.mubr.bf16.gmra.mrb[0].mxu0 %v507
        %v1194 = vpop.f32.mrb[0].mxu0
        %v1195 = vadd.f32 %v950, %v1194
        %v1196 = vpop.f32.mrb[0].mxu0
        %v1197 = vpop.f32.mrb[0].mxu0
        %v1198 = vadd.f32 %v950, %v1197
        %v1199 = vpop.f32.mrb[0].mxu0
        %1200 = vmatprep.mubr.bf16.mxu0 %v649
        %1201 = vmatmul.mubr.bf16.gmra.mrb[0].mxu0 %v508
        %v1202 = vpop.f32.mrb[0].mxu0
        %v1203 = vadd.f32 %v950, %v1202
        %v1204 = vpop.f32.mrb[0].mxu0
        %v1205 = vpop.f32.mrb[0].mxu0
        %v1206 = vadd.f32 %v950, %v1205
        %v1207 = vpop.f32.mrb[0].mxu0
        %1208 = vmatprep.mubr.bf16.mxu0 %v657
        %1209 = vmatmul.mubr.bf16.gmra.mrb[0].mxu0 %v509
        %v1210 = vpop.f32.mrb[0].mxu0
        %v1211 = vadd.f32 %v950, %v1210
        %v1212 = vpop.f32.mrb[0].mxu0
        %v1213 = vpop.f32.mrb[0].mxu0
        %v1214 = vadd.f32 %v950, %v1213
        %v1215 = vpop.f32.mrb[0].mxu0
        %1216 = vmatprep.mubr.bf16.mxu0 %v665
        %1217 = vmatmul.mubr.bf16.gmra.mrb[0].mxu0 %v510
        %v1218 = vpop.f32.mrb[0].mxu0
        %v1219 = vadd.f32 %v950, %v1218
        %v1220 = vpop.f32.mrb[0].mxu0
        %v1221 = vpop.f32.mrb[0].mxu0
        %v1222 = vadd.f32 %v950, %v1221
        %v1223 = vpop.f32.mrb[0].mxu0
        %1224 = vmatprep.mubr.bf16.mxu0 %v673
        %1225 = vmatmul.mubr.bf16.gmra.mrb[0].mxu0 %v511
        %v1226 = vpop.f32.mrb[0].mxu0
        %v1227 = vadd.f32 %v950, %v1226
        %v1228 = vpop.f32.mrb[0].mxu0
        %v1229 = vpop.f32.mrb[0].mxu0
        %v1230 = vadd.f32 %v950, %v1229
        %v1231 = vpop.f32.mrb[0].mxu0
        %1232 = vmatprep.mubr.bf16.mxu0 %v681
        %1233 = vmatmul.mubr.bf16.gmra.mrb[0].mxu0 %v512
        %v1234 = vpop.f32.mrb[0].mxu0
        %v1235 = vadd.f32 %v950, %v1234
        %v1236 = vpop.f32.mrb[0].mxu0
        %v1237 = vpop.f32.mrb[0].mxu0
        %v1238 = vadd.f32 %v950, %v1237
        %v1239 = vpop.f32.mrb[0].mxu0
        %1240 = vmatprep.mubr.bf16.mxu0 %v689
        %1241 = vmatmul.mubr.bf16.gmra.mrb[0].mxu0 %v513
        %v1242 = vpop.f32.mrb[0].mxu0
        %v1243 = vadd.f32 %v950, %v1242
        %v1244 = vpop.f32.mrb[0].mxu0
        %v1245 = vpop.f32.mrb[0].mxu0
        %v1246 = vadd.f32 %v950, %v1245
        %v1247 = vpop.f32.mrb[0].mxu0
        %1248 = vmatprep.mubr.bf16.mxu0 %v697
        %1249 = vmatmul.mubr.bf16.gmra.mrb[0].mxu0 %v514
        %v1250 = vpop.f32.mrb[0].mxu0
        %v1251 = vadd.f32 %v950, %v1250
        %v1252 = vpop.f32.mrb[0].mxu0
        %v1253 = vpop.f32.mrb[0].mxu0
        %v1254 = vadd.f32 %v950, %v1253
        %v1255 = vpop.f32.mrb[0].mxu0
        %1256 = vmatprep.mubr.bf16.mxu0 %v705
        %1257 = vmatmul.mubr.bf16.gmra.mrb[0].mxu0 %v515
        %v1258 = vpop.f32.mrb[0].mxu0
        %v1259 = vadd.f32 %v950, %v1258
        %v1260 = vpop.f32.mrb[0].mxu0
        %v1261 = vpop.f32.mrb[0].mxu0
        %v1262 = vadd.f32 %v950, %v1261
        %v1263 = vpop.f32.mrb[0].mxu0
        %1264 = vmatprep.mubr.bf16.mxu0 %v713
        %1265 = vmatmul.mubr.bf16.gmra.mrb[0].mxu0 %v516
        %v1266 = vpop.f32.mrb[0].mxu0
        %v1267 = vadd.f32 %v950, %v1266
        %v1268 = vpop.f32.mrb[0].mxu0
        %v1269 = vpop.f32.mrb[0].mxu0
        %v1270 = vadd.f32 %v950, %v1269
        %v1271 = vpop.f32.mrb[0].mxu0
        %1272 = vmatprep.mubr.bf16.mxu0 %v721
        %1273 = vmatmul.mubr.bf16.gmra.mrb[0].mxu0 %v517
        %v1274 = vpop.f32.mrb[0].mxu0
        %v1275 = vadd.f32 %v950, %v1274
        %v1276 = vpop.f32.mrb[0].mxu0
        %v1277 = vpop.f32.mrb[0].mxu0
        %v1278 = vadd.f32 %v950, %v1277
        %v1279 = vpop.f32.mrb[0].mxu0
        %1280 = vmatprep.mubr.bf16.mxu0 %v729
        %1281 = vmatmul.mubr.bf16.gmra.mrb[0].mxu0 %v518
        %v1282 = vpop.f32.mrb[0].mxu0
        %v1283 = vadd.f32 %v950, %v1282
        %v1284 = vpop.f32.mrb[0].mxu0
        %v1285 = vpop.f32.mrb[0].mxu0
        %v1286 = vadd.f32 %v950, %v1285
        %v1287 = vpop.f32.mrb[0].mxu0
        %1288 = vmatprep.mubr.bf16.mxu0 %v737
        %1289 = vmatmul.mubr.bf16.gmra.mrb[0].mxu0 %v519
        %v1290 = vpop.f32.mrb[0].mxu0
        %v1291 = vadd.f32 %v950, %v1290
        %v1292 = vpop.f32.mrb[0].mxu0
        %v1293 = vpop.f32.mrb[0].mxu0
        %v1294 = vadd.f32 %v950, %v1293
        %v1295 = vpop.f32.mrb[0].mxu0
        %1296 = vmatprep.mubr.bf16.mxu0 %v745
        %1297 = vmatmul.mubr.bf16.gmra.mrb[0].mxu0 %v520
        %v1298 = vpop.f32.mrb[0].mxu0
        %v1299 = vadd.f32 %v950, %v1298
        %v1300 = vpop.f32.mrb[0].mxu0
        %v1301 = vpop.f32.mrb[0].mxu0
        %v1302 = vadd.f32 %v950, %v1301
        %v1303 = vpop.f32.mrb[0].mxu0
        %1304 = vmatprep.mubr.bf16.mxu0 %v753
        %1305 = vmatmul.mubr.bf16.gmra.mrb[0].mxu0 %v521
        %v1306 = vpop.f32.mrb[0].mxu0
        %v1307 = vadd.f32 %v950, %v1306
        %v1308 = vpop.f32.mrb[0].mxu0
        %v1309 = vpop.f32.mrb[0].mxu0
        %v1310 = vadd.f32 %v950, %v1309
        %v1311 = vpop.f32.mrb[0].mxu0
        %1312 = vmatprep.mubr.bf16.mxu0 %v761
        %1313 = vmatmul.mubr.bf16.gmra.mrb[0].mxu0 %v522
        %v1314 = vpop.f32.mrb[0].mxu0
        %v1315 = vadd.f32 %v950, %v1314
        %v1316 = vpop.f32.mrb[0].mxu0
        %v1317 = vpop.f32.mrb[0].mxu0
        %v1318 = vadd.f32 %v950, %v1317
        %v1319 = vpop.f32.mrb[0].mxu0
        %1320 = vdwg.mxu0
        %1321 = vmatprep.subr.bf16.mxu0 0
        %1322 = vmatpush1.bf16.msra.mxu0 %v1064
        %1323 = vmatprep.subr.bf16.mxu0 0
        %1324 = vmatpush1.bf16.msra.mxu0 %v1065
        %1325 = vmatprep.subr.bf16.mxu0 0
        %1326 = vmatpush1.bf16.msra.mxu0 %v1066
        %1327 = vmatprep.subr.bf16.mxu0 0
        %1328 = vmatpush1.bf16.msra.mxu0 %v1067
        %1329 = vmatprep.subr.bf16.mxu0 0
        %1330 = vmatpush1.bf16.msra.mxu0 %v1068
        %1331 = vmatprep.subr.bf16.mxu0 0
        %1332 = vmatpush1.bf16.msra.mxu0 %v1069
        %1333 = vmatprep.subr.bf16.mxu0 0
        %1334 = vmatpush1.bf16.msra.mxu0 %v1070
        %1335 = vmatprep.subr.bf16.mxu0 0
        %1336 = vmatpush1.bf16.msra.mxu0 %v1071
        %1337 = vmatprep.subr.bf16.mxu0 0
        %1338 = vmatpush1.bf16.msra.mxu0 0
        %1339 = vmatprep.subr.bf16.mxu0 0
        %1340 = vmatpush1.bf16.msra.mxu0 0
        %1341 = vmatprep.subr.bf16.mxu0 0
        %1342 = vmatpush1.bf16.msra.mxu0 0
        %1343 = vmatprep.subr.bf16.mxu0 0
        %1344 = vmatpush1.bf16.msra.mxu0 0
        %1345 = vmatprep.subr.bf16.mxu0 0
        %1346 = vmatpush1.bf16.msra.mxu0 0
        %1347 = vmatprep.subr.bf16.mxu0 0
        %1348 = vmatpush1.bf16.msra.mxu0 0
        %1349 = vmatprep.subr.bf16.mxu0 0
        %1350 = vmatpush1.bf16.msra.mxu0 0
        %1351 = vmatprep.subr.bf16.mxu0 0
        %1352 = vmatpush1.bf16.msra.mxu0 0
        %1353 = vmatprep.mubr.bf16.mxu0 0
        %1354 = vmatmul.mubr.bf16.gmra.mrb[0].mxu0 %v817
        %v1355 = vpop.f32.mrb[0].mxu0
        %v1356 = vadd.f32 %v1131, %v1355
        %v1357 = vpop.f32.mrb[0].mxu0
        %v1358 = vpop.f32.mrb[0].mxu0
        %v1359 = vadd.f32 %v1134, %v1358
        %v1360 = vpop.f32.mrb[0].mxu0
        %1361 = vmatprep.mubr.bf16.mxu0 0
        %1362 = vmatmul.mubr.bf16.gmra.mrb[0].mxu0 %v819
        %v1363 = vpop.f32.mrb[0].mxu0
        %v1364 = vadd.f32 %v1139, %v1363
        %v1365 = vpop.f32.mrb[0].mxu0
        %v1366 = vpop.f32.mrb[0].mxu0
        %v1367 = vadd.f32 %v1142, %v1366
        %v1368 = vpop.f32.mrb[0].mxu0
        %1369 = vmatprep.mubr.bf16.mxu0 0
        %1370 = vmatmul.mubr.bf16.gmra.mrb[0].mxu0 %v821
        %v1371 = vpop.f32.mrb[0].mxu0
        %v1372 = vadd.f32 %v1147, %v1371
        %v1373 = vpop.f32.mrb[0].mxu0
        %v1374 = vpop.f32.mrb[0].mxu0
        %v1375 = vadd.f32 %v1150, %v1374
        %v1376 = vpop.f32.mrb[0].mxu0
        %1377 = vmatprep.mubr.bf16.mxu0 0
        %1378 = vmatmul.mubr.bf16.gmra.mrb[0].mxu0 %v823
        %v1379 = vpop.f32.mrb[0].mxu0
        %v1380 = vadd.f32 %v1155, %v1379
        %v1381 = vpop.f32.mrb[0].mxu0
        %v1382 = vpop.f32.mrb[0].mxu0
        %v1383 = vadd.f32 %v1158, %v1382
        %v1384 = vpop.f32.mrb[0].mxu0
        %1385 = vmatprep.mubr.bf16.mxu0 0
        %1386 = vmatmul.mubr.bf16.gmra.mrb[0].mxu0 %v825
        %v1387 = vpop.f32.mrb[0].mxu0
        %v1388 = vadd.f32 %v1163, %v1387
        %v1389 = vpop.f32.mrb[0].mxu0
        %v1390 = vpop.f32.mrb[0].mxu0
        %v1391 = vadd.f32 %v1166, %v1390
        %v1392 = vpop.f32.mrb[0].mxu0
        %1393 = vmatprep.mubr.bf16.mxu0 0
        %1394 = vmatmul.mubr.bf16.gmra.mrb[0].mxu0 %v827
        %v1395 = vpop.f32.mrb[0].mxu0
        %v1396 = vadd.f32 %v1171, %v1395
        %v1397 = vpop.f32.mrb[0].mxu0
        %v1398 = vpop.f32.mrb[0].mxu0
        %v1399 = vadd.f32 %v1174, %v1398
        %v1400 = vpop.f32.mrb[0].mxu0
        %1401 = vmatprep.mubr.bf16.mxu0 0
        %1402 = vmatmul.mubr.bf16.gmra.mrb[0].mxu0 %v829
        %v1403 = vpop.f32.mrb[0].mxu0
        %v1404 = vadd.f32 %v1179, %v1403
        %v1405 = vpop.f32.mrb[0].mxu0
        %v1406 = vpop.f32.mrb[0].mxu0
        %v1407 = vadd.f32 %v1182, %v1406
        %v1408 = vpop.f32.mrb[0].mxu0
        %1409 = vmatprep.mubr.bf16.mxu0 0
        %1410 = vmatmul.mubr.bf16.gmra.mrb[0].mxu0 %v831
        %v1411 = vpop.f32.mrb[0].mxu0
        %v1412 = vadd.f32 %v1187, %v1411
        %v1413 = vpop.f32.mrb[0].mxu0
        %v1414 = vpop.f32.mrb[0].mxu0
        %v1415 = vadd.f32 %v1190, %v1414
        %v1416 = vpop.f32.mrb[0].mxu0
        %1417 = vmatprep.mubr.bf16.mxu0 0
        %1418 = vmatmul.mubr.bf16.gmra.mrb[0].mxu0 %v833
        %v1419 = vpop.f32.mrb[0].mxu0
        %v1420 = vadd.f32 %v1195, %v1419
        %v1421 = vpop.f32.mrb[0].mxu0
        %v1422 = vpop.f32.mrb[0].mxu0
        %v1423 = vadd.f32 %v1198, %v1422
        %v1424 = vpop.f32.mrb[0].mxu0
        %1425 = vmatprep.mubr.bf16.mxu0 0
        %1426 = vmatmul.mubr.bf16.gmra.mrb[0].mxu0 %v835
        %v1427 = vpop.f32.mrb[0].mxu0
        %v1428 = vadd.f32 %v1203, %v1427
        %v1429 = vpop.f32.mrb[0].mxu0
        %v1430 = vpop.f32.mrb[0].mxu0
        %v1431 = vadd.f32 %v1206, %v1430
        %v1432 = vpop.f32.mrb[0].mxu0
        %1433 = vmatprep.mubr.bf16.mxu0 0
        %1434 = vmatmul.mubr.bf16.gmra.mrb[0].mxu0 %v837
        %v1435 = vpop.f32.mrb[0].mxu0
        %v1436 = vadd.f32 %v1211, %v1435
        %v1437 = vpop.f32.mrb[0].mxu0
        %v1438 = vpop.f32.mrb[0].mxu0
        %v1439 = vadd.f32 %v1214, %v1438
        %v1440 = vpop.f32.mrb[0].mxu0
        %1441 = vmatprep.mubr.bf16.mxu0 0
        %1442 = vmatmul.mubr.bf16.gmra.mrb[0].mxu0 %v839
        %v1443 = vpop.f32.mrb[0].mxu0
        %v1444 = vadd.f32 %v1219, %v1443
        %v1445 = vpop.f32.mrb[0].mxu0
        %v1446 = vpop.f32.mrb[0].mxu0
        %v1447 = vadd.f32 %v1222, %v1446
        %v1448 = vpop.f32.mrb[0].mxu0
        %1449 = vmatprep.mubr.bf16.mxu0 0
        %1450 = vmatmul.mubr.bf16.gmra.mrb[0].mxu0 %v841
        %v1451 = vpop.f32.mrb[0].mxu0
        %v1452 = vadd.f32 %v1227, %v1451
        %v1453 = vpop.f32.mrb[0].mxu0
        %v1454 = vpop.f32.mrb[0].mxu0
        %v1455 = vadd.f32 %v1230, %v1454
        %v1456 = vpop.f32.mrb[0].mxu0
        %1457 = vmatprep.mubr.bf16.mxu0 0
        %1458 = vmatmul.mubr.bf16.gmra.mrb[0].mxu0 %v843
        %v1459 = vpop.f32.mrb[0].mxu0
        %v1460 = vadd.f32 %v1235, %v1459
        %v1461 = vpop.f32.mrb[0].mxu0
        %v1462 = vpop.f32.mrb[0].mxu0
        %v1463 = vadd.f32 %v1238, %v1462
        %v1464 = vpop.f32.mrb[0].mxu0
        %1465 = vmatprep.mubr.bf16.mxu0 0
        %1466 = vmatmul.mubr.bf16.gmra.mrb[0].mxu0 %v845
        %v1467 = vpop.f32.mrb[0].mxu0
        %v1468 = vadd.f32 %v1243, %v1467
        %v1469 = vpop.f32.mrb[0].mxu0
        %v1470 = vpop.f32.mrb[0].mxu0
        %v1471 = vadd.f32 %v1246, %v1470
        %v1472 = vpop.f32.mrb[0].mxu0
        %1473 = vmatprep.mubr.bf16.mxu0 0
        %1474 = vmatmul.mubr.bf16.gmra.mrb[0].mxu0 %v847
        %v1475 = vpop.f32.mrb[0].mxu0
        %v1476 = vadd.f32 %v1251, %v1475
        %v1477 = vpop.f32.mrb[0].mxu0
        %v1478 = vpop.f32.mrb[0].mxu0
        %v1479 = vadd.f32 %v1254, %v1478
        %v1480 = vpop.f32.mrb[0].mxu0
        %1481 = vmatprep.mubr.bf16.mxu0 0
        %1482 = vmatmul.mubr.bf16.gmra.mrb[0].mxu0 %v849
        %v1483 = vpop.f32.mrb[0].mxu0
        %v1484 = vadd.f32 %v1259, %v1483
        %v1485 = vpop.f32.mrb[0].mxu0
        %v1486 = vpop.f32.mrb[0].mxu0
        %v1487 = vadd.f32 %v1262, %v1486
        %v1488 = vpop.f32.mrb[0].mxu0
        %1489 = vmatprep.mubr.bf16.mxu0 0
        %1490 = vmatmul.mubr.bf16.gmra.mrb[0].mxu0 %v851
        %v1491 = vpop.f32.mrb[0].mxu0
        %v1492 = vadd.f32 %v1267, %v1491
        %v1493 = vpop.f32.mrb[0].mxu0
        %v1494 = vpop.f32.mrb[0].mxu0
        %v1495 = vadd.f32 %v1270, %v1494
        %v1496 = vpop.f32.mrb[0].mxu0
        %1497 = vmatprep.mubr.bf16.mxu0 0
        %1498 = vmatmul.mubr.bf16.gmra.mrb[0].mxu0 %v853
        %v1499 = vpop.f32.mrb[0].mxu0
        %v1500 = vadd.f32 %v1275, %v1499
        %v1501 = vpop.f32.mrb[0].mxu0
        %v1502 = vpop.f32.mrb[0].mxu0
        %v1503 = vadd.f32 %v1278, %v1502
        %v1504 = vpop.f32.mrb[0].mxu0
        %1505 = vmatprep.mubr.bf16.mxu0 0
        %1506 = vmatmul.mubr.bf16.gmra.mrb[0].mxu0 %v855
        %v1507 = vpop.f32.mrb[0].mxu0
        %v1508 = vadd.f32 %v1283, %v1507
        %v1509 = vpop.f32.mrb[0].mxu0
        %v1510 = vpop.f32.mrb[0].mxu0
        %v1511 = vadd.f32 %v1286, %v1510
        %v1512 = vpop.f32.mrb[0].mxu0
        %1513 = vmatprep.mubr.bf16.mxu0 0
        %1514 = vmatmul.mubr.bf16.gmra.mrb[0].mxu0 %v857
        %v1515 = vpop.f32.mrb[0].mxu0
        %v1516 = vadd.f32 %v1291, %v1515
        %v1517 = vpop.f32.mrb[0].mxu0
        %v1518 = vpop.f32.mrb[0].mxu0
        %v1519 = vadd.f32 %v1294, %v1518
        %v1520 = vpop.f32.mrb[0].mxu0
        %1521 = vmatprep.mubr.bf16.mxu0 0
        %1522 = vmatmul.mubr.bf16.gmra.mrb[0].mxu0 %v859
        %v1523 = vpop.f32.mrb[0].mxu0
        %v1524 = vadd.f32 %v1299, %v1523
        %v1525 = vpop.f32.mrb[0].mxu0
        %v1526 = vpop.f32.mrb[0].mxu0
        %v1527 = vadd.f32 %v1302, %v1526
        %v1528 = vpop.f32.mrb[0].mxu0
        %1529 = vmatprep.mubr.bf16.mxu0 0
        %1530 = vmatmul.mubr.bf16.gmra.mrb[0].mxu0 %v861
        %v1531 = vpop.f32.mrb[0].mxu0
        %v1532 = vadd.f32 %v1307, %v1531
        %v1533 = vpop.f32.mrb[0].mxu0
        %v1534 = vpop.f32.mrb[0].mxu0
        %v1535 = vadd.f32 %v1310, %v1534
        %v1536 = vpop.f32.mrb[0].mxu0
        %1537 = vmatprep.mubr.bf16.mxu0 0
        %1538 = vmatmul.mubr.bf16.gmra.mrb[0].mxu0 %v863
        %v1539 = vpop.f32.mrb[0].mxu0
        %v1540 = vadd.f32 %v1315, %v1539
        %v1541 = vpop.f32.mrb[0].mxu0
        %v1542 = vpop.f32.mrb[0].mxu0
        %v1543 = vadd.f32 %v1318, %v1542
        %v1544 = vpop.f32.mrb[0].mxu0
        %1545 = vdwg.mxu0
        %s1546 = scalar_lea.vmem [#allocation7], 192
        %v1547 = vld [vmem:[%s1546] sm:$0xf]
        %v1548 = vld [vmem:[%s1546 + $0x4] sm:$0xf]
        %v1549 = vld [vmem:[%s1546 + $0x8] sm:$0xf]
        %v1550 = vld [vmem:[%s1546 + $0xc] sm:$0xf]
        %v1551 = vld [vmem:[%s1546 + $0x10] sm:$0xf]
        %v1552 = vld [vmem:[%s1546 + $0x14] sm:$0xf]
        %v1553 = vld [vmem:[%s1546 + $0x18] sm:$0xf]
        %v1554 = vld [vmem:[%s1546 + $0x1c] sm:$0xf]
        %v1555 = vld [vmem:[%s1546 + $0x20] sm:$0xf]
        %v1556 = vld [vmem:[%s1546 + $0x24] sm:$0xf]
        %v1557 = vld [vmem:[%s1546 + $0x28] sm:$0xf]
        %v1558 = vld [vmem:[%s1546 + $0x2c] sm:$0xf]
        %v1559 = vld [vmem:[%s1546 + $0x30] sm:$0xf]
        %v1560 = vld [vmem:[%s1546 + $0x34] sm:$0xf]
        %v1561 = vld [vmem:[%s1546 + $0x38] sm:$0xf]
        %v1562 = vld [vmem:[%s1546 + $0x3c] sm:$0xf]
        %v1563 = vld [vmem:[%s1546 + $0x40] sm:$0xf]
        %v1564 = vld [vmem:[%s1546 + $0x44] sm:$0xf]
        %v1565 = vld [vmem:[%s1546 + $0x48] sm:$0xf]
        %v1566 = vld [vmem:[%s1546 + $0x4c] sm:$0xf]
        %v1567 = vld [vmem:[%s1546 + $0x50] sm:$0xf]
        %v1568 = vld [vmem:[%s1546 + $0x54] sm:$0xf]
        %v1569 = vld [vmem:[%s1546 + $0x58] sm:$0xf]
        %v1570 = vld [vmem:[%s1546 + $0x5c] sm:$0xf]
        %v1571 = vld [vmem:[%s1546 + $0x60] sm:$0xf]
        %v1572 = vld [vmem:[%s1546 + $0x64] sm:$0xf]
        %v1573 = vld [vmem:[%s1546 + $0x68] sm:$0xf]
        %v1574 = vld [vmem:[%s1546 + $0x6c] sm:$0xf]
        %v1575 = vld [vmem:[%s1546 + $0x70] sm:$0xf]
        %v1576 = vld [vmem:[%s1546 + $0x74] sm:$0xf]
        %v1577 = vld [vmem:[%s1546 + $0x78] sm:$0xf]
        %v1578 = vld [vmem:[%s1546 + $0x7c] sm:$0xf]
        %v1579 = vld [vmem:[%s1546 + $0x80] sm:$0xf]
        %v1580 = vld [vmem:[%s1546 + $0x84] sm:$0xf]
        %v1581 = vld [vmem:[%s1546 + $0x88] sm:$0xf]
        %v1582 = vld [vmem:[%s1546 + $0x8c] sm:$0xf]
        %v1583 = vld [vmem:[%s1546 + $0x90] sm:$0xf]
        %v1584 = vld [vmem:[%s1546 + $0x94] sm:$0xf]
        %v1585 = vld [vmem:[%s1546 + $0x98] sm:$0xf]
        %v1586 = vld [vmem:[%s1546 + $0x9c] sm:$0xf]
        %v1587 = vld [vmem:[%s1546 + $0xa0] sm:$0xf]
        %v1588 = vld [vmem:[%s1546 + $0xa4] sm:$0xf]
        %v1589 = vld [vmem:[%s1546 + $0xa8] sm:$0xf]
        %v1590 = vld [vmem:[%s1546 + $0xac] sm:$0xf]
        %v1591 = vld [vmem:[%s1546 + $0xb0] sm:$0xf]
        %v1592 = vld [vmem:[%s1546 + $0xb4] sm:$0xf]
        %v1593 = vld [vmem:[%s1546 + $0xb8] sm:$0xf]
        %v1594 = vld [vmem:[%s1546 + $0xbc] sm:$0xf]
        %vm1595 = vcmask 1043456
        %v1596 = vrot.slane %v500, 4
        %v1597 = vrot.slane %v501, 4
        %v1598 = vsel %vm1595, %v1596, %v1597
        %v1599 = vrot.slane %v585, 4
        %v1600 = vrot.slane %v593, 4
        %v1601 = vsel %vm1595, %v1599, %v1600
        %v1602 = vrot.slane %v819, 4
        %v1603 = vrot.slane %v821, 4
        %v1604 = vsel %vm1595, %v1602, %v1603
        %v1605 = vrot.slane %v502, 4
        %v1606 = vsel %vm1595, %v1597, %v1605
        %v1607 = vrot.slane %v601, 4
        %v1608 = vsel %vm1595, %v1600, %v1607
        %v1609 = vrot.slane %v823, 4
        %v1610 = vsel %vm1595, %v1603, %v1609
        %v1611 = vrot.slane %v503, 4
        %v1612 = vsel %vm1595, %v1605, %v1611
        %v1613 = vrot.slane %v609, 4
        %v1614 = vsel %vm1595, %v1607, %v1613
        %v1615 = vrot.slane %v825, 4
        %v1616 = vsel %vm1595, %v1609, %v1615
        %v1617 = vrot.slane %v504, 4
        %v1618 = vsel %vm1595, %v1611, %v1617
        %v1619 = vrot.slane %v617, 4
        %v1620 = vsel %vm1595, %v1613, %v1619
        %v1621 = vrot.slane %v827, 4
        %v1622 = vsel %vm1595, %v1615, %v1621
        %v1623 = vrot.slane %v505, 4
        %v1624 = vsel %vm1595, %v1617, %v1623
        %v1625 = vrot.slane %v625, 4
        %v1626 = vsel %vm1595, %v1619, %v1625
        %v1627 = vrot.slane %v829, 4
        %v1628 = vsel %vm1595, %v1621, %v1627
        %v1629 = vrot.slane %v506, 4
        %v1630 = vsel %vm1595, %v1623, %v1629
        %v1631 = vrot.slane %v633, 4
        %v1632 = vsel %vm1595, %v1625, %v1631
        %v1633 = vrot.slane %v831, 4
        %v1634 = vsel %vm1595, %v1627, %v1633
        %v1635 = vrot.slane %v507, 4
        %v1636 = vsel %vm1595, %v1629, %v1635
        %v1637 = vrot.slane %v641, 4
        %v1638 = vsel %vm1595, %v1631, %v1637
        %v1639 = vrot.slane %v833, 4
        %v1640 = vsel %vm1595, %v1633, %v1639
        %v1641 = vrot.slane %v508, 4
        %v1642 = vsel %vm1595, %v1635, %v1641
        %v1643 = vrot.slane %v649, 4
        %v1644 = vsel %vm1595, %v1637, %v1643
        %v1645 = vrot.slane %v835, 4
        %v1646 = vsel %vm1595, %v1639, %v1645
        %v1647 = vrot.slane %v509, 4
        %v1648 = vsel %vm1595, %v1641, %v1647
        %v1649 = vrot.slane %v657, 4
        %v1650 = vsel %vm1595, %v1643, %v1649
        %v1651 = vrot.slane %v837, 4
        %v1652 = vsel %vm1595, %v1645, %v1651
        %v1653 = vrot.slane %v510, 4
        %v1654 = vsel %vm1595, %v1647, %v1653
        %v1655 = vrot.slane %v665, 4
        %v1656 = vsel %vm1595, %v1649, %v1655
        %v1657 = vrot.slane %v839, 4
        %v1658 = vsel %vm1595, %v1651, %v1657
        %v1659 = vrot.slane %v511, 4
        %v1660 = vsel %vm1595, %v1653, %v1659
        %v1661 = vrot.slane %v673, 4
        %v1662 = vsel %vm1595, %v1655, %v1661
        %v1663 = vrot.slane %v841, 4
        %v1664 = vsel %vm1595, %v1657, %v1663
        %v1665 = vrot.slane %v512, 4
        %v1666 = vsel %vm1595, %v1659, %v1665
        %v1667 = vrot.slane %v681, 4
        %v1668 = vsel %vm1595, %v1661, %v1667
        %v1669 = vrot.slane %v843, 4
        %v1670 = vsel %vm1595, %v1663, %v1669
        %v1671 = vrot.slane %v513, 4
        %v1672 = vsel %vm1595, %v1665, %v1671
        %v1673 = vrot.slane %v689, 4
        %v1674 = vsel %vm1595, %v1667, %v1673
        %v1675 = vrot.slane %v845, 4
        %v1676 = vsel %vm1595, %v1669, %v1675
        %v1677 = vrot.slane %v514, 4
        %v1678 = vsel %vm1595, %v1671, %v1677
        %v1679 = vrot.slane %v697, 4
        %v1680 = vsel %vm1595, %v1673, %v1679
        %v1681 = vrot.slane %v847, 4
        %v1682 = vsel %vm1595, %v1675, %v1681
        %v1683 = vrot.slane %v515, 4
        %v1684 = vsel %vm1595, %v1677, %v1683
        %v1685 = vrot.slane %v705, 4
        %v1686 = vsel %vm1595, %v1679, %v1685
        %v1687 = vrot.slane %v849, 4
        %v1688 = vsel %vm1595, %v1681, %v1687
        %v1689 = vrot.slane %v516, 4
        %v1690 = vsel %vm1595, %v1683, %v1689
        %v1691 = vrot.slane %v713, 4
        %v1692 = vsel %vm1595, %v1685, %v1691
        %v1693 = vrot.slane %v851, 4
        %v1694 = vsel %vm1595, %v1687, %v1693
        %v1695 = vrot.slane %v517, 4
        %v1696 = vsel %vm1595, %v1689, %v1695
        %v1697 = vrot.slane %v721, 4
        %v1698 = vsel %vm1595, %v1691, %v1697
        %v1699 = vrot.slane %v853, 4
        %v1700 = vsel %vm1595, %v1693, %v1699
        %v1701 = vrot.slane %v518, 4
        %v1702 = vsel %vm1595, %v1695, %v1701
        %v1703 = vrot.slane %v729, 4
        %v1704 = vsel %vm1595, %v1697, %v1703
        %v1705 = vrot.slane %v855, 4
        %v1706 = vsel %vm1595, %v1699, %v1705
        %v1707 = vrot.slane %v519, 4
        %v1708 = vsel %vm1595, %v1701, %v1707
        %v1709 = vrot.slane %v737, 4
        %v1710 = vsel %vm1595, %v1703, %v1709
        %v1711 = vrot.slane %v857, 4
        %v1712 = vsel %vm1595, %v1705, %v1711
        %v1713 = vrot.slane %v520, 4
        %v1714 = vsel %vm1595, %v1707, %v1713
        %v1715 = vrot.slane %v745, 4
        %v1716 = vsel %vm1595, %v1709, %v1715
        %v1717 = vrot.slane %v859, 4
        %v1718 = vsel %vm1595, %v1711, %v1717
        %v1719 = vrot.slane %v521, 4
        %v1720 = vsel %vm1595, %v1713, %v1719
        %v1721 = vrot.slane %v753, 4
        %v1722 = vsel %vm1595, %v1715, %v1721
        %v1723 = vrot.slane %v861, 4
        %v1724 = vsel %vm1595, %v1717, %v1723
        %v1725 = vrot.slane %v522, 4
        %v1726 = vsel %vm1595, %v1719, %v1725
        %v1727 = vrot.slane %v761, 4
        %v1728 = vsel %vm1595, %v1721, %v1727
        %v1729 = vrot.slane %v863, 4
        %v1730 = vsel %vm1595, %v1723, %v1729
        %v1731 = vrot.slane %v559, 4
        %v1732 = vsel %vm1595, %v1725, %v1731
        %v1733 = vrot.slane %v769, 4
        %v1734 = vsel %vm1595, %v1727, %v1733
        %v1735 = vrot.slane %v865, 4
        %v1736 = vsel %vm1595, %v1729, %v1735
        %v1737 = vrot.slane %v560, 4
        %v1738 = vsel %vm1595, %v1731, %v1737
        %v1739 = vrot.slane %v777, 4
        %v1740 = vsel %vm1595, %v1733, %v1739
        %v1741 = vrot.slane %v867, 4
        %v1742 = vsel %vm1595, %v1735, %v1741
        %v1863 = vunpack.c.l.b16 %v1547
        %v1864 = vunpack.c.l.b16 %v1548
        %v1865 = vunpack.c.l.b16 %v1549
        %v1866 = vunpack.c.l.b16 %v1550
        %v1867 = vunpack.c.l.b16 %v1551
        %v1868 = vunpack.c.l.b16 %v1552
        %v1869 = vunpack.c.l.b16 %v1553
        %v1870 = vunpack.c.l.b16 %v1554
        %v1871 = vunpack.c.l.b16 %v1555
        %v1872 = vunpack.c.l.b16 %v1556
        %v1873 = vunpack.c.l.b16 %v1557
        %v1874 = vunpack.c.l.b16 %v1558
        %v1875 = vunpack.c.l.b16 %v1559
        %v1876 = vunpack.c.l.b16 %v1560
        %v1877 = vunpack.c.l.b16 %v1561
        %v1878 = vunpack.c.l.b16 %v1562
        %v1879 = vunpack.c.l.b16 %v1563
        %v1880 = vunpack.c.l.b16 %v1564
        %v1881 = vunpack.c.l.b16 %v1565
        %v1882 = vunpack.c.l.b16 %v1566
        %v1883 = vunpack.c.l.b16 %v1567
        %v1884 = vunpack.c.l.b16 %v1568
        %v1885 = vunpack.c.l.b16 %v1569
        %v1886 = vunpack.c.l.b16 %v1570
        %v1887 = vunpack.c.l.b16 %v1571
        %v1888 = vunpack.c.l.b16 %v1572
        %v1889 = vunpack.c.l.b16 %v1573
        %v1890 = vunpack.c.l.b16 %v1574
        %v1891 = vunpack.c.l.b16 %v1575
        %v1892 = vunpack.c.l.b16 %v1576
        %v1893 = vunpack.c.l.b16 %v1577
        %v1894 = vunpack.c.l.b16 %v1578
        %v1895 = vunpack.c.l.b16 %v1579
        %v1896 = vunpack.c.l.b16 %v1580
        %v1897 = vunpack.c.l.b16 %v1581
        %v1898 = vunpack.c.l.b16 %v1582
        %v1899 = vunpack.c.l.b16 %v1583
        %v1900 = vunpack.c.l.b16 %v1584
        %v1901 = vunpack.c.l.b16 %v1585
        %v1902 = vunpack.c.l.b16 %v1586
        %v1903 = vunpack.c.l.b16 %v1587
        %v1904 = vunpack.c.l.b16 %v1588
        %v1905 = vunpack.c.l.b16 %v1589
        %v1906 = vunpack.c.l.b16 %v1590
        %v1907 = vunpack.c.l.b16 %v1591
        %v1908 = vunpack.c.l.b16 %v1592
        %v1909 = vunpack.c.l.b16 %v1593
        %v1910 = vunpack.c.l.b16 %v1594
        %v1911 = vpack.c.b16 %v1864, %v1863
        %v1912 = vpack.c.b16 %v1866, %v1865
        %v1913 = vpack.c.b16 %v1868, %v1867
        %v1914 = vpack.c.b16 %v1870, %v1869
        %v1915 = vpack.c.b16 %v1872, %v1871
        %v1916 = vpack.c.b16 %v1874, %v1873
        %v1917 = vpack.c.b16 %v1876, %v1875
        %v1918 = vpack.c.b16 %v1878, %v1877
        %v1919 = vpack.c.b16 %v1880, %v1879
        %v1920 = vpack.c.b16 %v1882, %v1881
        %v1921 = vpack.c.b16 %v1884, %v1883
        %v1922 = vpack.c.b16 %v1886, %v1885
        %v1923 = vpack.c.b16 %v1888, %v1887
        %v1924 = vpack.c.b16 %v1890, %v1889
        %v1925 = vpack.c.b16 %v1892, %v1891
        %v1926 = vpack.c.b16 %v1894, %v1893
        %v1927 = vpack.c.b16 %v1896, %v1895
        %v1928 = vpack.c.b16 %v1898, %v1897
        %v1929 = vpack.c.b16 %v1900, %v1899
        %v1930 = vpack.c.b16 %v1902, %v1901
        %v1931 = vpack.c.b16 %v1904, %v1903
        %v1932 = vpack.c.b16 %v1906, %v1905
        %v1933 = vpack.c.b16 %v1908, %v1907
        %v1934 = vpack.c.b16 %v1910, %v1909
        %1959 = vmatprep.subr.bf16.mxu0 0
        %1960 = vmatpush1.bf16.msra.mxu0 %v1911
        %1961 = vmatprep.subr.bf16.mxu0 0
        %1962 = vmatpush1.bf16.msra.mxu0 %v1912
        %1963 = vmatprep.subr.bf16.mxu0 0
        %1964 = vmatpush1.bf16.msra.mxu0 %v1913
        %1965 = vmatprep.subr.bf16.mxu0 0
        %1966 = vmatpush1.bf16.msra.mxu0 %v1914
        %1967 = vmatprep.subr.bf16.mxu0 0
        %1968 = vmatpush1.bf16.msra.mxu0 %v1915
        %1969 = vmatprep.subr.bf16.mxu0 0
        %1970 = vmatpush1.bf16.msra.mxu0 %v1916
        %1971 = vmatprep.subr.bf16.mxu0 0
        %1972 = vmatpush1.bf16.msra.mxu0 %v1917
        %1973 = vmatprep.subr.bf16.mxu0 0
        %1974 = vmatpush1.bf16.msra.mxu0 %v1918
        %1975 = vmatprep.subr.bf16.mxu0 0
        %1976 = vmatpush1.bf16.msra.mxu0 %v1919
        %1977 = vmatprep.subr.bf16.mxu0 0
        %1978 = vmatpush1.bf16.msra.mxu0 %v1920
        %1979 = vmatprep.subr.bf16.mxu0 0
        %1980 = vmatpush1.bf16.msra.mxu0 %v1921
        %1981 = vmatprep.subr.bf16.mxu0 0
        %1982 = vmatpush1.bf16.msra.mxu0 %v1922
        %1983 = vmatprep.subr.bf16.mxu0 0
        %1984 = vmatpush1.bf16.msra.mxu0 %v1923
        %1985 = vmatprep.subr.bf16.mxu0 0
        %1986 = vmatpush1.bf16.msra.mxu0 %v1924
        %1987 = vmatprep.subr.bf16.mxu0 0
        %1988 = vmatpush1.bf16.msra.mxu0 %v1925
        %1989 = vmatprep.subr.bf16.mxu0 0
        %1990 = vmatpush1.bf16.msra.mxu0 %v1926
        %1991 = vmatprep.mubr.bf16.mxu0 %v1601
        %1992 = vmatmul.mubr.bf16.gmra.mrb[0].mxu0 %v1598
        %v1993 = vpop.f32.mrb[0].mxu0
        %v1994 = vadd.f32 0.0, %v1993
        %v1995 = vpop.f32.mrb[0].mxu0
        %v1996 = vpop.f32.mrb[0].mxu0
        %v1997 = vadd.f32 0.0, %v1996
        %v1998 = vpop.f32.mrb[0].mxu0
        %1999 = vmatprep.mubr.bf16.mxu0 %v1608
        %2000 = vmatmul.mubr.bf16.gmra.mrb[0].mxu0 %v1606
        %v2001 = vpop.f32.mrb[0].mxu0
        %v2002 = vadd.f32 0.0, %v2001
        %v2003 = vpop.f32.mrb[0].mxu0
        %v2004 = vpop.f32.mrb[0].mxu0
        %v2005 = vadd.f32 0.0, %v2004
        %v2006 = vpop.f32.mrb[0].mxu0
        %2007 = vmatprep.mubr.bf16.mxu0 %v1614
        %2008 = vmatmul.mubr.bf16.gmra.mrb[0].mxu0 %v1612
        %v2009 = vpop.f32.mrb[0].mxu0
        %v2010 = vadd.f32 0.0, %v2009
        %v2011 = vpop.f32.mrb[0].mxu0
        %v2012 = vpop.f32.mrb[0].mxu0
        %v2013 = vadd.f32 0.0, %v2012
        %v2014 = vpop.f32.mrb[0].mxu0
        %2015 = vmatprep.mubr.bf16.mxu0 %v1620
        %2016 = vmatmul.mubr.bf16.gmra.mrb[0].mxu0 %v1618
        %v2017 = vpop.f32.mrb[0].mxu0
        %v2018 = vadd.f32 0.0, %v2017
        %v2019 = vpop.f32.mrb[0].mxu0
        %v2020 = vpop.f32.mrb[0].mxu0
        %v2021 = vadd.f32 0.0, %v2020
        %v2022 = vpop.f32.mrb[0].mxu0
        %2023 = vmatprep.mubr.bf16.mxu0 %v1626
        %2024 = vmatmul.mubr.bf16.gmra.mrb[0].mxu0 %v1624
        %v2025 = vpop.f32.mrb[0].mxu0
        %v2026 = vadd.f32 0.0, %v2025
        %v2027 = vpop.f32.mrb[0].mxu0
        %v2028 = vpop.f32.mrb[0].mxu0
        %v2029 = vadd.f32 0.0, %v2028
        %v2030 = vpop.f32.mrb[0].mxu0
        %2031 = vmatprep.mubr.bf16.mxu0 %v1632
        %2032 = vmatmul.mubr.bf16.gmra.mrb[0].mxu0 %v1630
        %v2033 = vpop.f32.mrb[0].mxu0
        %v2034 = vadd.f32 0.0, %v2033
        %v2035 = vpop.f32.mrb[0].mxu0
        %v2036 = vpop.f32.mrb[0].mxu0
        %v2037 = vadd.f32 0.0, %v2036
        %v2038 = vpop.f32.mrb[0].mxu0
        %2039 = vmatprep.mubr.bf16.mxu0 %v1638
        %2040 = vmatmul.mubr.bf16.gmra.mrb[0].mxu0 %v1636
        %v2041 = vpop.f32.mrb[0].mxu0
        %v2042 = vadd.f32 0.0, %v2041
        %v2043 = vpop.f32.mrb[0].mxu0
        %v2044 = vpop.f32.mrb[0].mxu0
        %v2045 = vadd.f32 0.0, %v2044
        %v2046 = vpop.f32.mrb[0].mxu0
        %2047 = vmatprep.mubr.bf16.mxu0 %v1644
        %2048 = vmatmul.mubr.bf16.gmra.mrb[0].mxu0 %v1642
        %v2049 = vpop.f32.mrb[0].mxu0
        %v2050 = vadd.f32 0.0, %v2049
        %v2051 = vpop.f32.mrb[0].mxu0
        %v2052 = vpop.f32.mrb[0].mxu0
        %v2053 = vadd.f32 0.0, %v2052
        %v2054 = vpop.f32.mrb[0].mxu0
        %2055 = vmatprep.mubr.bf16.mxu0 %v1650
        %2056 = vmatmul.mubr.bf16.gmra.mrb[0].mxu0 %v1648
        %v2057 = vpop.f32.mrb[0].mxu0
        %v2058 = vadd.f32 0.0, %v2057
        %v2059 = vpop.f32.mrb[0].mxu0
        %v2060 = vpop.f32.mrb[0].mxu0
        %v2061 = vadd.f32 0.0, %v2060
        %v2062 = vpop.f32.mrb[0].mxu0
        %2063 = vmatprep.mubr.bf16.mxu0 %v1656
        %2064 = vmatmul.mubr.bf16.gmra.mrb[0].mxu0 %v1654
        %v2065 = vpop.f32.mrb[0].mxu0
        %v2066 = vadd.f32 0.0, %v2065
        %v2067 = vpop.f32.mrb[0].mxu0
        %v2068 = vpop.f32.mrb[0].mxu0
        %v2069 = vadd.f32 0.0, %v2068
        %v2070 = vpop.f32.mrb[0].mxu0
        %2071 = vmatprep.mubr.bf16.mxu0 %v1662
        %2072 = vmatmul.mubr.bf16.gmra.mrb[0].mxu0 %v1660
        %v2073 = vpop.f32.mrb[0].mxu0
        %v2074 = vadd.f32 0.0, %v2073
        %v2075 = vpop.f32.mrb[0].mxu0
        %v2076 = vpop.f32.mrb[0].mxu0
        %v2077 = vadd.f32 0.0, %v2076
        %v2078 = vpop.f32.mrb[0].mxu0
        %2079 = vmatprep.mubr.bf16.mxu0 %v1668
        %2080 = vmatmul.mubr.bf16.gmra.mrb[0].mxu0 %v1666
        %v2081 = vpop.f32.mrb[0].mxu0
        %v2082 = vadd.f32 0.0, %v2081
        %v2083 = vpop.f32.mrb[0].mxu0
        %v2084 = vpop.f32.mrb[0].mxu0
        %v2085 = vadd.f32 0.0, %v2084
        %v2086 = vpop.f32.mrb[0].mxu0
        %2087 = vmatprep.mubr.bf16.mxu0 %v1674
        %2088 = vmatmul.mubr.bf16.gmra.mrb[0].mxu0 %v1672
        %v2089 = vpop.f32.mrb[0].mxu0
        %v2090 = vadd.f32 0.0, %v2089
        %v2091 = vpop.f32.mrb[0].mxu0
        %v2092 = vpop.f32.mrb[0].mxu0
        %v2093 = vadd.f32 0.0, %v2092
        %v2094 = vpop.f32.mrb[0].mxu0
        %2095 = vmatprep.mubr.bf16.mxu0 %v1680
        %2096 = vmatmul.mubr.bf16.gmra.mrb[0].mxu0 %v1678
        %v2097 = vpop.f32.mrb[0].mxu0
        %v2098 = vadd.f32 0.0, %v2097
        %v2099 = vpop.f32.mrb[0].mxu0
        %v2100 = vpop.f32.mrb[0].mxu0
        %v2101 = vadd.f32 0.0, %v2100
        %v2102 = vpop.f32.mrb[0].mxu0
        %2103 = vmatprep.mubr.bf16.mxu0 %v1686
        %2104 = vmatmul.mubr.bf16.gmra.mrb[0].mxu0 %v1684
        %v2105 = vpop.f32.mrb[0].mxu0
        %v2106 = vadd.f32 0.0, %v2105
        %v2107 = vpop.f32.mrb[0].mxu0
        %v2108 = vpop.f32.mrb[0].mxu0
        %v2109 = vadd.f32 0.0, %v2108
        %v2110 = vpop.f32.mrb[0].mxu0
        %2111 = vmatprep.mubr.bf16.mxu0 %v1692
        %2112 = vmatmul.mubr.bf16.gmra.mrb[0].mxu0 %v1690
        %v2113 = vpop.f32.mrb[0].mxu0
        %v2114 = vadd.f32 0.0, %v2113
        %v2115 = vpop.f32.mrb[0].mxu0
        %v2116 = vpop.f32.mrb[0].mxu0
        %v2117 = vadd.f32 0.0, %v2116
        %v2118 = vpop.f32.mrb[0].mxu0
        %2119 = vmatprep.mubr.bf16.mxu0 %v1698
        %2120 = vmatmul.mubr.bf16.gmra.mrb[0].mxu0 %v1696
        %v2121 = vpop.f32.mrb[0].mxu0
        %v2122 = vadd.f32 0.0, %v2121
        %v2123 = vpop.f32.mrb[0].mxu0
        %v2124 = vpop.f32.mrb[0].mxu0
        %v2125 = vadd.f32 0.0, %v2124
        %v2126 = vpop.f32.mrb[0].mxu0
        %2127 = vmatprep.mubr.bf16.mxu0 %v1704
        %2128 = vmatmul.mubr.bf16.gmra.mrb[0].mxu0 %v1702
        %v2129 = vpop.f32.mrb[0].mxu0
        %v2130 = vadd.f32 0.0, %v2129
        %v2131 = vpop.f32.mrb[0].mxu0
        %v2132 = vpop.f32.mrb[0].mxu0
        %v2133 = vadd.f32 0.0, %v2132
        %v2134 = vpop.f32.mrb[0].mxu0
        %2135 = vmatprep.mubr.bf16.mxu0 %v1710
        %2136 = vmatmul.mubr.bf16.gmra.mrb[0].mxu0 %v1708
        %v2137 = vpop.f32.mrb[0].mxu0
        %v2138 = vadd.f32 0.0, %v2137
        %v2139 = vpop.f32.mrb[0].mxu0
        %v2140 = vpop.f32.mrb[0].mxu0
        %v2141 = vadd.f32 0.0, %v2140
        %v2142 = vpop.f32.mrb[0].mxu0
        %2143 = vmatprep.mubr.bf16.mxu0 %v1716
        %2144 = vmatmul.mubr.bf16.gmra.mrb[0].mxu0 %v1714
        %v2145 = vpop.f32.mrb[0].mxu0
        %v2146 = vadd.f32 0.0, %v2145
        %v2147 = vpop.f32.mrb[0].mxu0
        %v2148 = vpop.f32.mrb[0].mxu0
        %v2149 = vadd.f32 0.0, %v2148
        %v2150 = vpop.f32.mrb[0].mxu0
        %2151 = vmatprep.mubr.bf16.mxu0 %v1722
        %2152 = vmatmul.mubr.bf16.gmra.mrb[0].mxu0 %v1720
        %v2153 = vpop.f32.mrb[0].mxu0
        %v2154 = vadd.f32 0.0, %v2153
        %v2155 = vpop.f32.mrb[0].mxu0
        %v2156 = vpop.f32.mrb[0].mxu0
        %v2157 = vadd.f32 0.0, %v2156
        %v2158 = vpop.f32.mrb[0].mxu0
        %2159 = vmatprep.mubr.bf16.mxu0 %v1728
        %2160 = vmatmul.mubr.bf16.gmra.mrb[0].mxu0 %v1726
        %v2161 = vpop.f32.mrb[0].mxu0
        %v2162 = vadd.f32 0.0, %v2161
        %v2163 = vpop.f32.mrb[0].mxu0
        %v2164 = vpop.f32.mrb[0].mxu0
        %v2165 = vadd.f32 0.0, %v2164
        %v2166 = vpop.f32.mrb[0].mxu0
        %2167 = vmatprep.mubr.bf16.mxu0 %v1734
        %2168 = vmatmul.mubr.bf16.gmra.mrb[0].mxu0 %v1732
        %v2169 = vpop.f32.mrb[0].mxu0
        %v2170 = vadd.f32 0.0, %v2169
        %v2171 = vpop.f32.mrb[0].mxu0
        %v2172 = vpop.f32.mrb[0].mxu0
        %v2173 = vadd.f32 0.0, %v2172
        %v2174 = vpop.f32.mrb[0].mxu0
        %2175 = vmatprep.mubr.bf16.mxu0 %v1740
        %2176 = vmatmul.mubr.bf16.gmra.mrb[0].mxu0 %v1738
        %v2177 = vpop.f32.mrb[0].mxu0
        %v2178 = vadd.f32 0.0, %v2177
        %v2179 = vpop.f32.mrb[0].mxu0
        %v2180 = vpop.f32.mrb[0].mxu0
        %v2181 = vadd.f32 0.0, %v2180
        %v2182 = vpop.f32.mrb[0].mxu0
        %2183 = vdwg.mxu0
        %2184 = vmatprep.subr.bf16.mxu0 0
        %2185 = vmatpush1.bf16.msra.mxu0 %v1927
        %2186 = vmatprep.subr.bf16.mxu0 0
        %2187 = vmatpush1.bf16.msra.mxu0 %v1928
        %2188 = vmatprep.subr.bf16.mxu0 0
        %2189 = vmatpush1.bf16.msra.mxu0 %v1929
        %2190 = vmatprep.subr.bf16.mxu0 0
        %2191 = vmatpush1.bf16.msra.mxu0 %v1930
        %2192 = vmatprep.subr.bf16.mxu0 0
        %2193 = vmatpush1.bf16.msra.mxu0 %v1931
        %2194 = vmatprep.subr.bf16.mxu0 0
        %2195 = vmatpush1.bf16.msra.mxu0 %v1932
        %2196 = vmatprep.subr.bf16.mxu0 0
        %2197 = vmatpush1.bf16.msra.mxu0 %v1933
        %2198 = vmatprep.subr.bf16.mxu0 0
        %2199 = vmatpush1.bf16.msra.mxu0 %v1934
        %2200 = vmatprep.subr.bf16.mxu0 0
        %2201 = vmatpush1.bf16.msra.mxu0 0
        %2202 = vmatprep.subr.bf16.mxu0 0
        %2203 = vmatpush1.bf16.msra.mxu0 0
        %2204 = vmatprep.subr.bf16.mxu0 0
        %2205 = vmatpush1.bf16.msra.mxu0 0
        %2206 = vmatprep.subr.bf16.mxu0 0
        %2207 = vmatpush1.bf16.msra.mxu0 0
        %2208 = vmatprep.subr.bf16.mxu0 0
        %2209 = vmatpush1.bf16.msra.mxu0 0
        %2210 = vmatprep.subr.bf16.mxu0 0
        %2211 = vmatpush1.bf16.msra.mxu0 0
        %2212 = vmatprep.subr.bf16.mxu0 0
        %2213 = vmatpush1.bf16.msra.mxu0 0
        %2214 = vmatprep.subr.bf16.mxu0 0
        %2215 = vmatpush1.bf16.msra.mxu0 0
        %2216 = vmatprep.mubr.bf16.mxu0 0
        %2217 = vmatmul.mubr.bf16.gmra.mrb[0].mxu0 %v1604
        %v2218 = vpop.f32.mrb[0].mxu0
        %v2219 = vadd.f32 %v1994, %v2218
        %v2220 = vpop.f32.mrb[0].mxu0
        %v2221 = vpop.f32.mrb[0].mxu0
        %v2222 = vadd.f32 %v1997, %v2221
        %v2223 = vpop.f32.mrb[0].mxu0
        %2224 = vmatprep.mubr.bf16.mxu0 0
        %2225 = vmatmul.mubr.bf16.gmra.mrb[0].mxu0 %v1610
        %v2226 = vpop.f32.mrb[0].mxu0
        %v2227 = vadd.f32 %v2002, %v2226
        %v2228 = vpop.f32.mrb[0].mxu0
        %v2229 = vpop.f32.mrb[0].mxu0
        %v2230 = vadd.f32 %v2005, %v2229
        %v2231 = vpop.f32.mrb[0].mxu0
        %2232 = vmatprep.mubr.bf16.mxu0 0
        %2233 = vmatmul.mubr.bf16.gmra.mrb[0].mxu0 %v1616
        %v2234 = vpop.f32.mrb[0].mxu0
        %v2235 = vadd.f32 %v2010, %v2234
        %v2236 = vpop.f32.mrb[0].mxu0
        %v2237 = vpop.f32.mrb[0].mxu0
        %v2238 = vadd.f32 %v2013, %v2237
        %v2239 = vpop.f32.mrb[0].mxu0
        %2240 = vmatprep.mubr.bf16.mxu0 0
        %2241 = vmatmul.mubr.bf16.gmra.mrb[0].mxu0 %v1622
        %v2242 = vpop.f32.mrb[0].mxu0
        %v2243 = vadd.f32 %v2018, %v2242
        %v2244 = vpop.f32.mrb[0].mxu0
        %v2245 = vpop.f32.mrb[0].mxu0
        %v2246 = vadd.f32 %v2021, %v2245
        %v2247 = vpop.f32.mrb[0].mxu0
        %2248 = vmatprep.mubr.bf16.mxu0 0
        %2249 = vmatmul.mubr.bf16.gmra.mrb[0].mxu0 %v1628
        %v2250 = vpop.f32.mrb[0].mxu0
        %v2251 = vadd.f32 %v2026, %v2250
        %v2252 = vpop.f32.mrb[0].mxu0
        %v2253 = vpop.f32.mrb[0].mxu0
        %v2254 = vadd.f32 %v2029, %v2253
        %v2255 = vpop.f32.mrb[0].mxu0
        %2256 = vmatprep.mubr.bf16.mxu0 0
        %2257 = vmatmul.mubr.bf16.gmra.mrb[0].mxu0 %v1634
        %v2258 = vpop.f32.mrb[0].mxu0
        %v2259 = vadd.f32 %v2034, %v2258
        %v2260 = vpop.f32.mrb[0].mxu0
        %v2261 = vpop.f32.mrb[0].mxu0
        %v2262 = vadd.f32 %v2037, %v2261
        %v2263 = vpop.f32.mrb[0].mxu0
        %2264 = vmatprep.mubr.bf16.mxu0 0
        %2265 = vmatmul.mubr.bf16.gmra.mrb[0].mxu0 %v1640
        %v2266 = vpop.f32.mrb[0].mxu0
        %v2267 = vadd.f32 %v2042, %v2266
        %v2268 = vpop.f32.mrb[0].mxu0
        %v2269 = vpop.f32.mrb[0].mxu0
        %v2270 = vadd.f32 %v2045, %v2269
        %v2271 = vpop.f32.mrb[0].mxu0
        %2272 = vmatprep.mubr.bf16.mxu0 0
        %2273 = vmatmul.mubr.bf16.gmra.mrb[0].mxu0 %v1646
        %v2274 = vpop.f32.mrb[0].mxu0
        %v2275 = vadd.f32 %v2050, %v2274
        %v2276 = vpop.f32.mrb[0].mxu0
        %v2277 = vpop.f32.mrb[0].mxu0
        %v2278 = vadd.f32 %v2053, %v2277
        %v2279 = vpop.f32.mrb[0].mxu0
        %2280 = vmatprep.mubr.bf16.mxu0 0
        %2281 = vmatmul.mubr.bf16.gmra.mrb[0].mxu0 %v1652
        %v2282 = vpop.f32.mrb[0].mxu0
        %v2283 = vadd.f32 %v2058, %v2282
        %v2284 = vpop.f32.mrb[0].mxu0
        %v2285 = vpop.f32.mrb[0].mxu0
        %v2286 = vadd.f32 %v2061, %v2285
        %v2287 = vpop.f32.mrb[0].mxu0
        %2288 = vmatprep.mubr.bf16.mxu0 0
        %2289 = vmatmul.mubr.bf16.gmra.mrb[0].mxu0 %v1658
        %v2290 = vpop.f32.mrb[0].mxu0
        %v2291 = vadd.f32 %v2066, %v2290
        %v2292 = vpop.f32.mrb[0].mxu0
        %v2293 = vpop.f32.mrb[0].mxu0
        %v2294 = vadd.f32 %v2069, %v2293
        %v2295 = vpop.f32.mrb[0].mxu0
        %2296 = vmatprep.mubr.bf16.mxu0 0
        %2297 = vmatmul.mubr.bf16.gmra.mrb[0].mxu0 %v1664
        %v2298 = vpop.f32.mrb[0].mxu0
        %v2299 = vadd.f32 %v2074, %v2298
        %v2300 = vpop.f32.mrb[0].mxu0
        %v2301 = vpop.f32.mrb[0].mxu0
        %v2302 = vadd.f32 %v2077, %v2301
        %v2303 = vpop.f32.mrb[0].mxu0
        %2304 = vmatprep.mubr.bf16.mxu0 0
        %2305 = vmatmul.mubr.bf16.gmra.mrb[0].mxu0 %v1670
        %v2306 = vpop.f32.mrb[0].mxu0
        %v2307 = vadd.f32 %v2082, %v2306
        %v2308 = vpop.f32.mrb[0].mxu0
        %v2309 = vpop.f32.mrb[0].mxu0
        %v2310 = vadd.f32 %v2085, %v2309
        %v2311 = vpop.f32.mrb[0].mxu0
        %2312 = vmatprep.mubr.bf16.mxu0 0
        %2313 = vmatmul.mubr.bf16.gmra.mrb[0].mxu0 %v1676
        %v2314 = vpop.f32.mrb[0].mxu0
        %v2315 = vadd.f32 %v2090, %v2314
        %v2316 = vpop.f32.mrb[0].mxu0
        %v2317 = vpop.f32.mrb[0].mxu0
        %v2318 = vadd.f32 %v2093, %v2317
        %v2319 = vpop.f32.mrb[0].mxu0
        %2320 = vmatprep.mubr.bf16.mxu0 0
        %2321 = vmatmul.mubr.bf16.gmra.mrb[0].mxu0 %v1682
        %v2322 = vpop.f32.mrb[0].mxu0
        %v2323 = vadd.f32 %v2098, %v2322
        %v2324 = vpop.f32.mrb[0].mxu0
        %v2325 = vpop.f32.mrb[0].mxu0
        %v2326 = vadd.f32 %v2101, %v2325
        %v2327 = vpop.f32.mrb[0].mxu0
        %2328 = vmatprep.mubr.bf16.mxu0 0
        %2329 = vmatmul.mubr.bf16.gmra.mrb[0].mxu0 %v1688
        %v2330 = vpop.f32.mrb[0].mxu0
        %v2331 = vadd.f32 %v2106, %v2330
        %v2332 = vpop.f32.mrb[0].mxu0
        %v2333 = vpop.f32.mrb[0].mxu0
        %v2334 = vadd.f32 %v2109, %v2333
        %v2335 = vpop.f32.mrb[0].mxu0
        %2336 = vmatprep.mubr.bf16.mxu0 0
        %2337 = vmatmul.mubr.bf16.gmra.mrb[0].mxu0 %v1694
        %v2338 = vpop.f32.mrb[0].mxu0
        %v2339 = vadd.f32 %v2114, %v2338
        %v2340 = vpop.f32.mrb[0].mxu0
        %v2341 = vpop.f32.mrb[0].mxu0
        %v2342 = vadd.f32 %v2117, %v2341
        %v2343 = vpop.f32.mrb[0].mxu0
        %2344 = vmatprep.mubr.bf16.mxu0 0
        %2345 = vmatmul.mubr.bf16.gmra.mrb[0].mxu0 %v1700
        %v2346 = vpop.f32.mrb[0].mxu0
        %v2347 = vadd.f32 %v2122, %v2346
        %v2348 = vpop.f32.mrb[0].mxu0
        %v2349 = vpop.f32.mrb[0].mxu0
        %v2350 = vadd.f32 %v2125, %v2349
        %v2351 = vpop.f32.mrb[0].mxu0
        %2352 = vmatprep.mubr.bf16.mxu0 0
        %2353 = vmatmul.mubr.bf16.gmra.mrb[0].mxu0 %v1706
        %v2354 = vpop.f32.mrb[0].mxu0
        %v2355 = vadd.f32 %v2130, %v2354
        %v2356 = vpop.f32.mrb[0].mxu0
        %v2357 = vpop.f32.mrb[0].mxu0
        %v2358 = vadd.f32 %v2133, %v2357
        %v2359 = vpop.f32.mrb[0].mxu0
        %2360 = vmatprep.mubr.bf16.mxu0 0
        %2361 = vmatmul.mubr.bf16.gmra.mrb[0].mxu0 %v1712
        %v2362 = vpop.f32.mrb[0].mxu0
        %v2363 = vadd.f32 %v2138, %v2362
        %v2364 = vpop.f32.mrb[0].mxu0
        %v2365 = vpop.f32.mrb[0].mxu0
        %v2366 = vadd.f32 %v2141, %v2365
        %v2367 = vpop.f32.mrb[0].mxu0
        %2368 = vmatprep.mubr.bf16.mxu0 0
        %2369 = vmatmul.mubr.bf16.gmra.mrb[0].mxu0 %v1718
        %v2370 = vpop.f32.mrb[0].mxu0
        %v2371 = vadd.f32 %v2146, %v2370
        %v2372 = vpop.f32.mrb[0].mxu0
        %v2373 = vpop.f32.mrb[0].mxu0
        %v2374 = vadd.f32 %v2149, %v2373
        %v2375 = vpop.f32.mrb[0].mxu0
        %2376 = vmatprep.mubr.bf16.mxu0 0
        %2377 = vmatmul.mubr.bf16.gmra.mrb[0].mxu0 %v1724
        %v2378 = vpop.f32.mrb[0].mxu0
        %v2379 = vadd.f32 %v2154, %v2378
        %v2380 = vpop.f32.mrb[0].mxu0
        %v2381 = vpop.f32.mrb[0].mxu0
        %v2382 = vadd.f32 %v2157, %v2381
        %v2383 = vpop.f32.mrb[0].mxu0
        %2384 = vmatprep.mubr.bf16.mxu0 0
        %2385 = vmatmul.mubr.bf16.gmra.mrb[0].mxu0 %v1730
        %v2386 = vpop.f32.mrb[0].mxu0
        %v2387 = vadd.f32 %v2162, %v2386
        %v2388 = vpop.f32.mrb[0].mxu0
        %v2389 = vpop.f32.mrb[0].mxu0
        %v2390 = vadd.f32 %v2165, %v2389
        %v2391 = vpop.f32.mrb[0].mxu0
        %2392 = vmatprep.mubr.bf16.mxu0 0
        %2393 = vmatmul.mubr.bf16.gmra.mrb[0].mxu0 %v1736
        %v2394 = vpop.f32.mrb[0].mxu0
        %v2395 = vadd.f32 %v2170, %v2394
        %v2396 = vpop.f32.mrb[0].mxu0
        %v2397 = vpop.f32.mrb[0].mxu0
        %v2398 = vadd.f32 %v2173, %v2397
        %v2399 = vpop.f32.mrb[0].mxu0
        %2400 = vmatprep.mubr.bf16.mxu0 0
        %2401 = vmatmul.mubr.bf16.gmra.mrb[0].mxu0 %v1742
        %v2402 = vpop.f32.mrb[0].mxu0
        %v2403 = vadd.f32 %v2178, %v2402
        %v2404 = vpop.f32.mrb[0].mxu0
        %v2405 = vpop.f32.mrb[0].mxu0
        %v2406 = vadd.f32 %v2181, %v2405
        %v2407 = vpop.f32.mrb[0].mxu0
        %2408 = vdwg.mxu0
        %v2409 = vadd.f32 %v1356, %v2219
        %v2410 = vadd.f32 %v1359, %v2222
        %v2411 = vadd.f32 %v1364, %v2227
        %v2412 = vadd.f32 %v1367, %v2230
        %v2413 = vadd.f32 %v1372, %v2235
        %v2414 = vadd.f32 %v1375, %v2238
        %v2415 = vadd.f32 %v1380, %v2243
        %v2416 = vadd.f32 %v1383, %v2246
        %v2417 = vadd.f32 %v1388, %v2251
        %v2418 = vadd.f32 %v1391, %v2254
        %v2419 = vadd.f32 %v1396, %v2259
        %v2420 = vadd.f32 %v1399, %v2262
        %v2421 = vadd.f32 %v1404, %v2267
        %v2422 = vadd.f32 %v1407, %v2270
        %v2423 = vadd.f32 %v1412, %v2275
        %v2424 = vadd.f32 %v1415, %v2278
        %v2425 = vadd.f32 %v1420, %v2283
        %v2426 = vadd.f32 %v1423, %v2286
        %v2427 = vadd.f32 %v1428, %v2291
        %v2428 = vadd.f32 %v1431, %v2294
        %v2429 = vadd.f32 %v1436, %v2299
        %v2430 = vadd.f32 %v1439, %v2302
        %v2431 = vadd.f32 %v1444, %v2307
        %v2432 = vadd.f32 %v1447, %v2310
        %v2433 = vadd.f32 %v1452, %v2315
        %v2434 = vadd.f32 %v1455, %v2318
        %v2435 = vadd.f32 %v1460, %v2323
        %v2436 = vadd.f32 %v1463, %v2326
        %v2437 = vadd.f32 %v1468, %v2331
        %v2438 = vadd.f32 %v1471, %v2334
        %v2439 = vadd.f32 %v1476, %v2339
        %v2440 = vadd.f32 %v1479, %v2342
        %v2441 = vadd.f32 %v1484, %v2347
        %v2442 = vadd.f32 %v1487, %v2350
        %v2443 = vadd.f32 %v1492, %v2355
        %v2444 = vadd.f32 %v1495, %v2358
        %v2445 = vadd.f32 %v1500, %v2363
        %v2446 = vadd.f32 %v1503, %v2366
        %v2447 = vadd.f32 %v1508, %v2371
        %v2448 = vadd.f32 %v1511, %v2374
        %v2449 = vadd.f32 %v1516, %v2379
        %v2450 = vadd.f32 %v1519, %v2382
        %v2451 = vadd.f32 %v1524, %v2387
        %v2452 = vadd.f32 %v1527, %v2390
        %v2453 = vadd.f32 %v1532, %v2395
        %v2454 = vadd.f32 %v1535, %v2398
        %v2455 = vadd.f32 %v1540, %v2403
        %v2456 = vadd.f32 %v1543, %v2406
        %s2457 = scalar_lea.vmem [#allocation7], 384
        %v2458 = vld [vmem:[%s2457] sm:$0xf]
        %v2459 = vld [vmem:[%s2457 + $0x4] sm:$0xf]
        %v2460 = vld [vmem:[%s2457 + $0x8] sm:$0xf]
        %v2461 = vld [vmem:[%s2457 + $0xc] sm:$0xf]
        %v2462 = vld [vmem:[%s2457 + $0x10] sm:$0xf]
        %v2463 = vld [vmem:[%s2457 + $0x14] sm:$0xf]
        %v2464 = vld [vmem:[%s2457 + $0x18] sm:$0xf]
        %v2465 = vld [vmem:[%s2457 + $0x1c] sm:$0xf]
        %v2466 = vld [vmem:[%s2457 + $0x20] sm:$0xf]
        %v2467 = vld [vmem:[%s2457 + $0x24] sm:$0xf]
        %v2468 = vld [vmem:[%s2457 + $0x28] sm:$0xf]
        %v2469 = vld [vmem:[%s2457 + $0x2c] sm:$0xf]
        %v2470 = vld [vmem:[%s2457 + $0x30] sm:$0xf]
        %v2471 = vld [vmem:[%s2457 + $0x34] sm:$0xf]
        %v2472 = vld [vmem:[%s2457 + $0x38] sm:$0xf]
        %v2473 = vld [vmem:[%s2457 + $0x3c] sm:$0xf]
        %v2474 = vld [vmem:[%s2457 + $0x40] sm:$0xf]
        %v2475 = vld [vmem:[%s2457 + $0x44] sm:$0xf]
        %v2476 = vld [vmem:[%s2457 + $0x48] sm:$0xf]
        %v2477 = vld [vmem:[%s2457 + $0x4c] sm:$0xf]
        %v2478 = vld [vmem:[%s2457 + $0x50] sm:$0xf]
        %v2479 = vld [vmem:[%s2457 + $0x54] sm:$0xf]
        %v2480 = vld [vmem:[%s2457 + $0x58] sm:$0xf]
        %v2481 = vld [vmem:[%s2457 + $0x5c] sm:$0xf]
        %v2482 = vld [vmem:[%s2457 + $0x60] sm:$0xf]
        %v2483 = vld [vmem:[%s2457 + $0x64] sm:$0xf]
        %v2484 = vld [vmem:[%s2457 + $0x68] sm:$0xf]
        %v2485 = vld [vmem:[%s2457 + $0x6c] sm:$0xf]
        %v2486 = vld [vmem:[%s2457 + $0x70] sm:$0xf]
        %v2487 = vld [vmem:[%s2457 + $0x74] sm:$0xf]
        %v2488 = vld [vmem:[%s2457 + $0x78] sm:$0xf]
        %v2489 = vld [vmem:[%s2457 + $0x7c] sm:$0xf]
        %v2490 = vld [vmem:[%s2457 + $0x80] sm:$0xf]
        %v2491 = vld [vmem:[%s2457 + $0x84] sm:$0xf]
        %v2492 = vld [vmem:[%s2457 + $0x88] sm:$0xf]
        %v2493 = vld [vmem:[%s2457 + $0x8c] sm:$0xf]
        %v2494 = vld [vmem:[%s2457 + $0x90] sm:$0xf]
        %v2495 = vld [vmem:[%s2457 + $0x94] sm:$0xf]
        %v2496 = vld [vmem:[%s2457 + $0x98] sm:$0xf]
        %v2497 = vld [vmem:[%s2457 + $0x9c] sm:$0xf]
        %v2498 = vld [vmem:[%s2457 + $0xa0] sm:$0xf]
        %v2499 = vld [vmem:[%s2457 + $0xa4] sm:$0xf]
        %v2500 = vld [vmem:[%s2457 + $0xa8] sm:$0xf]
        %v2501 = vld [vmem:[%s2457 + $0xac] sm:$0xf]
        %v2502 = vld [vmem:[%s2457 + $0xb0] sm:$0xf]
        %v2503 = vld [vmem:[%s2457 + $0xb4] sm:$0xf]
        %v2504 = vld [vmem:[%s2457 + $0xb8] sm:$0xf]
        %v2505 = vld [vmem:[%s2457 + $0xbc] sm:$0xf]
        %v2554 = vunpack.c.l.b16 %v2458
        %v2555 = vunpack.c.l.b16 %v2459
        %v2556 = vunpack.c.l.b16 %v2460
        %v2557 = vunpack.c.l.b16 %v2461
        %v2558 = vunpack.c.l.b16 %v2462
        %v2559 = vunpack.c.l.b16 %v2463
        %v2560 = vunpack.c.l.b16 %v2464
        %v2561 = vunpack.c.l.b16 %v2465
        %v2562 = vunpack.c.l.b16 %v2466
        %v2563 = vunpack.c.l.b16 %v2467
        %v2564 = vunpack.c.l.b16 %v2468
        %v2565 = vunpack.c.l.b16 %v2469
        %v2566 = vunpack.c.l.b16 %v2470
        %v2567 = vunpack.c.l.b16 %v2471
        %v2568 = vunpack.c.l.b16 %v2472
        %v2569 = vunpack.c.l.b16 %v2473
        %v2570 = vunpack.c.l.b16 %v2474
        %v2571 = vunpack.c.l.b16 %v2475
        %v2572 = vunpack.c.l.b16 %v2476
        %v2573 = vunpack.c.l.b16 %v2477
        %v2574 = vunpack.c.l.b16 %v2478
        %v2575 = vunpack.c.l.b16 %v2479
        %v2576 = vunpack.c.l.b16 %v2480
        %v2577 = vunpack.c.l.b16 %v2481
        %v2578 = vunpack.c.l.b16 %v2482
        %v2579 = vunpack.c.l.b16 %v2483
        %v2580 = vunpack.c.l.b16 %v2484
        %v2581 = vunpack.c.l.b16 %v2485
        %v2582 = vunpack.c.l.b16 %v2486
        %v2583 = vunpack.c.l.b16 %v2487
        %v2584 = vunpack.c.l.b16 %v2488
        %v2585 = vunpack.c.l.b16 %v2489
        %v2586 = vunpack.c.l.b16 %v2490
        %v2587 = vunpack.c.l.b16 %v2491
        %v2588 = vunpack.c.l.b16 %v2492
        %v2589 = vunpack.c.l.b16 %v2493
        %v2590 = vunpack.c.l.b16 %v2494
        %v2591 = vunpack.c.l.b16 %v2495
        %v2592 = vunpack.c.l.b16 %v2496
        %v2593 = vunpack.c.l.b16 %v2497
        %v2594 = vunpack.c.l.b16 %v2498
        %v2595 = vunpack.c.l.b16 %v2499
        %v2596 = vunpack.c.l.b16 %v2500
        %v2597 = vunpack.c.l.b16 %v2501
        %v2598 = vunpack.c.l.b16 %v2502
        %v2599 = vunpack.c.l.b16 %v2503
        %v2600 = vunpack.c.l.b16 %v2504
        %v2601 = vunpack.c.l.b16 %v2505
        %v2602 = vpack.c.b16 %v2555, %v2554
        %v2603 = vpack.c.b16 %v2557, %v2556
        %v2604 = vpack.c.b16 %v2559, %v2558
        %v2605 = vpack.c.b16 %v2561, %v2560
        %v2606 = vpack.c.b16 %v2563, %v2562
        %v2607 = vpack.c.b16 %v2565, %v2564
        %v2608 = vpack.c.b16 %v2567, %v2566
        %v2609 = vpack.c.b16 %v2569, %v2568
        %v2610 = vpack.c.b16 %v2571, %v2570
        %v2611 = vpack.c.b16 %v2573, %v2572
        %v2612 = vpack.c.b16 %v2575, %v2574
        %v2613 = vpack.c.b16 %v2577, %v2576
        %v2614 = vpack.c.b16 %v2579, %v2578
        %v2615 = vpack.c.b16 %v2581, %v2580
        %v2616 = vpack.c.b16 %v2583, %v2582
        %v2617 = vpack.c.b16 %v2585, %v2584
        %v2618 = vpack.c.b16 %v2587, %v2586
        %v2619 = vpack.c.b16 %v2589, %v2588
        %v2620 = vpack.c.b16 %v2591, %v2590
        %v2621 = vpack.c.b16 %v2593, %v2592
        %v2622 = vpack.c.b16 %v2595, %v2594
        %v2623 = vpack.c.b16 %v2597, %v2596
        %v2624 = vpack.c.b16 %v2599, %v2598
        %v2625 = vpack.c.b16 %v2601, %v2600
        %2650 = vmatprep.subr.bf16.mxu0 0
        %2651 = vmatpush1.bf16.msra.mxu0 %v2602
        %2652 = vmatprep.subr.bf16.mxu0 0
        %2653 = vmatpush1.bf16.msra.mxu0 %v2603
        %2654 = vmatprep.subr.bf16.mxu0 0
        %2655 = vmatpush1.bf16.msra.mxu0 %v2604
        %2656 = vmatprep.subr.bf16.mxu0 0
        %2657 = vmatpush1.bf16.msra.mxu0 %v2605
        %2658 = vmatprep.subr.bf16.mxu0 0
        %2659 = vmatpush1.bf16.msra.mxu0 %v2606
        %2660 = vmatprep.subr.bf16.mxu0 0
        %2661 = vmatpush1.bf16.msra.mxu0 %v2607
        %2662 = vmatprep.subr.bf16.mxu0 0
        %2663 = vmatpush1.bf16.msra.mxu0 %v2608
        %2664 = vmatprep.subr.bf16.mxu0 0
        %2665 = vmatpush1.bf16.msra.mxu0 %v2609
        %2666 = vmatprep.subr.bf16.mxu0 0
        %2667 = vmatpush1.bf16.msra.mxu0 %v2610
        %2668 = vmatprep.subr.bf16.mxu0 0
        %2669 = vmatpush1.bf16.msra.mxu0 %v2611
        %2670 = vmatprep.subr.bf16.mxu0 0
        %2671 = vmatpush1.bf16.msra.mxu0 %v2612
        %2672 = vmatprep.subr.bf16.mxu0 0
        %2673 = vmatpush1.bf16.msra.mxu0 %v2613
        %2674 = vmatprep.subr.bf16.mxu0 0
        %2675 = vmatpush1.bf16.msra.mxu0 %v2614
        %2676 = vmatprep.subr.bf16.mxu0 0
        %2677 = vmatpush1.bf16.msra.mxu0 %v2615
        %2678 = vmatprep.subr.bf16.mxu0 0
        %2679 = vmatpush1.bf16.msra.mxu0 %v2616
        %2680 = vmatprep.subr.bf16.mxu0 0
        %2681 = vmatpush1.bf16.msra.mxu0 %v2617
        %2682 = vmatprep.mubr.bf16.mxu0 %v601
        %2683 = vmatmul.mubr.bf16.gmra.mrb[0].mxu0 %v502
        %v2684 = vpop.f32.mrb[0].mxu0
        %v2685 = vadd.f32 0.0, %v2684
        %v2686 = vpop.f32.mrb[0].mxu0
        %v2687 = vpop.f32.mrb[0].mxu0
        %v2688 = vadd.f32 0.0, %v2687
        %v2689 = vpop.f32.mrb[0].mxu0
        %2690 = vmatprep.mubr.bf16.mxu0 %v609
        %2691 = vmatmul.mubr.bf16.gmra.mrb[0].mxu0 %v503
        %v2692 = vpop.f32.mrb[0].mxu0
        %v2693 = vadd.f32 0.0, %v2692
        %v2694 = vpop.f32.mrb[0].mxu0
        %v2695 = vpop.f32.mrb[0].mxu0
        %v2696 = vadd.f32 0.0, %v2695
        %v2697 = vpop.f32.mrb[0].mxu0
        %2698 = vmatprep.mubr.bf16.mxu0 %v617
        %2699 = vmatmul.mubr.bf16.gmra.mrb[0].mxu0 %v504
        %v2700 = vpop.f32.mrb[0].mxu0
        %v2701 = vadd.f32 0.0, %v2700
        %v2702 = vpop.f32.mrb[0].mxu0
        %v2703 = vpop.f32.mrb[0].mxu0
        %v2704 = vadd.f32 0.0, %v2703
        %v2705 = vpop.f32.mrb[0].mxu0
        %2706 = vmatprep.mubr.bf16.mxu0 %v625
        %2707 = vmatmul.mubr.bf16.gmra.mrb[0].mxu0 %v505
        %v2708 = vpop.f32.mrb[0].mxu0
        %v2709 = vadd.f32 0.0, %v2708
        %v2710 = vpop.f32.mrb[0].mxu0
        %v2711 = vpop.f32.mrb[0].mxu0
        %v2712 = vadd.f32 0.0, %v2711
        %v2713 = vpop.f32.mrb[0].mxu0
        %2714 = vmatprep.mubr.bf16.mxu0 %v633
        %2715 = vmatmul.mubr.bf16.gmra.mrb[0].mxu0 %v506
        %v2716 = vpop.f32.mrb[0].mxu0
        %v2717 = vadd.f32 0.0, %v2716
        %v2718 = vpop.f32.mrb[0].mxu0
        %v2719 = vpop.f32.mrb[0].mxu0
        %v2720 = vadd.f32 0.0, %v2719
        %v2721 = vpop.f32.mrb[0].mxu0
        %2722 = vmatprep.mubr.bf16.mxu0 %v641
        %2723 = vmatmul.mubr.bf16.gmra.mrb[0].mxu0 %v507
        %v2724 = vpop.f32.mrb[0].mxu0
        %v2725 = vadd.f32 0.0, %v2724
        %v2726 = vpop.f32.mrb[0].mxu0
        %v2727 = vpop.f32.mrb[0].mxu0
        %v2728 = vadd.f32 0.0, %v2727
        %v2729 = vpop.f32.mrb[0].mxu0
        %2730 = vmatprep.mubr.bf16.mxu0 %v649
        %2731 = vmatmul.mubr.bf16.gmra.mrb[0].mxu0 %v508
        %v2732 = vpop.f32.mrb[0].mxu0
        %v2733 = vadd.f32 0.0, %v2732
        %v2734 = vpop.f32.mrb[0].mxu0
        %v2735 = vpop.f32.mrb[0].mxu0
        %v2736 = vadd.f32 0.0, %v2735
        %v2737 = vpop.f32.mrb[0].mxu0
        %2738 = vmatprep.mubr.bf16.mxu0 %v657
        %2739 = vmatmul.mubr.bf16.gmra.mrb[0].mxu0 %v509
        %v2740 = vpop.f32.mrb[0].mxu0
        %v2741 = vadd.f32 0.0, %v2740
        %v2742 = vpop.f32.mrb[0].mxu0
        %v2743 = vpop.f32.mrb[0].mxu0
        %v2744 = vadd.f32 0.0, %v2743
        %v2745 = vpop.f32.mrb[0].mxu0
        %2746 = vmatprep.mubr.bf16.mxu0 %v665
        %2747 = vmatmul.mubr.bf16.gmra.mrb[0].mxu0 %v510
        %v2748 = vpop.f32.mrb[0].mxu0
        %v2749 = vadd.f32 0.0, %v2748
        %v2750 = vpop.f32.mrb[0].mxu0
        %v2751 = vpop.f32.mrb[0].mxu0
        %v2752 = vadd.f32 0.0, %v2751
        %v2753 = vpop.f32.mrb[0].mxu0
        %2754 = vmatprep.mubr.bf16.mxu0 %v673
        %2755 = vmatmul.mubr.bf16.gmra.mrb[0].mxu0 %v511
        %v2756 = vpop.f32.mrb[0].mxu0
        %v2757 = vadd.f32 0.0, %v2756
        %v2758 = vpop.f32.mrb[0].mxu0
        %v2759 = vpop.f32.mrb[0].mxu0
        %v2760 = vadd.f32 0.0, %v2759
        %v2761 = vpop.f32.mrb[0].mxu0
        %2762 = vmatprep.mubr.bf16.mxu0 %v681
        %2763 = vmatmul.mubr.bf16.gmra.mrb[0].mxu0 %v512
        %v2764 = vpop.f32.mrb[0].mxu0
        %v2765 = vadd.f32 0.0, %v2764
        %v2766 = vpop.f32.mrb[0].mxu0
        %v2767 = vpop.f32.mrb[0].mxu0
        %v2768 = vadd.f32 0.0, %v2767
        %v2769 = vpop.f32.mrb[0].mxu0
        %2770 = vmatprep.mubr.bf16.mxu0 %v689
        %2771 = vmatmul.mubr.bf16.gmra.mrb[0].mxu0 %v513
        %v2772 = vpop.f32.mrb[0].mxu0
        %v2773 = vadd.f32 0.0, %v2772
        %v2774 = vpop.f32.mrb[0].mxu0
        %v2775 = vpop.f32.mrb[0].mxu0
        %v2776 = vadd.f32 0.0, %v2775
        %v2777 = vpop.f32.mrb[0].mxu0
        %2778 = vmatprep.mubr.bf16.mxu0 %v697
        %2779 = vmatmul.mubr.bf16.gmra.mrb[0].mxu0 %v514
        %v2780 = vpop.f32.mrb[0].mxu0
        %v2781 = vadd.f32 0.0, %v2780
        %v2782 = vpop.f32.mrb[0].mxu0
        %v2783 = vpop.f32.mrb[0].mxu0
        %v2784 = vadd.f32 0.0, %v2783
        %v2785 = vpop.f32.mrb[0].mxu0
        %2786 = vmatprep.mubr.bf16.mxu0 %v705
        %2787 = vmatmul.mubr.bf16.gmra.mrb[0].mxu0 %v515
        %v2788 = vpop.f32.mrb[0].mxu0
        %v2789 = vadd.f32 0.0, %v2788
        %v2790 = vpop.f32.mrb[0].mxu0
        %v2791 = vpop.f32.mrb[0].mxu0
        %v2792 = vadd.f32 0.0, %v2791
        %v2793 = vpop.f32.mrb[0].mxu0
        %2794 = vmatprep.mubr.bf16.mxu0 %v713
        %2795 = vmatmul.mubr.bf16.gmra.mrb[0].mxu0 %v516
        %v2796 = vpop.f32.mrb[0].mxu0
        %v2797 = vadd.f32 0.0, %v2796
        %v2798 = vpop.f32.mrb[0].mxu0
        %v2799 = vpop.f32.mrb[0].mxu0
        %v2800 = vadd.f32 0.0, %v2799
        %v2801 = vpop.f32.mrb[0].mxu0
        %2802 = vmatprep.mubr.bf16.mxu0 %v721
        %2803 = vmatmul.mubr.bf16.gmra.mrb[0].mxu0 %v517
        %v2804 = vpop.f32.mrb[0].mxu0
        %v2805 = vadd.f32 0.0, %v2804
        %v2806 = vpop.f32.mrb[0].mxu0
        %v2807 = vpop.f32.mrb[0].mxu0
        %v2808 = vadd.f32 0.0, %v2807
        %v2809 = vpop.f32.mrb[0].mxu0
        %2810 = vmatprep.mubr.bf16.mxu0 %v729
        %2811 = vmatmul.mubr.bf16.gmra.mrb[0].mxu0 %v518
        %v2812 = vpop.f32.mrb[0].mxu0
        %v2813 = vadd.f32 0.0, %v2812
        %v2814 = vpop.f32.mrb[0].mxu0
        %v2815 = vpop.f32.mrb[0].mxu0
        %v2816 = vadd.f32 0.0, %v2815
        %v2817 = vpop.f32.mrb[0].mxu0
        %2818 = vmatprep.mubr.bf16.mxu0 %v737
        %2819 = vmatmul.mubr.bf16.gmra.mrb[0].mxu0 %v519
        %v2820 = vpop.f32.mrb[0].mxu0
        %v2821 = vadd.f32 0.0, %v2820
        %v2822 = vpop.f32.mrb[0].mxu0
        %v2823 = vpop.f32.mrb[0].mxu0
        %v2824 = vadd.f32 0.0, %v2823
        %v2825 = vpop.f32.mrb[0].mxu0
        %2826 = vmatprep.mubr.bf16.mxu0 %v745
        %2827 = vmatmul.mubr.bf16.gmra.mrb[0].mxu0 %v520
        %v2828 = vpop.f32.mrb[0].mxu0
        %v2829 = vadd.f32 0.0, %v2828
        %v2830 = vpop.f32.mrb[0].mxu0
        %v2831 = vpop.f32.mrb[0].mxu0
        %v2832 = vadd.f32 0.0, %v2831
        %v2833 = vpop.f32.mrb[0].mxu0
        %2834 = vmatprep.mubr.bf16.mxu0 %v753
        %2835 = vmatmul.mubr.bf16.gmra.mrb[0].mxu0 %v521
        %v2836 = vpop.f32.mrb[0].mxu0
        %v2837 = vadd.f32 0.0, %v2836
        %v2838 = vpop.f32.mrb[0].mxu0
        %v2839 = vpop.f32.mrb[0].mxu0
        %v2840 = vadd.f32 0.0, %v2839
        %v2841 = vpop.f32.mrb[0].mxu0
        %2842 = vmatprep.mubr.bf16.mxu0 %v761
        %2843 = vmatmul.mubr.bf16.gmra.mrb[0].mxu0 %v522
        %v2844 = vpop.f32.mrb[0].mxu0
        %v2845 = vadd.f32 0.0, %v2844
        %v2846 = vpop.f32.mrb[0].mxu0
        %v2847 = vpop.f32.mrb[0].mxu0
        %v2848 = vadd.f32 0.0, %v2847
        %v2849 = vpop.f32.mrb[0].mxu0
        %2850 = vmatprep.mubr.bf16.mxu0 %v769
        %2851 = vmatmul.mubr.bf16.gmra.mrb[0].mxu0 %v559
        %v2852 = vpop.f32.mrb[0].mxu0
        %v2853 = vadd.f32 0.0, %v2852
        %v2854 = vpop.f32.mrb[0].mxu0
        %v2855 = vpop.f32.mrb[0].mxu0
        %v2856 = vadd.f32 0.0, %v2855
        %v2857 = vpop.f32.mrb[0].mxu0
        %2858 = vmatprep.mubr.bf16.mxu0 %v777
        %2859 = vmatmul.mubr.bf16.gmra.mrb[0].mxu0 %v560
        %v2860 = vpop.f32.mrb[0].mxu0
        %v2861 = vadd.f32 0.0, %v2860
        %v2862 = vpop.f32.mrb[0].mxu0
        %v2863 = vpop.f32.mrb[0].mxu0
        %v2864 = vadd.f32 0.0, %v2863
        %v2865 = vpop.f32.mrb[0].mxu0
        %2866 = vmatprep.mubr.bf16.mxu0 %v785
        %2867 = vmatmul.mubr.bf16.gmra.mrb[0].mxu0 %v561
        %v2868 = vpop.f32.mrb[0].mxu0
        %v2869 = vadd.f32 0.0, %v2868
        %v2870 = vpop.f32.mrb[0].mxu0
        %v2871 = vpop.f32.mrb[0].mxu0
        %v2872 = vadd.f32 0.0, %v2871
        %v2873 = vpop.f32.mrb[0].mxu0
        %2874 = vdwg.mxu0
        %2875 = vmatprep.subr.bf16.mxu0 0
        %2876 = vmatpush1.bf16.msra.mxu0 %v2618
        %2877 = vmatprep.subr.bf16.mxu0 0
        %2878 = vmatpush1.bf16.msra.mxu0 %v2619
        %2879 = vmatprep.subr.bf16.mxu0 0
        %2880 = vmatpush1.bf16.msra.mxu0 %v2620
        %2881 = vmatprep.subr.bf16.mxu0 0
        %2882 = vmatpush1.bf16.msra.mxu0 %v2621
        %2883 = vmatprep.subr.bf16.mxu0 0
        %2884 = vmatpush1.bf16.msra.mxu0 %v2622
        %2885 = vmatprep.subr.bf16.mxu0 0
        %2886 = vmatpush1.bf16.msra.mxu0 %v2623
        %2887 = vmatprep.subr.bf16.mxu0 0
        %2888 = vmatpush1.bf16.msra.mxu0 %v2624
        %2889 = vmatprep.subr.bf16.mxu0 0
        %2890 = vmatpush1.bf16.msra.mxu0 %v2625
        %2891 = vmatprep.subr.bf16.mxu0 0
        %2892 = vmatpush1.bf16.msra.mxu0 0
        %2893 = vmatprep.subr.bf16.mxu0 0
        %2894 = vmatpush1.bf16.msra.mxu0 0
        %2895 = vmatprep.subr.bf16.mxu0 0
        %2896 = vmatpush1.bf16.msra.mxu0 0
        %2897 = vmatprep.subr.bf16.mxu0 0
        %2898 = vmatpush1.bf16.msra.mxu0 0
        %2899 = vmatprep.subr.bf16.mxu0 0
        %2900 = vmatpush1.bf16.msra.mxu0 0
        %2901 = vmatprep.subr.bf16.mxu0 0
        %2902 = vmatpush1.bf16.msra.mxu0 0
        %2903 = vmatprep.subr.bf16.mxu0 0
        %2904 = vmatpush1.bf16.msra.mxu0 0
        %2905 = vmatprep.subr.bf16.mxu0 0
        %2906 = vmatpush1.bf16.msra.mxu0 0
        %2907 = vmatprep.mubr.bf16.mxu0 0
        %2908 = vmatmul.mubr.bf16.gmra.mrb[0].mxu0 %v823
        %v2909 = vpop.f32.mrb[0].mxu0
        %v2910 = vadd.f32 %v2685, %v2909
        %v2911 = vpop.f32.mrb[0].mxu0
        %v2912 = vpop.f32.mrb[0].mxu0
        %v2913 = vadd.f32 %v2688, %v2912
        %v2914 = vpop.f32.mrb[0].mxu0
        %2915 = vmatprep.mubr.bf16.mxu0 0
        %2916 = vmatmul.mubr.bf16.gmra.mrb[0].mxu0 %v825
        %v2917 = vpop.f32.mrb[0].mxu0
        %v2918 = vadd.f32 %v2693, %v2917
        %v2919 = vpop.f32.mrb[0].mxu0
        %v2920 = vpop.f32.mrb[0].mxu0
        %v2921 = vadd.f32 %v2696, %v2920
        %v2922 = vpop.f32.mrb[0].mxu0
        %2923 = vmatprep.mubr.bf16.mxu0 0
        %2924 = vmatmul.mubr.bf16.gmra.mrb[0].mxu0 %v827
        %v2925 = vpop.f32.mrb[0].mxu0
        %v2926 = vadd.f32 %v2701, %v2925
        %v2927 = vpop.f32.mrb[0].mxu0
        %v2928 = vpop.f32.mrb[0].mxu0
        %v2929 = vadd.f32 %v2704, %v2928
        %v2930 = vpop.f32.mrb[0].mxu0
        %2931 = vmatprep.mubr.bf16.mxu0 0
        %2932 = vmatmul.mubr.bf16.gmra.mrb[0].mxu0 %v829
        %v2933 = vpop.f32.mrb[0].mxu0
        %v2934 = vadd.f32 %v2709, %v2933
        %v2935 = vpop.f32.mrb[0].mxu0
        %v2936 = vpop.f32.mrb[0].mxu0
        %v2937 = vadd.f32 %v2712, %v2936
        %v2938 = vpop.f32.mrb[0].mxu0
        %2939 = vmatprep.mubr.bf16.mxu0 0
        %2940 = vmatmul.mubr.bf16.gmra.mrb[0].mxu0 %v831
        %v2941 = vpop.f32.mrb[0].mxu0
        %v2942 = vadd.f32 %v2717, %v2941
        %v2943 = vpop.f32.mrb[0].mxu0
        %v2944 = vpop.f32.mrb[0].mxu0
        %v2945 = vadd.f32 %v2720, %v2944
        %v2946 = vpop.f32.mrb[0].mxu0
        %2947 = vmatprep.mubr.bf16.mxu0 0
        %2948 = vmatmul.mubr.bf16.gmra.mrb[0].mxu0 %v833
        %v2949 = vpop.f32.mrb[0].mxu0
        %v2950 = vadd.f32 %v2725, %v2949
        %v2951 = vpop.f32.mrb[0].mxu0
        %v2952 = vpop.f32.mrb[0].mxu0
        %v2953 = vadd.f32 %v2728, %v2952
        %v2954 = vpop.f32.mrb[0].mxu0
        %2955 = vmatprep.mubr.bf16.mxu0 0
        %2956 = vmatmul.mubr.bf16.gmra.mrb[0].mxu0 %v835
        %v2957 = vpop.f32.mrb[0].mxu0
        %v2958 = vadd.f32 %v2733, %v2957
        %v2959 = vpop.f32.mrb[0].mxu0
        %v2960 = vpop.f32.mrb[0].mxu0
        %v2961 = vadd.f32 %v2736, %v2960
        %v2962 = vpop.f32.mrb[0].mxu0
        %2963 = vmatprep.mubr.bf16.mxu0 0
        %2964 = vmatmul.mubr.bf16.gmra.mrb[0].mxu0 %v837
        %v2965 = vpop.f32.mrb[0].mxu0
        %v2966 = vadd.f32 %v2741, %v2965
        %v2967 = vpop.f32.mrb[0].mxu0
        %v2968 = vpop.f32.mrb[0].mxu0
        %v2969 = vadd.f32 %v2744, %v2968
        %v2970 = vpop.f32.mrb[0].mxu0
        %2971 = vmatprep.mubr.bf16.mxu0 0
        %2972 = vmatmul.mubr.bf16.gmra.mrb[0].mxu0 %v839
        %v2973 = vpop.f32.mrb[0].mxu0
        %v2974 = vadd.f32 %v2749, %v2973
        %v2975 = vpop.f32.mrb[0].mxu0
        %v2976 = vpop.f32.mrb[0].mxu0
        %v2977 = vadd.f32 %v2752, %v2976
        %v2978 = vpop.f32.mrb[0].mxu0
        %2979 = vmatprep.mubr.bf16.mxu0 0
        %2980 = vmatmul.mubr.bf16.gmra.mrb[0].mxu0 %v841
        %v2981 = vpop.f32.mrb[0].mxu0
        %v2982 = vadd.f32 %v2757, %v2981
        %v2983 = vpop.f32.mrb[0].mxu0
        %v2984 = vpop.f32.mrb[0].mxu0
        %v2985 = vadd.f32 %v2760, %v2984
        %v2986 = vpop.f32.mrb[0].mxu0
        %2987 = vmatprep.mubr.bf16.mxu0 0
        %2988 = vmatmul.mubr.bf16.gmra.mrb[0].mxu0 %v843
        %v2989 = vpop.f32.mrb[0].mxu0
        %v2990 = vadd.f32 %v2765, %v2989
        %v2991 = vpop.f32.mrb[0].mxu0
        %v2992 = vpop.f32.mrb[0].mxu0
        %v2993 = vadd.f32 %v2768, %v2992
        %v2994 = vpop.f32.mrb[0].mxu0
        %2995 = vmatprep.mubr.bf16.mxu0 0
        %2996 = vmatmul.mubr.bf16.gmra.mrb[0].mxu0 %v845
        %v2997 = vpop.f32.mrb[0].mxu0
        %v2998 = vadd.f32 %v2773, %v2997
        %v2999 = vpop.f32.mrb[0].mxu0
        %v3000 = vpop.f32.mrb[0].mxu0
        %v3001 = vadd.f32 %v2776, %v3000
        %v3002 = vpop.f32.mrb[0].mxu0
        %3003 = vmatprep.mubr.bf16.mxu0 0
        %3004 = vmatmul.mubr.bf16.gmra.mrb[0].mxu0 %v847
        %v3005 = vpop.f32.mrb[0].mxu0
        %v3006 = vadd.f32 %v2781, %v3005
        %v3007 = vpop.f32.mrb[0].mxu0
        %v3008 = vpop.f32.mrb[0].mxu0
        %v3009 = vadd.f32 %v2784, %v3008
        %v3010 = vpop.f32.mrb[0].mxu0
        %3011 = vmatprep.mubr.bf16.mxu0 0
        %3012 = vmatmul.mubr.bf16.gmra.mrb[0].mxu0 %v849
        %v3013 = vpop.f32.mrb[0].mxu0
        %v3014 = vadd.f32 %v2789, %v3013
        %v3015 = vpop.f32.mrb[0].mxu0
        %v3016 = vpop.f32.mrb[0].mxu0
        %v3017 = vadd.f32 %v2792, %v3016
        %v3018 = vpop.f32.mrb[0].mxu0
        %3019 = vmatprep.mubr.bf16.mxu0 0
        %3020 = vmatmul.mubr.bf16.gmra.mrb[0].mxu0 %v851
        %v3021 = vpop.f32.mrb[0].mxu0
        %v3022 = vadd.f32 %v2797, %v3021
        %v3023 = vpop.f32.mrb[0].mxu0
        %v3024 = vpop.f32.mrb[0].mxu0
        %v3025 = vadd.f32 %v2800, %v3024
        %v3026 = vpop.f32.mrb[0].mxu0
        %3027 = vmatprep.mubr.bf16.mxu0 0
        %3028 = vmatmul.mubr.bf16.gmra.mrb[0].mxu0 %v853
        %v3029 = vpop.f32.mrb[0].mxu0
        %v3030 = vadd.f32 %v2805, %v3029
        %v3031 = vpop.f32.mrb[0].mxu0
        %v3032 = vpop.f32.mrb[0].mxu0
        %v3033 = vadd.f32 %v2808, %v3032
        %v3034 = vpop.f32.mrb[0].mxu0
        %3035 = vmatprep.mubr.bf16.mxu0 0
        %3036 = vmatmul.mubr.bf16.gmra.mrb[0].mxu0 %v855
        %v3037 = vpop.f32.mrb[0].mxu0
        %v3038 = vadd.f32 %v2813, %v3037
        %v3039 = vpop.f32.mrb[0].mxu0
        %v3040 = vpop.f32.mrb[0].mxu0
        %v3041 = vadd.f32 %v2816, %v3040
        %v3042 = vpop.f32.mrb[0].mxu0
        %3043 = vmatprep.mubr.bf16.mxu0 0
        %3044 = vmatmul.mubr.bf16.gmra.mrb[0].mxu0 %v857
        %v3045 = vpop.f32.mrb[0].mxu0
        %v3046 = vadd.f32 %v2821, %v3045
        %v3047 = vpop.f32.mrb[0].mxu0
        %v3048 = vpop.f32.mrb[0].mxu0
        %v3049 = vadd.f32 %v2824, %v3048
        %v3050 = vpop.f32.mrb[0].mxu0
        %3051 = vmatprep.mubr.bf16.mxu0 0
        %3052 = vmatmul.mubr.bf16.gmra.mrb[0].mxu0 %v859
        %v3053 = vpop.f32.mrb[0].mxu0
        %v3054 = vadd.f32 %v2829, %v3053
        %v3055 = vpop.f32.mrb[0].mxu0
        %v3056 = vpop.f32.mrb[0].mxu0
        %v3057 = vadd.f32 %v2832, %v3056
        %v3058 = vpop.f32.mrb[0].mxu0
        %3059 = vmatprep.mubr.bf16.mxu0 0
        %3060 = vmatmul.mubr.bf16.gmra.mrb[0].mxu0 %v861
        %v3061 = vpop.f32.mrb[0].mxu0
        %v3062 = vadd.f32 %v2837, %v3061
        %v3063 = vpop.f32.mrb[0].mxu0
        %v3064 = vpop.f32.mrb[0].mxu0
        %v3065 = vadd.f32 %v2840, %v3064
        %v3066 = vpop.f32.mrb[0].mxu0
        %3067 = vmatprep.mubr.bf16.mxu0 0
        %3068 = vmatmul.mubr.bf16.gmra.mrb[0].mxu0 %v863
        %v3069 = vpop.f32.mrb[0].mxu0
        %v3070 = vadd.f32 %v2845, %v3069
        %v3071 = vpop.f32.mrb[0].mxu0
        %v3072 = vpop.f32.mrb[0].mxu0
        %v3073 = vadd.f32 %v2848, %v3072
        %v3074 = vpop.f32.mrb[0].mxu0
        %3075 = vmatprep.mubr.bf16.mxu0 0
        %3076 = vmatmul.mubr.bf16.gmra.mrb[0].mxu0 %v865
        %v3077 = vpop.f32.mrb[0].mxu0
        %v3078 = vadd.f32 %v2853, %v3077
        %v3079 = vpop.f32.mrb[0].mxu0
        %v3080 = vpop.f32.mrb[0].mxu0
        %v3081 = vadd.f32 %v2856, %v3080
        %v3082 = vpop.f32.mrb[0].mxu0
        %3083 = vmatprep.mubr.bf16.mxu0 0
        %3084 = vmatmul.mubr.bf16.gmra.mrb[0].mxu0 %v867
        %v3085 = vpop.f32.mrb[0].mxu0
        %v3086 = vadd.f32 %v2861, %v3085
        %v3087 = vpop.f32.mrb[0].mxu0
        %v3088 = vpop.f32.mrb[0].mxu0
        %v3089 = vadd.f32 %v2864, %v3088
        %v3090 = vpop.f32.mrb[0].mxu0
        %3091 = vmatprep.mubr.bf16.mxu0 0
        %3092 = vmatmul.mubr.bf16.gmra.mrb[0].mxu0 %v869
        %v3093 = vpop.f32.mrb[0].mxu0
        %v3094 = vadd.f32 %v2869, %v3093
        %v3095 = vpop.f32.mrb[0].mxu0
        %v3096 = vpop.f32.mrb[0].mxu0
        %v3097 = vadd.f32 %v2872, %v3096
        %v3098 = vpop.f32.mrb[0].mxu0
        %3099 = vdwg.mxu0
        %v3100 = vadd.f32 %v2409, %v2910
        %v3101 = vadd.f32 %v2410, %v2913
        %v3102 = vadd.f32 %v2411, %v2918
        %v3103 = vadd.f32 %v2412, %v2921
        %v3104 = vadd.f32 %v2413, %v2926
        %v3105 = vadd.f32 %v2414, %v2929
        %v3106 = vadd.f32 %v2415, %v2934
        %v3107 = vadd.f32 %v2416, %v2937
        %v3108 = vadd.f32 %v2417, %v2942
        %v3109 = vadd.f32 %v2418, %v2945
        %v3110 = vadd.f32 %v2419, %v2950
        %v3111 = vadd.f32 %v2420, %v2953
        %v3112 = vadd.f32 %v2421, %v2958
        %v3113 = vadd.f32 %v2422, %v2961
        %v3114 = vadd.f32 %v2423, %v2966
        %v3115 = vadd.f32 %v2424, %v2969
        %v3116 = vadd.f32 %v2425, %v2974
        %v3117 = vadd.f32 %v2426, %v2977
        %v3118 = vadd.f32 %v2427, %v2982
        %v3119 = vadd.f32 %v2428, %v2985
        %v3120 = vadd.f32 %v2429, %v2990
        %v3121 = vadd.f32 %v2430, %v2993
        %v3122 = vadd.f32 %v2431, %v2998
        %v3123 = vadd.f32 %v2432, %v3001
        %v3124 = vadd.f32 %v2433, %v3006
        %v3125 = vadd.f32 %v2434, %v3009
        %v3126 = vadd.f32 %v2435, %v3014
        %v3127 = vadd.f32 %v2436, %v3017
        %v3128 = vadd.f32 %v2437, %v3022
        %v3129 = vadd.f32 %v2438, %v3025
        %v3130 = vadd.f32 %v2439, %v3030
        %v3131 = vadd.f32 %v2440, %v3033
        %v3132 = vadd.f32 %v2441, %v3038
        %v3133 = vadd.f32 %v2442, %v3041
        %v3134 = vadd.f32 %v2443, %v3046
        %v3135 = vadd.f32 %v2444, %v3049
        %v3136 = vadd.f32 %v2445, %v3054
        %v3137 = vadd.f32 %v2446, %v3057
        %v3138 = vadd.f32 %v2447, %v3062
        %v3139 = vadd.f32 %v2448, %v3065
        %v3140 = vadd.f32 %v2449, %v3070
        %v3141 = vadd.f32 %v2450, %v3073
        %v3142 = vadd.f32 %v2451, %v3078
        %v3143 = vadd.f32 %v2452, %v3081
        %v3144 = vadd.f32 %v2453, %v3086
        %v3145 = vadd.f32 %v2454, %v3089
        %v3146 = vadd.f32 %v2455, %v3094
        %v3147 = vadd.f32 %v2456, %v3097
        %v3148 = vmul.f32 %v3100, 0.5
        %v3149 = vmul.f32 %v3101, 0.5
        %v3150 = vmul.f32 %v3102, 0.5
        %v3151 = vmul.f32 %v3103, 0.5
        %v3152 = vmul.f32 %v3104, 0.5
        %v3153 = vmul.f32 %v3105, 0.5
        %v3154 = vmul.f32 %v3106, 0.5
        %v3155 = vmul.f32 %v3107, 0.5
        %v3156 = vmul.f32 %v3108, 0.5
        %v3157 = vmul.f32 %v3109, 0.5
        %v3158 = vmul.f32 %v3110, 0.5
        %v3159 = vmul.f32 %v3111, 0.5
        %v3160 = vmul.f32 %v3112, 0.5
        %v3161 = vmul.f32 %v3113, 0.5
        %v3162 = vmul.f32 %v3114, 0.5
        %v3163 = vmul.f32 %v3115, 0.5
        %v3164 = vmul.f32 %v3116, 0.5
        %v3165 = vmul.f32 %v3117, 0.5
        %v3166 = vmul.f32 %v3118, 0.5
        %v3167 = vmul.f32 %v3119, 0.5
        %v3168 = vmul.f32 %v3120, 0.5
        %v3169 = vmul.f32 %v3121, 0.5
        %v3170 = vmul.f32 %v3122, 0.5
        %v3171 = vmul.f32 %v3123, 0.5
        %v3172 = vmul.f32 %v3124, 0.5
        %v3173 = vmul.f32 %v3125, 0.5
        %v3174 = vmul.f32 %v3126, 0.5
        %v3175 = vmul.f32 %v3127, 0.5
        %v3176 = vmul.f32 %v3128, 0.5
        %v3177 = vmul.f32 %v3129, 0.5
        %v3178 = vmul.f32 %v3130, 0.5
        %v3179 = vmul.f32 %v3131, 0.5
        %v3180 = vmul.f32 %v3132, 0.5
        %v3181 = vmul.f32 %v3133, 0.5
        %v3182 = vmul.f32 %v3134, 0.5
        %v3183 = vmul.f32 %v3135, 0.5
        %v3184 = vmul.f32 %v3136, 0.5
        %v3185 = vmul.f32 %v3137, 0.5
        %v3186 = vmul.f32 %v3138, 0.5
        %v3187 = vmul.f32 %v3139, 0.5
        %v3188 = vmul.f32 %v3140, 0.5
        %v3189 = vmul.f32 %v3141, 0.5
        %v3190 = vmul.f32 %v3142, 0.5
        %v3191 = vmul.f32 %v3143, 0.5
        %v3192 = vmul.f32 %v3144, 0.5
        %v3193 = vmul.f32 %v3145, 0.5
        %v3194 = vmul.f32 %v3146, 0.5
        %v3195 = vmul.f32 %v3147, 0.5
        %v3196 = vtanh.pop %v3148
        %v3197 = vtanh.pop %v3149
        %v3198 = vtanh.pop %v3150
        %v3199 = vtanh.pop %v3151
        %v3200 = vtanh.pop %v3152
        %v3201 = vtanh.pop %v3153
        %v3202 = vtanh.pop %v3154
        %v3203 = vtanh.pop %v3155
        %v3204 = vtanh.pop %v3156
        %v3205 = vtanh.pop %v3157
        %v3206 = vtanh.pop %v3158
        %v3207 = vtanh.pop %v3159
        %v3208 = vtanh.pop %v3160
        %v3209 = vtanh.pop %v3161
        %v3210 = vtanh.pop %v3162
        %v3211 = vtanh.pop %v3163
        %v3212 = vtanh.pop %v3164
        %v3213 = vtanh.pop %v3165
        %v3214 = vtanh.pop %v3166
        %v3215 = vtanh.pop %v3167
        %v3216 = vtanh.pop %v3168
        %v3217 = vtanh.pop %v3169
        %v3218 = vtanh.pop %v3170
        %v3219 = vtanh.pop %v3171
        %v3220 = vtanh.pop %v3172
        %v3221 = vtanh.pop %v3173
        %v3222 = vtanh.pop %v3174
        %v3223 = vtanh.pop %v3175
        %v3224 = vtanh.pop %v3176
        %v3225 = vtanh.pop %v3177
        %v3226 = vtanh.pop %v3178
        %v3227 = vtanh.pop %v3179
        %v3228 = vtanh.pop %v3180
        %v3229 = vtanh.pop %v3181
        %v3230 = vtanh.pop %v3182
        %v3231 = vtanh.pop %v3183
        %v3232 = vtanh.pop %v3184
        %v3233 = vtanh.pop %v3185
        %v3234 = vtanh.pop %v3186
        %v3235 = vtanh.pop %v3187
        %v3236 = vtanh.pop %v3188
        %v3237 = vtanh.pop %v3189
        %v3238 = vtanh.pop %v3190
        %v3239 = vtanh.pop %v3191
        %v3240 = vtanh.pop %v3192
        %v3241 = vtanh.pop %v3193
        %v3242 = vtanh.pop %v3194
        %v3243 = vtanh.pop %v3195
        %v3244 = vmul.f32 %v3196, 0.5
        %v3245 = vmul.f32 %v3197, 0.5
        %v3246 = vmul.f32 %v3198, 0.5
        %v3247 = vmul.f32 %v3199, 0.5
        %v3248 = vmul.f32 %v3200, 0.5
        %v3249 = vmul.f32 %v3201, 0.5
        %v3250 = vmul.f32 %v3202, 0.5
        %v3251 = vmul.f32 %v3203, 0.5
        %v3252 = vmul.f32 %v3204, 0.5
        %v3253 = vmul.f32 %v3205, 0.5
        %v3254 = vmul.f32 %v3206, 0.5
        %v3255 = vmul.f32 %v3207, 0.5
        %v3256 = vmul.f32 %v3208, 0.5
        %v3257 = vmul.f32 %v3209, 0.5
        %v3258 = vmul.f32 %v3210, 0.5
        %v3259 = vmul.f32 %v3211, 0.5
        %v3260 = vmul.f32 %v3212, 0.5
        %v3261 = vmul.f32 %v3213, 0.5
        %v3262 = vmul.f32 %v3214, 0.5
        %v3263 = vmul.f32 %v3215, 0.5
        %v3264 = vmul.f32 %v3216, 0.5
        %v3265 = vmul.f32 %v3217, 0.5
        %v3266 = vmul.f32 %v3218, 0.5
        %v3267 = vmul.f32 %v3219, 0.5
        %v3268 = vmul.f32 %v3220, 0.5
        %v3269 = vmul.f32 %v3221, 0.5
        %v3270 = vmul.f32 %v3222, 0.5
        %v3271 = vmul.f32 %v3223, 0.5
        %v3272 = vmul.f32 %v3224, 0.5
        %v3273 = vmul.f32 %v3225, 0.5
        %v3274 = vmul.f32 %v3226, 0.5
        %v3275 = vmul.f32 %v3227, 0.5
        %v3276 = vmul.f32 %v3228, 0.5
        %v3277 = vmul.f32 %v3229, 0.5
        %v3278 = vmul.f32 %v3230, 0.5
        %v3279 = vmul.f32 %v3231, 0.5
        %v3280 = vmul.f32 %v3232, 0.5
        %v3281 = vmul.f32 %v3233, 0.5
        %v3282 = vmul.f32 %v3234, 0.5
        %v3283 = vmul.f32 %v3235, 0.5
        %v3284 = vmul.f32 %v3236, 0.5
        %v3285 = vmul.f32 %v3237, 0.5
        %v3286 = vmul.f32 %v3238, 0.5
        %v3287 = vmul.f32 %v3239, 0.5
        %v3288 = vmul.f32 %v3240, 0.5
        %v3289 = vmul.f32 %v3241, 0.5
        %v3290 = vmul.f32 %v3242, 0.5
        %v3291 = vmul.f32 %v3243, 0.5
        %v3292 = vadd.f32 %v3244, 0.5
        %v3293 = vadd.f32 %v3245, 0.5
        %v3294 = vadd.f32 %v3246, 0.5
        %v3295 = vadd.f32 %v3247, 0.5
        %v3296 = vadd.f32 %v3248, 0.5
        %v3297 = vadd.f32 %v3249, 0.5
        %v3298 = vadd.f32 %v3250, 0.5
        %v3299 = vadd.f32 %v3251, 0.5
        %v3300 = vadd.f32 %v3252, 0.5
        %v3301 = vadd.f32 %v3253, 0.5
        %v3302 = vadd.f32 %v3254, 0.5
        %v3303 = vadd.f32 %v3255, 0.5
        %v3304 = vadd.f32 %v3256, 0.5
        %v3305 = vadd.f32 %v3257, 0.5
        %v3306 = vadd.f32 %v3258, 0.5
        %v3307 = vadd.f32 %v3259, 0.5
        %v3308 = vadd.f32 %v3260, 0.5
        %v3309 = vadd.f32 %v3261, 0.5
        %v3310 = vadd.f32 %v3262, 0.5
        %v3311 = vadd.f32 %v3263, 0.5
        %v3312 = vadd.f32 %v3264, 0.5
        %v3313 = vadd.f32 %v3265, 0.5
        %v3314 = vadd.f32 %v3266, 0.5
        %v3315 = vadd.f32 %v3267, 0.5
        %v3316 = vadd.f32 %v3268, 0.5
        %v3317 = vadd.f32 %v3269, 0.5
        %v3318 = vadd.f32 %v3270, 0.5
        %v3319 = vadd.f32 %v3271, 0.5
        %v3320 = vadd.f32 %v3272, 0.5
        %v3321 = vadd.f32 %v3273, 0.5
        %v3322 = vadd.f32 %v3274, 0.5
        %v3323 = vadd.f32 %v3275, 0.5
        %v3324 = vadd.f32 %v3276, 0.5
        %v3325 = vadd.f32 %v3277, 0.5
        %v3326 = vadd.f32 %v3278, 0.5
        %v3327 = vadd.f32 %v3279, 0.5
        %v3328 = vadd.f32 %v3280, 0.5
        %v3329 = vadd.f32 %v3281, 0.5
        %v3330 = vadd.f32 %v3282, 0.5
        %v3331 = vadd.f32 %v3283, 0.5
        %v3332 = vadd.f32 %v3284, 0.5
        %v3333 = vadd.f32 %v3285, 0.5
        %v3334 = vadd.f32 %v3286, 0.5
        %v3335 = vadd.f32 %v3287, 0.5
        %v3336 = vadd.f32 %v3288, 0.5
        %v3337 = vadd.f32 %v3289, 0.5
        %v3338 = vadd.f32 %v3290, 0.5
        %v3339 = vadd.f32 %v3291, 0.5
        %v3340 = vmul.f32 %v3100, %v3292
        %v3341 = vmul.f32 %v3101, %v3293
        %v3342 = vmul.f32 %v3102, %v3294
        %v3343 = vmul.f32 %v3103, %v3295
        %v3344 = vmul.f32 %v3104, %v3296
        %v3345 = vmul.f32 %v3105, %v3297
        %v3346 = vmul.f32 %v3106, %v3298
        %v3347 = vmul.f32 %v3107, %v3299
        %v3348 = vmul.f32 %v3108, %v3300
        %v3349 = vmul.f32 %v3109, %v3301
        %v3350 = vmul.f32 %v3110, %v3302
        %v3351 = vmul.f32 %v3111, %v3303
        %v3352 = vmul.f32 %v3112, %v3304
        %v3353 = vmul.f32 %v3113, %v3305
        %v3354 = vmul.f32 %v3114, %v3306
        %v3355 = vmul.f32 %v3115, %v3307
        %v3356 = vmul.f32 %v3116, %v3308
        %v3357 = vmul.f32 %v3117, %v3309
        %v3358 = vmul.f32 %v3118, %v3310
        %v3359 = vmul.f32 %v3119, %v3311
        %v3360 = vmul.f32 %v3120, %v3312
        %v3361 = vmul.f32 %v3121, %v3313
        %v3362 = vmul.f32 %v3122, %v3314
        %v3363 = vmul.f32 %v3123, %v3315
        %v3364 = vmul.f32 %v3124, %v3316
        %v3365 = vmul.f32 %v3125, %v3317
        %v3366 = vmul.f32 %v3126, %v3318
        %v3367 = vmul.f32 %v3127, %v3319
        %v3368 = vmul.f32 %v3128, %v3320
        %v3369 = vmul.f32 %v3129, %v3321
        %v3370 = vmul.f32 %v3130, %v3322
        %v3371 = vmul.f32 %v3131, %v3323
        %v3372 = vmul.f32 %v3132, %v3324
        %v3373 = vmul.f32 %v3133, %v3325
        %v3374 = vmul.f32 %v3134, %v3326
        %v3375 = vmul.f32 %v3135, %v3327
        %v3376 = vmul.f32 %v3136, %v3328
        %v3377 = vmul.f32 %v3137, %v3329
        %v3378 = vmul.f32 %v3138, %v3330
        %v3379 = vmul.f32 %v3139, %v3331
        %v3380 = vmul.f32 %v3140, %v3332
        %v3381 = vmul.f32 %v3141, %v3333
        %v3382 = vmul.f32 %v3142, %v3334
        %v3383 = vmul.f32 %v3143, %v3335
        %v3384 = vmul.f32 %v3144, %v3336
        %v3385 = vmul.f32 %v3145, %v3337
        %v3386 = vmul.f32 %v3146, %v3338
        %v3387 = vmul.f32 %v3147, %v3339
        %3388 = vst [vmem:[%s334] sm:$0xff] %v3340
        %3389 = vst [vmem:[%s334 + $0x8] sm:$0xff] %v3341
        %3390 = vst [vmem:[%s334 + $0x10] sm:$0xff] %v3342
        %3391 = vst [vmem:[%s334 + $0x18] sm:$0xff] %v3343
        %3392 = vst [vmem:[%s334 + $0x20] sm:$0xff] %v3344
        %3393 = vst [vmem:[%s334 + $0x28] sm:$0xff] %v3345
        %3394 = vst [vmem:[%s334 + $0x30] sm:$0xff] %v3346
        %3395 = vst [vmem:[%s334 + $0x38] sm:$0xff] %v3347
        %3396 = vst [vmem:[%s334 + $0x40] sm:$0xff] %v3348
        %3397 = vst [vmem:[%s334 + $0x48] sm:$0xff] %v3349
        %3398 = vst [vmem:[%s334 + $0x50] sm:$0xff] %v3350
        %3399 = vst [vmem:[%s334 + $0x58] sm:$0xff] %v3351
        %3400 = vst [vmem:[%s334 + $0x60] sm:$0xff] %v3352
        %3401 = vst [vmem:[%s334 + $0x68] sm:$0xff] %v3353
        %3402 = vst [vmem:[%s334 + $0x70] sm:$0xff] %v3354
        %3403 = vst [vmem:[%s334 + $0x78] sm:$0xff] %v3355
        %3404 = vst [vmem:[%s334 + $0x80] sm:$0xff] %v3356
        %3405 = vst [vmem:[%s334 + $0x88] sm:$0xff] %v3357
        %3406 = vst [vmem:[%s334 + $0x90] sm:$0xff] %v3358
        %3407 = vst [vmem:[%s334 + $0x98] sm:$0xff] %v3359
        %3408 = vst [vmem:[%s334 + $0xa0] sm:$0xff] %v3360
        %3409 = vst [vmem:[%s334 + $0xa8] sm:$0xff] %v3361
        %3410 = vst [vmem:[%s334 + $0xb0] sm:$0xff] %v3362
        %3411 = vst [vmem:[%s334 + $0xb8] sm:$0xff] %v3363
        %3412 = vst [vmem:[%s334 + $0xc0] sm:$0xff] %v3364
        %3413 = vst [vmem:[%s334 + $0xc8] sm:$0xff] %v3365
        %3414 = vst [vmem:[%s334 + $0xd0] sm:$0xff] %v3366
        %3415 = vst [vmem:[%s334 + $0xd8] sm:$0xff] %v3367
        %3416 = vst [vmem:[%s334 + $0xe0] sm:$0xff] %v3368
        %3417 = vst [vmem:[%s334 + $0xe8] sm:$0xff] %v3369
        %3418 = vst [vmem:[%s334 + $0xf0] sm:$0xff] %v3370
        %3419 = vst [vmem:[%s334 + $0xf8] sm:$0xff] %v3371
        %3420 = vst [vmem:[%s334 + $0x100] sm:$0xff] %v3372
        %3421 = vst [vmem:[%s334 + $0x108] sm:$0xff] %v3373
        %3422 = vst [vmem:[%s334 + $0x110] sm:$0xff] %v3374
        %3423 = vst [vmem:[%s334 + $0x118] sm:$0xff] %v3375
        %3424 = vst [vmem:[%s334 + $0x120] sm:$0xff] %v3376
        %3425 = vst [vmem:[%s334 + $0x128] sm:$0xff] %v3377
        %3426 = vst [vmem:[%s334 + $0x130] sm:$0xff] %v3378
        %3427 = vst [vmem:[%s334 + $0x138] sm:$0xff] %v3379
        %3428 = vst [vmem:[%s334 + $0x140] sm:$0xff] %v3380
        %3429 = vst [vmem:[%s334 + $0x148] sm:$0xff] %v3381
        %3430 = vst [vmem:[%s334 + $0x150] sm:$0xff] %v3382
        %3431 = vst [vmem:[%s334 + $0x158] sm:$0xff] %v3383
        %3432 = vst [vmem:[%s334 + $0x160] sm:$0xff] %v3384
        %3433 = vst [vmem:[%s334 + $0x168] sm:$0xff] %v3385
        %3434 = vst [vmem:[%s334 + $0x170] sm:$0xff] %v3386
        %3435 = vst [vmem:[%s334 + $0x178] sm:$0xff] %v3387
        %s3436 = sand.u32 %s167, 1
        %s3437 = scalar_lea.sflag [#allocation4], %s3436
        %s3438 = sand.u32 %s167, 1
        %s3439 = smul.addr %s3438, 384
        %s3440 = scalar_lea.vmem [#allocation8], %s3439
        // Predicated region
        $region49: #{tpu_custom_call.1} parent=35 // pred_check
          %p3441 = pneg %p177
        $region50: #{tpu_custom_call.1} parent=35 // pred_check_branch
          %3443 = sbr.rel (%p3441) target = $region52
        $region51: #{tpu_custom_call.1} parent=35 // pred_region
          %s3444 = smul.u32 16, %s30
          %s3446 = ssub.s32 6144, 6144
          %3447 = vsyncadd %s3437, %s3446
          %s3448 = smul.addr %s3444, 3
          %s3449 = sadd.s32 %s31, %s3448
          %s3450 = smul.addr %s29, 48
          %s3451 = sadd.s32 %s3449, %s3450
          %s3452 = smul.addr %s3451, 128
          %s3453 = scalar_lea.hbm %s4, %s3452
          %s3454 = sshll.u32 %s3440, 4
          %s3455 = int_to_ptr.vmem [resolvable:$true] %s3454
          %3460 = dma.vmem_to_hbm [thread:$0]  %s3455, 6144, %s3453, %s3437, 128, 128, 8
        $region52: #{tpu_custom_call.1} parent=35 // pred_fallthru
          _
      $region36: #{tpu_custom_call.1} parent=5 // pred_fallthru
        _
      %p3461 = scmp.le.s32.totalorder 2, %s19
      // Predicated region
      $region53: #{tpu_custom_call.1} parent=5 // pred_check
        %p3462 = pneg %p3461
      $region54: #{tpu_custom_call.1} parent=5 // pred_check_branch
        %3464 = sbr.rel (%p3462) target = $region56
      $region55: #{tpu_custom_call.1} parent=5 // pred_region
        %s3465 = ssub.s32 %s19, 2
        // Predicated region
        $region57: #{tpu_custom_call.1} parent=55 // pred_check
          %p3466 = pneg %p183
        $region58: #{tpu_custom_call.1} parent=55 // pred_check_branch
          %3468 = sbr.rel (%p3466) target = $region60
        $region59: #{tpu_custom_call.1} parent=55 // pred_region
          %s3469 = sand.u32 %s168, 1
          %s3470 = scalar_lea.sflag [#allocation4], %s3469
          %s3471 = sand.u32 %s168, 1
          %s3472 = smul.addr %s3471, 384
          %s3473 = scalar_lea.vmem [#allocation8], %s3472
          %3474 = dma.done %s3470, 6144
        $region60: #{tpu_custom_call.1} parent=55 // pred_fallthru
          _
      $region56: #{tpu_custom_call.1} parent=5 // pred_fallthru
        _
    $region6: #{tpu_custom_call.1} parent=1 // loop_footer
      %s23 = sadd.s32 1, %s19
    $region7: #{tpu_custom_call.1} parent=1 // loop_footer_branch
      %18 = sbr.rel target = $region3
    $region8: #{tpu_custom_call.1} parent=1 // loop_exit
      _
    %3475 = vsyncpa [#allocation3], 1
    %s3476 = scalar_lea.sflag [#allocation3], 1
    %3477 = vsyncpa %s3476, 1
    %3478 = vsyncpa [#allocation6], 1
    %s3479 = scalar_lea.sflag [#allocation6], 1
    %3480 = vsyncpa %s3479, 1
    %3481 = vsyncpa [#allocation4], 1
    %s3482 = scalar_lea.sflag [#allocation4], 1
    %3483 = vsyncpa %s3482, 1

</llo_original>
